<compile_context>
chip_gen: v6e
topology: v6e:2x2x1
jax: 0.10.0
libtpu: 0.0.40
codegen_flags: <defaults>
</compile_context>

<pallas_src>
import functools

import jax
import jax.numpy as jnp
import numpy as np
from jax.experimental import pallas as pl
from jax.experimental.pallas import tpu as pltpu


def _round_up(x, m):
    return ((x + m - 1) // m) * m


# ----------------------------------------------------------------------------
# Pallas kernels: one matmul per (TM, K) row tile, bias (+residual) fused.
# ----------------------------------------------------------------------------
def _mm_bias_kernel(x_ref, w_ref, b_ref, o_ref, *, apply_relu):
    x = x_ref[...]                      # (TM, K) bf16
    if apply_relu:                      # ReLU(input) fused into the conv
        x = jnp.maximum(x, 0.0)
    acc = jnp.dot(x, w_ref[...], preferred_element_type=jnp.float32)
    o_ref[...] = (acc + b_ref[...]).astype(o_ref.dtype)


def _mm_bias_res_kernel(x_ref, w_ref, b_ref, r_ref, o_ref, *, apply_relu):
    x = x_ref[...]
    if apply_relu:
        x = jnp.maximum(x, 0.0)
    acc = jnp.dot(x, w_ref[...], preferred_element_type=jnp.float32)
    o_ref[...] = (acc + b_ref[...] + r_ref[...]).astype(o_ref.dtype)


def _matmul_bias(x, w, b, residual=None, *, apply_relu=False, tm=512):
    """x: (M, K) bf16, w: (K, Cout) bf16, b: (Cout,) f32, residual: (M, Cout) f32."""
    M, K = x.shape
    Cout = w.shape[1]

    # Row-tile size: multiple of 8 (sublane), capped at `tm` for pipelining.
    if M > tm:
        TM = tm
        Mp = _round_up(M, TM)
    else:
        Mp = _round_up(M, 8)
        TM = Mp
    if Mp != M:
        x = jnp.pad(x, ((0, Mp - M), (0, 0)))
        if residual is not None:
            residual = jnp.pad(residual, ((0, Mp - M), (0, 0)))

    in_specs = [
        pl.BlockSpec((TM, K), lambda i: (i, 0)),        # activations: streamed
        pl.BlockSpec((K, Cout), lambda i: (0, 0)),      # weights: VMEM-resident
        pl.BlockSpec((1, Cout), lambda i: (0, 0)),      # bias: VMEM-resident
    ]
    args = [x, w, b.reshape(1, Cout).astype(jnp.float32)]
    if residual is not None:
        in_specs.append(pl.BlockSpec((TM, Cout), lambda i: (i, 0)))
        args.append(residual.astype(jnp.float32))
        kernel = functools.partial(_mm_bias_res_kernel, apply_relu=apply_relu)
    else:
        kernel = functools.partial(_mm_bias_kernel, apply_relu=apply_relu)

    out = pl.pallas_call(
        kernel,
        out_shape=jax.ShapeDtypeStruct((Mp, Cout), jnp.float32),
        grid_spec=pltpu.PrefetchScalarGridSpec(
            num_scalar_prefetch=0,
            grid=(Mp // TM,),
            in_specs=in_specs,
            out_specs=pl.BlockSpec((TM, Cout), lambda i: (i, 0)),
        ),
        compiler_params=pltpu.CompilerParams(
            dimension_semantics=("parallel",),          # shards across TCs on v7x
            vmem_limit_bytes=40 * 1024 * 1024,          # < v7x 64 MiB physical
        ),
    )(*args)
    return out[:M] if Mp != M else out


# ----------------------------------------------------------------------------
# Conv wrappers (glue: tap construction / reshapes / dtype casts only)
# ----------------------------------------------------------------------------
def conv1x1(x_nhwc, w, b, residual=None):
    """w: PyTorch layout (Cout, Cin, 1, 1)."""
    N, H, W, Cin = x_nhwc.shape
    Cout = w.shape[0]
    xk = x_nhwc.reshape(N * H * W, Cin).astype(jnp.bfloat16)
    wk = jnp.transpose(w.reshape(Cout, Cin), (1, 0)).astype(jnp.bfloat16)
    r = residual.reshape(N * H * W, Cout) if residual is not None else None
    y = _matmul_bias(xk, wk, b, r)
    return y.reshape(N, H, W, Cout)


def conv3x3(x_nhwc, w, b, stride=1, apply_relu=False):
    """w: PyTorch layout (Cout, Cin, 3, 3); padding=1 (as in the module)."""
    N, H, W, Cin = x_nhwc.shape
    Cout = w.shape[0]
    Hout = (H + 2 - 3) // stride + 1
    Wout = (W + 2 - 3) // stride + 1
    xp = jnp.pad(x_nhwc, ((0, 0), (1, 1), (1, 1), (0, 0))).astype(jnp.bfloat16)
    # Taps already subsampled for stride=2 (4x less work than conv+slice).
    taps = []
    for dy in range(3):
        for dx in range(3):
            taps.append(xp[:, dy:dy + stride * Hout:stride,
                           dx:dx + stride * Wout:stride, :])
    xk = jnp.concatenate(taps, axis=-1).reshape(N * Hout * Wout, 9 * Cin)
    wk = jnp.transpose(w, (2, 3, 1, 0)).reshape(9 * Cin, Cout).astype(jnp.bfloat16)
    y = _matmul_bias(xk, wk, b, apply_relu=apply_relu)
    return y.reshape(N, Hout, Wout, Cout)


def upsample2(x_nhwc):
    # Nearest-neighbor 2x (kept as glue; residual add itself is fused in-kernel).
    return jnp.repeat(jnp.repeat(x_nhwc, 2, axis=1), 2, axis=2)


# ----------------------------------------------------------------------------
# PyramidFeatures forward (Pallas path)
# ----------------------------------------------------------------------------
def pyramid_features_forward(C3, C4, C5, params):
    """Inputs NCHW (PyTorch convention); outputs NCHW list [P3, P4, P5, P6, P7]."""
    c3 = jnp.transpose(C3, (0, 2, 3, 1))
    c4 = jnp.transpose(C4, (0, 2, 3, 1))
    c5 = jnp.transpose(C5, (0, 2, 3, 1))

    p5 = conv1x1(c5, *params["P5_1"])
    P5_out = conv3x3(p5, *params["P5_2"])

    p4 = conv1x1(c4, *params["P4_1"], residual=upsample2(p5))   # add fused in-kernel
    P4_out = conv3x3(p4, *params["P4_2"])

    p3 = conv1x1(c3, *params["P3_1"], residual=upsample2(p4))   # add fused in-kernel
    P3_out = conv3x3(p3, *params["P3_2"])

    P6_out = conv3x3(c5, *params["P6"], stride=2)
    P7_out = conv3x3(P6_out, *params["P7_2"], stride=2, apply_relu=True)

    to_nchw = lambda t: jnp.transpose(t, (0, 3, 1, 2))
    return [to_nchw(P3_out), to_nchw(P4_out), to_nchw(P5_out),
            to_nchw(P6_out), to_nchw(P7_out)]


# ----------------------------------------------------------------------------
# Pure-JAX reference (for correctness check)
# ----------------------------------------------------------------------------
def _conv_ref(x, w, b, stride, padding):
    y = jax.lax.conv_general_dilated(
        x, w, (stride, stride), ((padding, padding), (padding, padding)),
        dimension_numbers=("NCHW", "OIHW", "NCHW"),
        precision=jax.lax.Precision.HIGHEST)
    return y + b.reshape(1, -1, 1, 1)


def pyramid_features_ref(C3, C4, C5, p):
    up = lambda x: jnp.repeat(jnp.repeat(x, 2, axis=2), 2, axis=3)
    P5_x = _conv_ref(C5, *p["P5_1"], 1, 0)
    P5_up = up(P5_x)
    P5_x = _conv_ref(P5_x, *p["P5_2"], 1, 1)
    P4_x = _conv_ref(C4, *p["P4_1"], 1, 0) + P5_up
    P4_up = up(P4_x)
    P4_x = _conv_ref(P4_x, *p["P4_2"], 1, 1)
    P3_x = _conv_ref(C3, *p["P3_1"], 1, 0) + P4_up
    P3_x = _conv_ref(P3_x, *p["P3_2"], 1, 1)
    P6_x = _conv_ref(C5, *p["P6"], 2, 1)
    P7_x = _conv_ref(jnp.maximum(P6_x, 0.0), *p["P7_2"], 2, 1)
    return [P3_x, P4_x, P5_x, P6_x, P7_x]


# ----------------------------------------------------------------------------
# Deterministic parameter init (synthetic, same shapes as the nn.Module)
# ----------------------------------------------------------------------------
def _init_conv(key, cout, cin, k):
    wkey, bkey = jax.random.split(key)
    w = jax.random.normal(wkey, (cout, cin, k, k), jnp.float32) / np.sqrt(cin * k * k)
    b = jax.random.normal(bkey, (cout,), jnp.float32) * 0.01
    return w, b


def make_params(C3_size, C4_size, C5_size, feature_size, key):
    keys = jax.random.split(key, 8)
    return {
        "P5_1": _init_conv(keys[0], feature_size, C5_size, 1),
        "P5_2": _init_conv(keys[1], feature_size, feature_size, 3),
        "P4_1": _init_conv(keys[2], feature_size, C4_size, 1),
        "P4_2": _init_conv(keys[3], feature_size, feature_size, 3),
        "P3_1": _init_conv(keys[4], feature_size, C3_size, 1),
        "P3_2": _init_conv(keys[5], feature_size, feature_size, 3),
        "P6":   _init_conv(keys[6], feature_size, C5_size, 3),
        "P7_2": _init_conv(keys[7], feature_size, feature_size, 3),
    }


if __name__ == "__main__":
    key = jax.random.PRNGKey(0)
    k_in, k_p = jax.random.split(key)
    k3, k4, k5 = jax.random.split(k_in, 3)

    # Small FPN: C3 @ 16x16 (4ch), C4 @ 8x8 (8ch), C5 @ 4x4 (16ch), feature_size=32
    C3 = jax.random.normal(k3, (2, 4, 16, 16), jnp.float32)
    C4 = jax.random.normal(k4, (2, 8, 8, 8), jnp.float32)
    C5 = jax.random.normal(k5, (2, 16, 4, 4), jnp.float32)
    params = make_params(4, 8, 16, 32, k_p)

    outs = jax.jit(pyramid_features_forward)(C3, C4, C5, params)
    outs = jax.block_until_ready(outs)

    refs = pyramid_features_ref(C3, C4, C5, params)
    # bf16 matmul operands (f32 accumulation) => slightly looser tolerance.
    for o, r in zip(outs, refs):
        assert o.shape == r.shape, (o.shape, r.shape)
        assert np.allclose(np.asarray(o), np.asarray(r), atol=5e-2, rtol=5e-2)

    print("KERNEL_OK")
</pallas_src>

<mosaic_0001>
module attributes {stable_mosaic.version = 11 : i64} {
  func.func @_mm_bias_kernel(%arg0: i32, %arg1: memref<32x16xbf16, #tpu.memory_space<vmem>>, %arg2: memref<16x32xbf16, #tpu.memory_space<vmem>>, %arg3: memref<1x32xf32, #tpu.memory_space<vmem>>, %arg4: memref<32x32xf32, #tpu.memory_space<vmem>>) attributes {dimension_semantics = [#tpu.dimension_semantics<parallel>], iteration_bounds = array<i64: 1>, scalar_prefetch = 0 : i64, scratch_operands = 0 : i64, tpu.core_type = #tpu.core_type<tc>, window_params = [{transform_indices = @transform_0, window_bounds = array<i64: 32, 16>}, {pipeline_mode = #tpu.pipeline_mode<synchronous>, transform_indices = @transform_1, window_bounds = array<i64: 16, 32>}, {pipeline_mode = #tpu.pipeline_mode<synchronous>, transform_indices = @transform_2, window_bounds = array<i64: 1, 32>}, {transform_indices = @transform_3, window_bounds = array<i64: 32, 32>}]} {
    %c0 = arith.constant 0 : index
    %c0_0 = arith.constant 0 : index
    %0 = vector.load %arg1[%c0, %c0_0] : memref<32x16xbf16, #tpu.memory_space<vmem>>, vector<32x16xbf16>
    %c0_1 = arith.constant 0 : index
    %c0_2 = arith.constant 0 : index
    %1 = vector.load %arg2[%c0_1, %c0_2] : memref<16x32xbf16, #tpu.memory_space<vmem>>, vector<16x32xbf16>
    %cst = arith.constant dense<0.000000e+00> : vector<32x32xf32>
    %2 = tpu.matmul %0, %1, %cst {dimension_numbers = #tpu.dot_dimension_numbers<[1], [0], [0], [1], [0, 0, 1, 1], [], []>} : vector<32x16xbf16>, vector<16x32xbf16>, vector<32x32xf32> -> vector<32x32xf32>
    %c0_3 = arith.constant 0 : index
    %c0_4 = arith.constant 0 : index
    %3 = vector.load %arg3[%c0_3, %c0_4] : memref<1x32xf32, #tpu.memory_space<vmem>>, vector<1x32xf32>
    %4 = vector.broadcast %3 : vector<1x32xf32> to vector<32x32xf32>
    %5 = arith.addf %2, %4 : vector<32x32xf32>
    %c0_5 = arith.constant 0 : index
    %c0_6 = arith.constant 0 : index
    %6 = vector.load %arg4[%c0_5, %c0_6] : memref<32x32xf32, #tpu.memory_space<vmem>>, vector<32x32xf32>
    tpu.vector_store %arg4[%c0_5, %c0_6], %5 {strides = array<i32>} : memref<32x32xf32, #tpu.memory_space<vmem>>, vector<32x32xf32>,
    return
  }
  func.func @transform_0(%arg0: i32) -> (i32, i32) {
    %c0_i32 = arith.constant 0 : i32
    %c0_i32_0 = arith.constant 0 : i32
    return %arg0, %c0_i32 : i32, i32
  }
  func.func @transform_1(%arg0: i32) -> (i32, i32) {
    %c0_i32 = arith.constant 0 : i32
    %c0_i32_0 = arith.constant 0 : i32
    %c0_i32_1 = arith.constant 0 : i32
    return %c0_i32, %c0_i32_0 : i32, i32
  }
  func.func @transform_2(%arg0: i32) -> (i32, i32) {
    %c0_i32 = arith.constant 0 : i32
    %c0_i32_0 = arith.constant 0 : i32
    %c0_i32_1 = arith.constant 0 : i32
    return %c0_i32, %c0_i32_0 : i32, i32
  }
  func.func @transform_3(%arg0: i32) -> (i32, i32) {
    %c0_i32 = arith.constant 0 : i32
    %c0_i32_0 = arith.constant 0 : i32
    return %arg0, %c0_i32 : i32, i32
  }
}

module attributes {stable_mosaic.version = 11 : i64} {
  func.func @_mm_bias_res_kernel(%arg0: i32, %arg1: memref<128x8xbf16, #tpu.memory_space<vmem>>, %arg2: memref<8x32xbf16, #tpu.memory_space<vmem>>, %arg3: memref<1x32xf32, #tpu.memory_space<vmem>>, %arg4: memref<128x32xf32, #tpu.memory_space<vmem>>, %arg5: memref<128x32xf32, #tpu.memory_space<vmem>>) attributes {dimension_semantics = [#tpu.dimension_semantics<parallel>], iteration_bounds = array<i64: 1>, scalar_prefetch = 0 : i64, scratch_operands = 0 : i64, tpu.core_type = #tpu.core_type<tc>, window_params = [{transform_indices = @transform_0, window_bounds = array<i64: 128, 8>}, {pipeline_mode = #tpu.pipeline_mode<synchronous>, transform_indices = @transform_1, window_bounds = array<i64: 8, 32>}, {pipeline_mode = #tpu.pipeline_mode<synchronous>, transform_indices = @transform_2, window_bounds = array<i64: 1, 32>}, {transform_indices = @transform_3, window_bounds = array<i64: 128, 32>}, {transform_indices = @transform_4, window_bounds = array<i64: 128, 32>}]} {
    %c0 = arith.constant 0 : index
    %c0_0 = arith.constant 0 : index
    %0 = vector.load %arg1[%c0, %c0_0] : memref<128x8xbf16, #tpu.memory_space<vmem>>, vector<128x8xbf16>
    %c0_1 = arith.constant 0 : index
    %c0_2 = arith.constant 0 : index
    %1 = vector.load %arg2[%c0_1, %c0_2] : memref<8x32xbf16, #tpu.memory_space<vmem>>, vector<8x32xbf16>
    %cst = arith.constant dense<0.000000e+00> : vector<128x32xf32>
    %2 = tpu.matmul %0, %1, %cst {dimension_numbers = #tpu.dot_dimension_numbers<[1], [0], [0], [1], [0, 0, 1, 1], [], []>} : vector<128x8xbf16>, vector<8x32xbf16>, vector<128x32xf32> -> vector<128x32xf32>
    %c0_3 = arith.constant 0 : index
    %c0_4 = arith.constant 0 : index
    %3 = vector.load %arg3[%c0_3, %c0_4] : memref<1x32xf32, #tpu.memory_space<vmem>>, vector<1x32xf32>
    %4 = vector.broadcast %3 : vector<1x32xf32> to vector<128x32xf32>
    %5 = arith.addf %2, %4 : vector<128x32xf32>
    %c0_5 = arith.constant 0 : index
    %c0_6 = arith.constant 0 : index
    %6 = vector.load %arg4[%c0_5, %c0_6] : memref<128x32xf32, #tpu.memory_space<vmem>>, vector<128x32xf32>
    %7 = arith.addf %5, %6 : vector<128x32xf32>
    %c0_7 = arith.constant 0 : index
    %c0_8 = arith.constant 0 : index
    %8 = vector.load %arg5[%c0_7, %c0_8] : memref<128x32xf32, #tpu.memory_space<vmem>>, vector<128x32xf32>
    tpu.vector_store %arg5[%c0_7, %c0_8], %7 {strides = array<i32>} : memref<128x32xf32, #tpu.memory_space<vmem>>, vector<128x32xf32>,
    return
  }
  func.func @transform_0(%arg0: i32) -> (i32, i32) {
    %c0_i32 = arith.constant 0 : i32
    %c0_i32_0 = arith.constant 0 : i32
    return %arg0, %c0_i32 : i32, i32
  }
  func.func @transform_1(%arg0: i32) -> (i32, i32) {
    %c0_i32 = arith.constant 0 : i32
    %c0_i32_0 = arith.constant 0 : i32
    %c0_i32_1 = arith.constant 0 : i32
    return %c0_i32, %c0_i32_0 : i32, i32
  }
  func.func @transform_2(%arg0: i32) -> (i32, i32) {
    %c0_i32 = arith.constant 0 : i32
    %c0_i32_0 = arith.constant 0 : i32
    %c0_i32_1 = arith.constant 0 : i32
    return %c0_i32, %c0_i32_0 : i32, i32
  }
  func.func @transform_3(%arg0: i32) -> (i32, i32) {
    %c0_i32 = arith.constant 0 : i32
    %c0_i32_0 = arith.constant 0 : i32
    return %arg0, %c0_i32 : i32, i32
  }
  func.func @transform_4(%arg0: i32) -> (i32, i32) {
    %c0_i32 = arith.constant 0 : i32
    %c0_i32_0 = arith.constant 0 : i32
    return %arg0, %c0_i32 : i32, i32
  }
}

module attributes {stable_mosaic.version = 11 : i64} {
  func.func @_mm_bias_res_kernel(%arg0: i32, %arg1: memref<512x4xbf16, #tpu.memory_space<vmem>>, %arg2: memref<4x32xbf16, #tpu.memory_space<vmem>>, %arg3: memref<1x32xf32, #tpu.memory_space<vmem>>, %arg4: memref<512x32xf32, #tpu.memory_space<vmem>>, %arg5: memref<512x32xf32, #tpu.memory_space<vmem>>) attributes {dimension_semantics = [#tpu.dimension_semantics<parallel>], iteration_bounds = array<i64: 1>, scalar_prefetch = 0 : i64, scratch_operands = 0 : i64, tpu.core_type = #tpu.core_type<tc>, window_params = [{transform_indices = @transform_0, window_bounds = array<i64: 512, 4>}, {pipeline_mode = #tpu.pipeline_mode<synchronous>, transform_indices = @transform_1, window_bounds = array<i64: 4, 32>}, {pipeline_mode = #tpu.pipeline_mode<synchronous>, transform_indices = @transform_2, window_bounds = array<i64: 1, 32>}, {transform_indices = @transform_3, window_bounds = array<i64: 512, 32>}, {transform_indices = @transform_4, window_bounds = array<i64: 512, 32>}]} {
    %c0 = arith.constant 0 : index
    %c0_0 = arith.constant 0 : index
    %0 = vector.load %arg1[%c0, %c0_0] : memref<512x4xbf16, #tpu.memory_space<vmem>>, vector<512x4xbf16>
    %c0_1 = arith.constant 0 : index
    %c0_2 = arith.constant 0 : index
    %1 = vector.load %arg2[%c0_1, %c0_2] : memref<4x32xbf16, #tpu.memory_space<vmem>>, vector<4x32xbf16>
    %cst = arith.constant dense<0.000000e+00> : vector<512x32xf32>
    %2 = tpu.matmul %0, %1, %cst {dimension_numbers = #tpu.dot_dimension_numbers<[1], [0], [0], [1], [0, 0, 1, 1], [], []>} : vector<512x4xbf16>, vector<4x32xbf16>, vector<512x32xf32> -> vector<512x32xf32>
    %c0_3 = arith.constant 0 : index
    %c0_4 = arith.constant 0 : index
    %3 = vector.load %arg3[%c0_3, %c0_4] : memref<1x32xf32, #tpu.memory_space<vmem>>, vector<1x32xf32>
    %4 = vector.broadcast %3 : vector<1x32xf32> to vector<512x32xf32>
    %5 = arith.addf %2, %4 : vector<512x32xf32>
    %c0_5 = arith.constant 0 : index
    %c0_6 = arith.constant 0 : index
    %6 = vector.load %arg4[%c0_5, %c0_6] : memref<512x32xf32, #tpu.memory_space<vmem>>, vector<512x32xf32>
    %7 = arith.addf %5, %6 : vector<512x32xf32>
    %c0_7 = arith.constant 0 : index
    %c0_8 = arith.constant 0 : index
    %8 = vector.load %arg5[%c0_7, %c0_8] : memref<512x32xf32, #tpu.memory_space<vmem>>, vector<512x32xf32>
    tpu.vector_store %arg5[%c0_7, %c0_8], %7 {strides = array<i32>} : memref<512x32xf32, #tpu.memory_space<vmem>>, vector<512x32xf32>,
    return
  }
  func.func @transform_0(%arg0: i32) -> (i32, i32) {
    %c0_i32 = arith.constant 0 : i32
    %c0_i32_0 = arith.constant 0 : i32
    return %arg0, %c0_i32 : i32, i32
  }
  func.func @transform_1(%arg0: i32) -> (i32, i32) {
    %c0_i32 = arith.constant 0 : i32
    %c0_i32_0 = arith.constant 0 : i32
    %c0_i32_1 = arith.constant 0 : i32
    return %c0_i32, %c0_i32_0 : i32, i32
  }
  func.func @transform_2(%arg0: i32) -> (i32, i32) {
    %c0_i32 = arith.constant 0 : i32
    %c0_i32_0 = arith.constant 0 : i32
    %c0_i32_1 = arith.constant 0 : i32
    return %c0_i32, %c0_i32_0 : i32, i32
  }
  func.func @transform_3(%arg0: i32) -> (i32, i32) {
    %c0_i32 = arith.constant 0 : i32
    %c0_i32_0 = arith.constant 0 : i32
    return %arg0, %c0_i32 : i32, i32
  }
  func.func @transform_4(%arg0: i32) -> (i32, i32) {
    %c0_i32 = arith.constant 0 : i32
    %c0_i32_0 = arith.constant 0 : i32
    return %arg0, %c0_i32 : i32, i32
  }
}

module attributes {stable_mosaic.version = 11 : i64} {
  func.func @_mm_bias_kernel(%arg0: i32, %arg1: memref<512x288xbf16, #tpu.memory_space<vmem>>, %arg2: memref<288x32xbf16, #tpu.memory_space<vmem>>, %arg3: memref<1x32xf32, #tpu.memory_space<vmem>>, %arg4: memref<512x32xf32, #tpu.memory_space<vmem>>) attributes {dimension_semantics = [#tpu.dimension_semantics<parallel>], iteration_bounds = array<i64: 1>, scalar_prefetch = 0 : i64, scratch_operands = 0 : i64, tpu.core_type = #tpu.core_type<tc>, window_params = [{transform_indices = @transform_0, window_bounds = array<i64: 512, 288>}, {pipeline_mode = #tpu.pipeline_mode<synchronous>, transform_indices = @transform_1, window_bounds = array<i64: 288, 32>}, {pipeline_mode = #tpu.pipeline_mode<synchronous>, transform_indices = @transform_2, window_bounds = array<i64: 1, 32>}, {transform_indices = @transform_3, window_bounds = array<i64: 512, 32>}]} {
    %c0 = arith.constant 0 : index
    %c0_0 = arith.constant 0 : index
    %0 = vector.load %arg1[%c0, %c0_0] : memref<512x288xbf16, #tpu.memory_space<vmem>>, vector<512x288xbf16>
    %c0_1 = arith.constant 0 : index
    %c0_2 = arith.constant 0 : index
    %1 = vector.load %arg2[%c0_1, %c0_2] : memref<288x32xbf16, #tpu.memory_space<vmem>>, vector<288x32xbf16>
    %cst = arith.constant dense<0.000000e+00> : vector<512x32xf32>
    %2 = tpu.matmul %0, %1, %cst {dimension_numbers = #tpu.dot_dimension_numbers<[1], [0], [0], [1], [0, 0, 1, 1], [], []>} : vector<512x288xbf16>, vector<288x32xbf16>, vector<512x32xf32> -> vector<512x32xf32>
    %c0_3 = arith.constant 0 : index
    %c0_4 = arith.constant 0 : index
    %3 = vector.load %arg3[%c0_3, %c0_4] : memref<1x32xf32, #tpu.memory_space<vmem>>, vector<1x32xf32>
    %4 = vector.broadcast %3 : vector<1x32xf32> to vector<512x32xf32>
    %5 = arith.addf %2, %4 : vector<512x32xf32>
    %c0_5 = arith.constant 0 : index
    %c0_6 = arith.constant 0 : index
    %6 = vector.load %arg4[%c0_5, %c0_6] : memref<512x32xf32, #tpu.memory_space<vmem>>, vector<512x32xf32>
    tpu.vector_store %arg4[%c0_5, %c0_6], %5 {strides = array<i32>} : memref<512x32xf32, #tpu.memory_space<vmem>>, vector<512x32xf32>,
    return
  }
  func.func @transform_0(%arg0: i32) -> (i32, i32) {
    %c0_i32 = arith.constant 0 : i32
    %c0_i32_0 = arith.constant 0 : i32
    return %arg0, %c0_i32 : i32, i32
  }
  func.func @transform_1(%arg0: i32) -> (i32, i32) {
    %c0_i32 = arith.constant 0 : i32
    %c0_i32_0 = arith.constant 0 : i32
    %c0_i32_1 = arith.constant 0 : i32
    return %c0_i32, %c0_i32_0 : i32, i32
  }
  func.func @transform_2(%arg0: i32) -> (i32, i32) {
    %c0_i32 = arith.constant 0 : i32
    %c0_i32_0 = arith.constant 0 : i32
    %c0_i32_1 = arith.constant 0 : i32
    return %c0_i32, %c0_i32_0 : i32, i32
  }
  func.func @transform_3(%arg0: i32) -> (i32, i32) {
    %c0_i32 = arith.constant 0 : i32
    %c0_i32_0 = arith.constant 0 : i32
    return %arg0, %c0_i32 : i32, i32
  }
}

module attributes {stable_mosaic.version = 11 : i64} {
  func.func @_mm_bias_kernel(%arg0: i32, %arg1: memref<128x288xbf16, #tpu.memory_space<vmem>>, %arg2: memref<288x32xbf16, #tpu.memory_space<vmem>>, %arg3: memref<1x32xf32, #tpu.memory_space<vmem>>, %arg4: memref<128x32xf32, #tpu.memory_space<vmem>>) attributes {dimension_semantics = [#tpu.dimension_semantics<parallel>], iteration_bounds = array<i64: 1>, scalar_prefetch = 0 : i64, scratch_operands = 0 : i64, tpu.core_type = #tpu.core_type<tc>, window_params = [{transform_indices = @transform_0, window_bounds = array<i64: 128, 288>}, {pipeline_mode = #tpu.pipeline_mode<synchronous>, transform_indices = @transform_1, window_bounds = array<i64: 288, 32>}, {pipeline_mode = #tpu.pipeline_mode<synchronous>, transform_indices = @transform_2, window_bounds = array<i64: 1, 32>}, {transform_indices = @transform_3, window_bounds = array<i64: 128, 32>}]} {
    %c0 = arith.constant 0 : index
    %c0_0 = arith.constant 0 : index
    %0 = vector.load %arg1[%c0, %c0_0] : memref<128x288xbf16, #tpu.memory_space<vmem>>, vector<128x288xbf16>
    %c0_1 = arith.constant 0 : index
    %c0_2 = arith.constant 0 : index
    %1 = vector.load %arg2[%c0_1, %c0_2] : memref<288x32xbf16, #tpu.memory_space<vmem>>, vector<288x32xbf16>
    %cst = arith.constant dense<0.000000e+00> : vector<128x32xf32>
    %2 = tpu.matmul %0, %1, %cst {dimension_numbers = #tpu.dot_dimension_numbers<[1], [0], [0], [1], [0, 0, 1, 1], [], []>} : vector<128x288xbf16>, vector<288x32xbf16>, vector<128x32xf32> -> vector<128x32xf32>
    %c0_3 = arith.constant 0 : index
    %c0_4 = arith.constant 0 : index
    %3 = vector.load %arg3[%c0_3, %c0_4] : memref<1x32xf32, #tpu.memory_space<vmem>>, vector<1x32xf32>
    %4 = vector.broadcast %3 : vector<1x32xf32> to vector<128x32xf32>
    %5 = arith.addf %2, %4 : vector<128x32xf32>
    %c0_5 = arith.constant 0 : index
    %c0_6 = arith.constant 0 : index
    %6 = vector.load %arg4[%c0_5, %c0_6] : memref<128x32xf32, #tpu.memory_space<vmem>>, vector<128x32xf32>
    tpu.vector_store %arg4[%c0_5, %c0_6], %5 {strides = array<i32>} : memref<128x32xf32, #tpu.memory_space<vmem>>, vector<128x32xf32>,
    return
  }
  func.func @transform_0(%arg0: i32) -> (i32, i32) {
    %c0_i32 = arith.constant 0 : i32
    %c0_i32_0 = arith.constant 0 : i32
    return %arg0, %c0_i32 : i32, i32
  }
  func.func @transform_1(%arg0: i32) -> (i32, i32) {
    %c0_i32 = arith.constant 0 : i32
    %c0_i32_0 = arith.constant 0 : i32
    %c0_i32_1 = arith.constant 0 : i32
    return %c0_i32, %c0_i32_0 : i32, i32
  }
  func.func @transform_2(%arg0: i32) -> (i32, i32) {
    %c0_i32 = arith.constant 0 : i32
    %c0_i32_0 = arith.constant 0 : i32
    %c0_i32_1 = arith.constant 0 : i32
    return %c0_i32, %c0_i32_0 : i32, i32
  }
  func.func @transform_3(%arg0: i32) -> (i32, i32) {
    %c0_i32 = arith.constant 0 : i32
    %c0_i32_0 = arith.constant 0 : i32
    return %arg0, %c0_i32 : i32, i32
  }
}

module attributes {stable_mosaic.version = 11 : i64} {
  func.func @_mm_bias_kernel(%arg0: i32, %arg1: memref<32x288xbf16, #tpu.memory_space<vmem>>, %arg2: memref<288x32xbf16, #tpu.memory_space<vmem>>, %arg3: memref<1x32xf32, #tpu.memory_space<vmem>>, %arg4: memref<32x32xf32, #tpu.memory_space<vmem>>) attributes {dimension_semantics = [#tpu.dimension_semantics<parallel>], iteration_bounds = array<i64: 1>, scalar_prefetch = 0 : i64, scratch_operands = 0 : i64, tpu.core_type = #tpu.core_type<tc>, window_params = [{transform_indices = @transform_0, window_bounds = array<i64: 32, 288>}, {pipeline_mode = #tpu.pipeline_mode<synchronous>, transform_indices = @transform_1, window_bounds = array<i64: 288, 32>}, {pipeline_mode = #tpu.pipeline_mode<synchronous>, transform_indices = @transform_2, window_bounds = array<i64: 1, 32>}, {transform_indices = @transform_3, window_bounds = array<i64: 32, 32>}]} {
    %c0 = arith.constant 0 : index
    %c0_0 = arith.constant 0 : index
    %0 = vector.load %arg1[%c0, %c0_0] : memref<32x288xbf16, #tpu.memory_space<vmem>>, vector<32x288xbf16>
    %c0_1 = arith.constant 0 : index
    %c0_2 = arith.constant 0 : index
    %1 = vector.load %arg2[%c0_1, %c0_2] : memref<288x32xbf16, #tpu.memory_space<vmem>>, vector<288x32xbf16>
    %cst = arith.constant dense<0.000000e+00> : vector<32x32xf32>
    %2 = tpu.matmul %0, %1, %cst {dimension_numbers = #tpu.dot_dimension_numbers<[1], [0], [0], [1], [0, 0, 1, 1], [], []>} : vector<32x288xbf16>, vector<288x32xbf16>, vector<32x32xf32> -> vector<32x32xf32>
    %c0_3 = arith.constant 0 : index
    %c0_4 = arith.constant 0 : index
    %3 = vector.load %arg3[%c0_3, %c0_4] : memref<1x32xf32, #tpu.memory_space<vmem>>, vector<1x32xf32>
    %4 = vector.broadcast %3 : vector<1x32xf32> to vector<32x32xf32>
    %5 = arith.addf %2, %4 : vector<32x32xf32>
    %c0_5 = arith.constant 0 : index
    %c0_6 = arith.constant 0 : index
    %6 = vector.load %arg4[%c0_5, %c0_6] : memref<32x32xf32, #tpu.memory_space<vmem>>, vector<32x32xf32>
    tpu.vector_store %arg4[%c0_5, %c0_6], %5 {strides = array<i32>} : memref<32x32xf32, #tpu.memory_space<vmem>>, vector<32x32xf32>,
    return
  }
  func.func @transform_0(%arg0: i32) -> (i32, i32) {
    %c0_i32 = arith.constant 0 : i32
    %c0_i32_0 = arith.constant 0 : i32
    return %arg0, %c0_i32 : i32, i32
  }
  func.func @transform_1(%arg0: i32) -> (i32, i32) {
    %c0_i32 = arith.constant 0 : i32
    %c0_i32_0 = arith.constant 0 : i32
    %c0_i32_1 = arith.constant 0 : i32
    return %c0_i32, %c0_i32_0 : i32, i32
  }
  func.func @transform_2(%arg0: i32) -> (i32, i32) {
    %c0_i32 = arith.constant 0 : i32
    %c0_i32_0 = arith.constant 0 : i32
    %c0_i32_1 = arith.constant 0 : i32
    return %c0_i32, %c0_i32_0 : i32, i32
  }
  func.func @transform_3(%arg0: i32) -> (i32, i32) {
    %c0_i32 = arith.constant 0 : i32
    %c0_i32_0 = arith.constant 0 : i32
    return %arg0, %c0_i32 : i32, i32
  }
}

module attributes {stable_mosaic.version = 11 : i64} {
  func.func @_mm_bias_kernel(%arg0: i32, %arg1: memref<8x144xbf16, #tpu.memory_space<vmem>>, %arg2: memref<144x32xbf16, #tpu.memory_space<vmem>>, %arg3: memref<1x32xf32, #tpu.memory_space<vmem>>, %arg4: memref<8x32xf32, #tpu.memory_space<vmem>>) attributes {dimension_semantics = [#tpu.dimension_semantics<parallel>], iteration_bounds = array<i64: 1>, scalar_prefetch = 0 : i64, scratch_operands = 0 : i64, tpu.core_type = #tpu.core_type<tc>, window_params = [{transform_indices = @transform_0, window_bounds = array<i64: 8, 144>}, {pipeline_mode = #tpu.pipeline_mode<synchronous>, transform_indices = @transform_1, window_bounds = array<i64: 144, 32>}, {pipeline_mode = #tpu.pipeline_mode<synchronous>, transform_indices = @transform_2, window_bounds = array<i64: 1, 32>}, {transform_indices = @transform_3, window_bounds = array<i64: 8, 32>}]} {
    %c0 = arith.constant 0 : index
    %c0_0 = arith.constant 0 : index
    %0 = vector.load %arg1[%c0, %c0_0] : memref<8x144xbf16, #tpu.memory_space<vmem>>, vector<8x144xbf16>
    %c0_1 = arith.constant 0 : index
    %c0_2 = arith.constant 0 : index
    %1 = vector.load %arg2[%c0_1, %c0_2] : memref<144x32xbf16, #tpu.memory_space<vmem>>, vector<144x32xbf16>
    %cst = arith.constant dense<0.000000e+00> : vector<8x32xf32>
    %2 = tpu.matmul %0, %1, %cst {dimension_numbers = #tpu.dot_dimension_numbers<[1], [0], [0], [1], [0, 0, 1, 1], [], []>} : vector<8x144xbf16>, vector<144x32xbf16>, vector<8x32xf32> -> vector<8x32xf32>
    %c0_3 = arith.constant 0 : index
    %c0_4 = arith.constant 0 : index
    %3 = vector.load %arg3[%c0_3, %c0_4] : memref<1x32xf32, #tpu.memory_space<vmem>>, vector<1x32xf32>
    %4 = vector.broadcast %3 : vector<1x32xf32> to vector<8x32xf32>
    %5 = arith.addf %2, %4 : vector<8x32xf32>
    %c0_5 = arith.constant 0 : index
    %c0_6 = arith.constant 0 : index
    %6 = vector.load %arg4[%c0_5, %c0_6] : memref<8x32xf32, #tpu.memory_space<vmem>>, vector<8x32xf32>
    tpu.vector_store %arg4[%c0_5, %c0_6], %5 {strides = array<i32>} : memref<8x32xf32, #tpu.memory_space<vmem>>, vector<8x32xf32>,
    return
  }
  func.func @transform_0(%arg0: i32) -> (i32, i32) {
    %c0_i32 = arith.constant 0 : i32
    %c0_i32_0 = arith.constant 0 : i32
    return %arg0, %c0_i32 : i32, i32
  }
  func.func @transform_1(%arg0: i32) -> (i32, i32) {
    %c0_i32 = arith.constant 0 : i32
    %c0_i32_0 = arith.constant 0 : i32
    %c0_i32_1 = arith.constant 0 : i32
    return %c0_i32, %c0_i32_0 : i32, i32
  }
  func.func @transform_2(%arg0: i32) -> (i32, i32) {
    %c0_i32 = arith.constant 0 : i32
    %c0_i32_0 = arith.constant 0 : i32
    %c0_i32_1 = arith.constant 0 : i32
    return %c0_i32, %c0_i32_0 : i32, i32
  }
  func.func @transform_3(%arg0: i32) -> (i32, i32) {
    %c0_i32 = arith.constant 0 : i32
    %c0_i32_0 = arith.constant 0 : i32
    return %arg0, %c0_i32 : i32, i32
  }
}

module attributes {stable_mosaic.version = 11 : i64} {
  func.func @_mm_bias_kernel(%arg0: i32, %arg1: memref<8x288xbf16, #tpu.memory_space<vmem>>, %arg2: memref<288x32xbf16, #tpu.memory_space<vmem>>, %arg3: memref<1x32xf32, #tpu.memory_space<vmem>>, %arg4: memref<8x32xf32, #tpu.memory_space<vmem>>) attributes {dimension_semantics = [#tpu.dimension_semantics<parallel>], iteration_bounds = array<i64: 1>, scalar_prefetch = 0 : i64, scratch_operands = 0 : i64, tpu.core_type = #tpu.core_type<tc>, window_params = [{transform_indices = @transform_0, window_bounds = array<i64: 8, 288>}, {pipeline_mode = #tpu.pipeline_mode<synchronous>, transform_indices = @transform_1, window_bounds = array<i64: 288, 32>}, {pipeline_mode = #tpu.pipeline_mode<synchronous>, transform_indices = @transform_2, window_bounds = array<i64: 1, 32>}, {transform_indices = @transform_3, window_bounds = array<i64: 8, 32>}]} {
    %c0 = arith.constant 0 : index
    %c0_0 = arith.constant 0 : index
    %0 = vector.load %arg1[%c0, %c0_0] : memref<8x288xbf16, #tpu.memory_space<vmem>>, vector<8x288xbf16>
    %cst = arith.constant 0.000000e+00 : bf16
    %1 = vector.broadcast %cst : bf16 to vector<8x288xbf16>
    %2 = arith.maximumf %0, %1 : vector<8x288xbf16>
    %c0_1 = arith.constant 0 : index
    %c0_2 = arith.constant 0 : index
    %3 = vector.load %arg2[%c0_1, %c0_2] : memref<288x32xbf16, #tpu.memory_space<vmem>>, vector<288x32xbf16>
    %cst_3 = arith.constant dense<0.000000e+00> : vector<8x32xf32>
    %4 = tpu.matmul %2, %3, %cst_3 {dimension_numbers = #tpu.dot_dimension_numbers<[1], [0], [0], [1], [0, 0, 1, 1], [], []>} : vector<8x288xbf16>, vector<288x32xbf16>, vector<8x32xf32> -> vector<8x32xf32>
    %c0_4 = arith.constant 0 : index
    %c0_5 = arith.constant 0 : index
    %5 = vector.load %arg3[%c0_4, %c0_5] : memref<1x32xf32, #tpu.memory_space<vmem>>, vector<1x32xf32>
    %6 = vector.broadcast %5 : vector<1x32xf32> to vector<8x32xf32>
    %7 = arith.addf %4, %6 : vector<8x32xf32>
    %c0_6 = arith.constant 0 : index
    %c0_7 = arith.constant 0 : index
    %8 = vector.load %arg4[%c0_6, %c0_7] : memref<8x32xf32, #tpu.memory_space<vmem>>, vector<8x32xf32>
    tpu.vector_store %arg4[%c0_6, %c0_7], %7 {strides = array<i32>} : memref<8x32xf32, #tpu.memory_space<vmem>>, vector<8x32xf32>,
    return
  }
  func.func @transform_0(%arg0: i32) -> (i32, i32) {
    %c0_i32 = arith.constant 0 : i32
    %c0_i32_0 = arith.constant 0 : i32
    return %arg0, %c0_i32 : i32, i32
  }
  func.func @transform_1(%arg0: i32) -> (i32, i32) {
    %c0_i32 = arith.constant 0 : i32
    %c0_i32_0 = arith.constant 0 : i32
    %c0_i32_1 = arith.constant 0 : i32
    return %c0_i32, %c0_i32_0 : i32, i32
  }
  func.func @transform_2(%arg0: i32) -> (i32, i32) {
    %c0_i32 = arith.constant 0 : i32
    %c0_i32_0 = arith.constant 0 : i32
    %c0_i32_1 = arith.constant 0 : i32
    return %c0_i32, %c0_i32_0 : i32, i32
  }
  func.func @transform_3(%arg0: i32) -> (i32, i32) {
    %c0_i32 = arith.constant 0 : i32
    %c0_i32_0 = arith.constant 0 : i32
    return %arg0, %c0_i32 : i32, i32
  }
}

</mosaic_0001>

<llo_original>
// kernel: pyramid_features_forward.8
$region0: #{pyramid_features_forward.8}
  #allocation0 [shape = 'u32[]', space=smem, size = 0x4, offset = 0x4, fixed_abs, tag = 'smem constant byte address 0x4 - core index']
  #allocation1 [shape = 'u32[144,128]{1,0:T(1,128)}', space=vmem, size = 0x12000, scoped, tag = 'internal scratch']
  %s0 = inlined_call_operand.vmem [shape: bf16[32,16], index: 0, kind: input, shape index: {}]
  %s1 = inlined_call_operand.vmem [shape: bf16[16,32], index: 1, kind: input, shape index: {}]
  %s2 = inlined_call_operand.vmem [shape: f32[1,32], index: 2, kind: input, shape index: {}]
  %s3 = inlined_call_operand.vmem [shape: f32[32,32], index: 3, kind: output, shape index: {}]
  %s4 = sld [smem:[#allocation0]]
  $region22: #{pyramid_features_forward.8} parent=0
    _
  %s6 = ssub.s32 1, %s4
  %s7 = scalar_select 0, %s6, %s4
  // Predicated region
  $region2: #{pyramid_features_forward.8} parent=0 // pred_check
    _
  $region3: #{pyramid_features_forward.8} parent=0 // pred_check_branch
    %9 = sbr.rel (0) target = $region5
  $region4: #{pyramid_features_forward.8} parent=0 // pred_region
    _
  $region5: #{pyramid_features_forward.8} parent=0 // pred_fallthru
    _
  // Predicated region
  $region6: #{pyramid_features_forward.8} parent=0 // pred_check
    _
  $region7: #{pyramid_features_forward.8} parent=0 // pred_check_branch
    %11 = sbr.rel (0) target = $region9
  $region8: #{pyramid_features_forward.8} parent=0 // pred_region
    _
  $region9: #{pyramid_features_forward.8} parent=0 // pred_fallthru
    _
  // Predicated region
  $region10: #{pyramid_features_forward.8} parent=0 // pred_check
    _
  $region11: #{pyramid_features_forward.8} parent=0 // pred_check_branch
    %13 = sbr.rel (0) target = $region13
  $region12: #{pyramid_features_forward.8} parent=0 // pred_region
    _
  $region13: #{pyramid_features_forward.8} parent=0 // pred_fallthru
    _
  %v15 = vld [vmem:[%s0] sm:$0xf]
  %v16 = vld [vmem:[%s0 + $0x4] sm:$0xf]
  %v17 = vld [vmem:[%s0 + $0x8] sm:$0xf]
  %v18 = vld [vmem:[%s0 + $0xc] sm:$0xf]
  %v19 = vld [vmem:[%s1] sm:$0xf]
  %v20 = vld [vmem:[%s1 + $0x4] sm:$0xf]
  %v21 = vld [vmem:[%s2] sm:$0x1]
  %v23 = vlaneseq
  %v24 = vshrl.u32 %v23, 7
  %v25 = vsub.s32 0, %v24
  %v26 = vrot.slane %v21, %v25
  %v32 = vunpack.c.l.b16 %v15
  %v33 = vunpack.c.l.b16 %v16
  %v34 = vunpack.c.l.b16 %v17
  %v35 = vunpack.c.l.b16 %v18
  %v36 = vpack.c.b16 %v33, %v32
  %v37 = vpack.c.b16 %v35, %v34
  %v40 = vunpack.c.l.b16 %v19
  %v41 = vunpack.c.l.b16 %v20
  %v42 = vpack.c.b16 %v41, %v40
  %vm44 = vcmask 130048
  %v46 = vsel %vm44, %v36, 0
  %v49 = vsel %vm44, %v37, 0
  %51 = vmatprep.subr.bf16.mxu0 0
  %52 = vmatpush1.bf16.msra.mxu0 0
  %53 = vmatprep.subr.bf16.mxu0 0
  %54 = vmatpush1.bf16.msra.mxu0 0
  %55 = vmatprep.subr.bf16.mxu0 0
  %56 = vmatpush1.bf16.msra.mxu0 0
  %57 = vmatprep.subr.bf16.mxu0 0
  %58 = vmatpush1.bf16.msra.mxu0 0
  %59 = vmatprep.subr.bf16.mxu0 0
  %60 = vmatpush1.bf16.msra.mxu0 0
  %61 = vmatprep.subr.bf16.mxu0 0
  %62 = vmatpush1.bf16.msra.mxu0 0
  %63 = vmatprep.subr.bf16.mxu0 0
  %64 = vmatpush1.bf16.msra.mxu0 0
  %65 = vmatprep.subr.bf16.mxu0 0
  %66 = vmatpush1.bf16.msra.mxu0 %v42
  %67 = vmatprep.subr.bf16.mxu0 0
  %68 = vmatpush2.bf16.msra.mxu0 0
  %69 = vmatprep.subr.bf16.mxu0 0
  %70 = vmatpush2.bf16.msra.mxu0 0
  %71 = vmatprep.subr.bf16.mxu0 0
  %72 = vmatpush2.bf16.msra.mxu0 0
  %73 = vmatprep.subr.bf16.mxu0 0
  %74 = vmatpush2.bf16.msra.mxu0 0
  %75 = vmatprep.subr.bf16.mxu0 0
  %76 = vmatpush2.bf16.msra.mxu0 0
  %77 = vmatprep.subr.bf16.mxu0 0
  %78 = vmatpush2.bf16.msra.mxu0 0
  %79 = vmatprep.subr.bf16.mxu0 0
  %80 = vmatpush2.bf16.msra.mxu0 0
  %81 = vmatprep.subr.bf16.mxu0 0
  %82 = vmatpush2.bf16.msra.mxu0 0
  %83 = vmatprep.mubr.bf16.mxu0 0
  %84 = vmatmul.mubr.bf16.gmra.mxu0 %v46
  %v85 = vpop.f32.mrf.mxu0
  %v86 = vadd.f32 %v26, %v85
  %v87 = vpop.f32.mrf.mxu0
  %v88 = vpop.f32.mrf.mxu0
  %v89 = vadd.f32 %v26, %v88
  %v90 = vpop.f32.mrf.mxu0
  %91 = vmatprep.mubr.bf16.mxu0 0
  %92 = vmatmul.mubr.bf16.gmra.mxu0 %v49
  %v93 = vpop.f32.mrf.mxu0
  %v94 = vadd.f32 %v26, %v93
  %v95 = vpop.f32.mrf.mxu0
  %v96 = vpop.f32.mrf.mxu0
  %v97 = vadd.f32 %v26, %v96
  %v98 = vpop.f32.mrf.mxu0
  %99 = vdwg.mxu0
  %vm100 = vcmask 261120
  %101 = vst.msk [vmem:[%s3] sm:$0xff] %vm100, %v86
  %102 = vst.msk [vmem:[%s3 + $0x8] sm:$0xff] %vm100, %v89
  %103 = vst.msk [vmem:[%s3 + $0x10] sm:$0xff] %vm100, %v94
  %104 = vst.msk [vmem:[%s3 + $0x18] sm:$0xff] %vm100, %v97
  // Predicated region
  $region14: #{pyramid_features_forward.8} parent=0 // pred_check
    _
  $region15: #{pyramid_features_forward.8} parent=0 // pred_check_branch
    %106 = sbr.rel (0) target = $region17
  $region16: #{pyramid_features_forward.8} parent=0 // pred_region
    _
  $region17: #{pyramid_features_forward.8} parent=0 // pred_fallthru
    _
  // Predicated region
  $region18: #{pyramid_features_forward.8} parent=0 // pred_check
    _
  $region19: #{pyramid_features_forward.8} parent=0 // pred_check_branch
    %108 = sbr.rel (0) target = $region21
  $region20: #{pyramid_features_forward.8} parent=0 // pred_region
    _
  $region21: #{pyramid_features_forward.8} parent=0 // pred_fallthru
    _

// kernel: pyramid_features_forward.10
$region0: #{pyramid_features_forward.10}
  #allocation0 [shape = 'u32[]', space=smem, size = 0x4, offset = 0x4, fixed_abs, tag = 'smem constant byte address 0x4 - core index']
  #allocation1 [shape = 'u32[144,128]{1,0:T(1,128)}', space=vmem, size = 0x12000, scoped, tag = 'internal scratch']
  %s0 = inlined_call_operand.vmem [shape: bf16[128,8], index: 0, kind: input, shape index: {}]
  %s1 = inlined_call_operand.vmem [shape: bf16[8,32], index: 1, kind: input, shape index: {}]
  %s2 = inlined_call_operand.vmem [shape: f32[1,32], index: 2, kind: input, shape index: {}]
  %s3 = inlined_call_operand.vmem [shape: f32[128,32], index: 3, kind: input, shape index: {}]
  %s4 = inlined_call_operand.vmem [shape: f32[128,32], index: 4, kind: output, shape index: {}]
  %s5 = sld [smem:[#allocation0]]
  $region26: #{pyramid_features_forward.10} parent=0
    _
  %s7 = ssub.s32 1, %s5
  %s8 = scalar_select 0, %s7, %s5
  // Predicated region
  $region2: #{pyramid_features_forward.10} parent=0 // pred_check
    _
  $region3: #{pyramid_features_forward.10} parent=0 // pred_check_branch
    %10 = sbr.rel (0) target = $region5
  $region4: #{pyramid_features_forward.10} parent=0 // pred_region
    _
  $region5: #{pyramid_features_forward.10} parent=0 // pred_fallthru
    _
  // Predicated region
  $region6: #{pyramid_features_forward.10} parent=0 // pred_check
    _
  $region7: #{pyramid_features_forward.10} parent=0 // pred_check_branch
    %12 = sbr.rel (0) target = $region9
  $region8: #{pyramid_features_forward.10} parent=0 // pred_region
    _
  $region9: #{pyramid_features_forward.10} parent=0 // pred_fallthru
    _
  // Predicated region
  $region10: #{pyramid_features_forward.10} parent=0 // pred_check
    _
  $region11: #{pyramid_features_forward.10} parent=0 // pred_check_branch
    %14 = sbr.rel (0) target = $region13
  $region12: #{pyramid_features_forward.10} parent=0 // pred_region
    _
  $region13: #{pyramid_features_forward.10} parent=0 // pred_fallthru
    _
  // Predicated region
  $region14: #{pyramid_features_forward.10} parent=0 // pred_check
    _
  $region15: #{pyramid_features_forward.10} parent=0 // pred_check_branch
    %16 = sbr.rel (0) target = $region17
  $region16: #{pyramid_features_forward.10} parent=0 // pred_region
    _
  $region17: #{pyramid_features_forward.10} parent=0 // pred_fallthru
    _
  %v18 = vld [vmem:[%s0] sm:$0xf]
  %v19 = vld [vmem:[%s0 + $0x4] sm:$0xf]
  %v20 = vld [vmem:[%s0 + $0x8] sm:$0xf]
  %v21 = vld [vmem:[%s0 + $0xc] sm:$0xf]
  %v22 = vld [vmem:[%s0 + $0x10] sm:$0xf]
  %v23 = vld [vmem:[%s0 + $0x14] sm:$0xf]
  %v24 = vld [vmem:[%s0 + $0x18] sm:$0xf]
  %v25 = vld [vmem:[%s0 + $0x1c] sm:$0xf]
  %v26 = vld [vmem:[%s0 + $0x20] sm:$0xf]
  %v27 = vld [vmem:[%s0 + $0x24] sm:$0xf]
  %v28 = vld [vmem:[%s0 + $0x28] sm:$0xf]
  %v29 = vld [vmem:[%s0 + $0x2c] sm:$0xf]
  %v30 = vld [vmem:[%s0 + $0x30] sm:$0xf]
  %v31 = vld [vmem:[%s0 + $0x34] sm:$0xf]
  %v32 = vld [vmem:[%s0 + $0x38] sm:$0xf]
  %v33 = vld [vmem:[%s0 + $0x3c] sm:$0xf]
  %v34 = vld [vmem:[%s1] sm:$0xf]
  %v35 = vld [vmem:[%s2] sm:$0x1]
  %v37 = vlaneseq
  %v38 = vshrl.u32 %v37, 7
  %v39 = vsub.s32 0, %v38
  %v40 = vrot.slane %v35, %v39
  %v58 = vunpack.c.l.b16 %v18
  %v59 = vunpack.c.l.b16 %v19
  %v60 = vunpack.c.l.b16 %v20
  %v61 = vunpack.c.l.b16 %v21
  %v62 = vunpack.c.l.b16 %v22
  %v63 = vunpack.c.l.b16 %v23
  %v64 = vunpack.c.l.b16 %v24
  %v65 = vunpack.c.l.b16 %v25
  %v66 = vunpack.c.l.b16 %v26
  %v67 = vunpack.c.l.b16 %v27
  %v68 = vunpack.c.l.b16 %v28
  %v69 = vunpack.c.l.b16 %v29
  %v70 = vunpack.c.l.b16 %v30
  %v71 = vunpack.c.l.b16 %v31
  %v72 = vunpack.c.l.b16 %v32
  %v73 = vunpack.c.l.b16 %v33
  %v74 = vpack.c.b16 %v59, %v58
  %v75 = vpack.c.b16 %v61, %v60
  %v76 = vpack.c.b16 %v63, %v62
  %v77 = vpack.c.b16 %v65, %v64
  %v78 = vpack.c.b16 %v67, %v66
  %v79 = vpack.c.b16 %v69, %v68
  %v80 = vpack.c.b16 %v71, %v70
  %v81 = vpack.c.b16 %v73, %v72
  %vm82 = vcmask 64512
  %v84 = vsel %vm82, %v74, 0
  %v87 = vsel %vm82, %v75, 0
  %v90 = vsel %vm82, %v76, 0
  %v93 = vsel %vm82, %v77, 0
  %v96 = vsel %vm82, %v78, 0
  %v99 = vsel %vm82, %v79, 0
  %v102 = vsel %vm82, %v80, 0
  %v105 = vsel %vm82, %v81, 0
  %vm107 = vcmask 1043456
  %v109 = vsel %vm107, %v34, 0
  %111 = vmatprep.subr.bf16.mxu0 0
  %112 = vmatpush1.bf16.msra.mxu0 0
  %113 = vmatprep.subr.bf16.mxu0 0
  %114 = vmatpush1.bf16.msra.mxu0 0
  %115 = vmatprep.subr.bf16.mxu0 0
  %116 = vmatpush1.bf16.msra.mxu0 0
  %117 = vmatprep.subr.bf16.mxu0 0
  %118 = vmatpush1.bf16.msra.mxu0 0
  %119 = vmatprep.subr.bf16.mxu0 0
  %120 = vmatpush1.bf16.msra.mxu0 0
  %121 = vmatprep.subr.bf16.mxu0 0
  %122 = vmatpush1.bf16.msra.mxu0 0
  %123 = vmatprep.subr.bf16.mxu0 0
  %124 = vmatpush1.bf16.msra.mxu0 0
  %125 = vmatprep.subr.bf16.mxu0 0
  %126 = vmatpush1.bf16.msra.mxu0 %v109
  %127 = vmatprep.subr.bf16.mxu0 0
  %128 = vmatpush2.bf16.msra.mxu0 0
  %129 = vmatprep.subr.bf16.mxu0 0
  %130 = vmatpush2.bf16.msra.mxu0 0
  %131 = vmatprep.subr.bf16.mxu0 0
  %132 = vmatpush2.bf16.msra.mxu0 0
  %133 = vmatprep.subr.bf16.mxu0 0
  %134 = vmatpush2.bf16.msra.mxu0 0
  %135 = vmatprep.subr.bf16.mxu0 0
  %136 = vmatpush2.bf16.msra.mxu0 0
  %137 = vmatprep.subr.bf16.mxu0 0
  %138 = vmatpush2.bf16.msra.mxu0 0
  %139 = vmatprep.subr.bf16.mxu0 0
  %140 = vmatpush2.bf16.msra.mxu0 0
  %141 = vmatprep.subr.bf16.mxu0 0
  %142 = vmatpush2.bf16.msra.mxu0 0
  %143 = vmatprep.mubr.bf16.mxu0 0
  %144 = vmatmul.mubr.bf16.gmra.mxu0 %v84
  %v145 = vpop.f32.mrf.mxu0
  %v146 = vadd.f32 %v40, %v145
  %v147 = vpop.f32.mrf.mxu0
  %v148 = vpop.f32.mrf.mxu0
  %v149 = vadd.f32 %v40, %v148
  %v150 = vpop.f32.mrf.mxu0
  %151 = vmatprep.mubr.bf16.mxu0 0
  %152 = vmatmul.mubr.bf16.gmra.mxu0 %v87
  %v153 = vpop.f32.mrf.mxu0
  %v154 = vadd.f32 %v40, %v153
  %v155 = vpop.f32.mrf.mxu0
  %v156 = vpop.f32.mrf.mxu0
  %v157 = vadd.f32 %v40, %v156
  %v158 = vpop.f32.mrf.mxu0
  %159 = vmatprep.mubr.bf16.mxu0 0
  %160 = vmatmul.mubr.bf16.gmra.mxu0 %v90
  %v161 = vpop.f32.mrf.mxu0
  %v162 = vadd.f32 %v40, %v161
  %v163 = vpop.f32.mrf.mxu0
  %v164 = vpop.f32.mrf.mxu0
  %v165 = vadd.f32 %v40, %v164
  %v166 = vpop.f32.mrf.mxu0
  %167 = vmatprep.mubr.bf16.mxu0 0
  %168 = vmatmul.mubr.bf16.gmra.mxu0 %v93
  %v169 = vpop.f32.mrf.mxu0
  %v170 = vadd.f32 %v40, %v169
  %v171 = vpop.f32.mrf.mxu0
  %v172 = vpop.f32.mrf.mxu0
  %v173 = vadd.f32 %v40, %v172
  %v174 = vpop.f32.mrf.mxu0
  %175 = vmatprep.mubr.bf16.mxu0 0
  %176 = vmatmul.mubr.bf16.gmra.mxu0 %v96
  %v177 = vpop.f32.mrf.mxu0
  %v178 = vadd.f32 %v40, %v177
  %v179 = vpop.f32.mrf.mxu0
  %v180 = vpop.f32.mrf.mxu0
  %v181 = vadd.f32 %v40, %v180
  %v182 = vpop.f32.mrf.mxu0
  %183 = vmatprep.mubr.bf16.mxu0 0
  %184 = vmatmul.mubr.bf16.gmra.mxu0 %v99
  %v185 = vpop.f32.mrf.mxu0
  %v186 = vadd.f32 %v40, %v185
  %v187 = vpop.f32.mrf.mxu0
  %v188 = vpop.f32.mrf.mxu0
  %v189 = vadd.f32 %v40, %v188
  %v190 = vpop.f32.mrf.mxu0
  %191 = vmatprep.mubr.bf16.mxu0 0
  %192 = vmatmul.mubr.bf16.gmra.mxu0 %v102
  %v193 = vpop.f32.mrf.mxu0
  %v194 = vadd.f32 %v40, %v193
  %v195 = vpop.f32.mrf.mxu0
  %v196 = vpop.f32.mrf.mxu0
  %v197 = vadd.f32 %v40, %v196
  %v198 = vpop.f32.mrf.mxu0
  %199 = vmatprep.mubr.bf16.mxu0 0
  %200 = vmatmul.mubr.bf16.gmra.mxu0 %v105
  %v201 = vpop.f32.mrf.mxu0
  %v202 = vadd.f32 %v40, %v201
  %v203 = vpop.f32.mrf.mxu0
  %v204 = vpop.f32.mrf.mxu0
  %v205 = vadd.f32 %v40, %v204
  %v206 = vpop.f32.mrf.mxu0
  %207 = vdwg.mxu0
  %v208 = vld [vmem:[%s3] sm:$0xff]
  %v209 = vld [vmem:[%s3 + $0x8] sm:$0xff]
  %v210 = vld [vmem:[%s3 + $0x10] sm:$0xff]
  %v211 = vld [vmem:[%s3 + $0x18] sm:$0xff]
  %v212 = vld [vmem:[%s3 + $0x20] sm:$0xff]
  %v213 = vld [vmem:[%s3 + $0x28] sm:$0xff]
  %v214 = vld [vmem:[%s3 + $0x30] sm:$0xff]
  %v215 = vld [vmem:[%s3 + $0x38] sm:$0xff]
  %v216 = vld [vmem:[%s3 + $0x40] sm:$0xff]
  %v217 = vld [vmem:[%s3 + $0x48] sm:$0xff]
  %v218 = vld [vmem:[%s3 + $0x50] sm:$0xff]
  %v219 = vld [vmem:[%s3 + $0x58] sm:$0xff]
  %v220 = vld [vmem:[%s3 + $0x60] sm:$0xff]
  %v221 = vld [vmem:[%s3 + $0x68] sm:$0xff]
  %v222 = vld [vmem:[%s3 + $0x70] sm:$0xff]
  %v223 = vld [vmem:[%s3 + $0x78] sm:$0xff]
  %v224 = vadd.f32 %v146, %v208
  %v225 = vadd.f32 %v149, %v209
  %v226 = vadd.f32 %v154, %v210
  %v227 = vadd.f32 %v157, %v211
  %v228 = vadd.f32 %v162, %v212
  %v229 = vadd.f32 %v165, %v213
  %v230 = vadd.f32 %v170, %v214
  %v231 = vadd.f32 %v173, %v215
  %v232 = vadd.f32 %v178, %v216
  %v233 = vadd.f32 %v181, %v217
  %v234 = vadd.f32 %v186, %v218
  %v235 = vadd.f32 %v189, %v219
  %v236 = vadd.f32 %v194, %v220
  %v237 = vadd.f32 %v197, %v221
  %v238 = vadd.f32 %v202, %v222
  %v239 = vadd.f32 %v205, %v223
  %vm240 = vcmask 261120
  %241 = vst.msk [vmem:[%s4] sm:$0xff] %vm240, %v224
  %242 = vst.msk [vmem:[%s4 + $0x8] sm:$0xff] %vm240, %v225
  %243 = vst.msk [vmem:[%s4 + $0x10] sm:$0xff] %vm240, %v226
  %244 = vst.msk [vmem:[%s4 + $0x18] sm:$0xff] %vm240, %v227
  %245 = vst.msk [vmem:[%s4 + $0x20] sm:$0xff] %vm240, %v228
  %246 = vst.msk [vmem:[%s4 + $0x28] sm:$0xff] %vm240, %v229
  %247 = vst.msk [vmem:[%s4 + $0x30] sm:$0xff] %vm240, %v230
  %248 = vst.msk [vmem:[%s4 + $0x38] sm:$0xff] %vm240, %v231
  %249 = vst.msk [vmem:[%s4 + $0x40] sm:$0xff] %vm240, %v232
  %250 = vst.msk [vmem:[%s4 + $0x48] sm:$0xff] %vm240, %v233
  %251 = vst.msk [vmem:[%s4 + $0x50] sm:$0xff] %vm240, %v234
  %252 = vst.msk [vmem:[%s4 + $0x58] sm:$0xff] %vm240, %v235
  %253 = vst.msk [vmem:[%s4 + $0x60] sm:$0xff] %vm240, %v236
  %254 = vst.msk [vmem:[%s4 + $0x68] sm:$0xff] %vm240, %v237
  %255 = vst.msk [vmem:[%s4 + $0x70] sm:$0xff] %vm240, %v238
  %256 = vst.msk [vmem:[%s4 + $0x78] sm:$0xff] %vm240, %v239
  // Predicated region
  $region18: #{pyramid_features_forward.10} parent=0 // pred_check
    _
  $region19: #{pyramid_features_forward.10} parent=0 // pred_check_branch
    %258 = sbr.rel (0) target = $region21
  $region20: #{pyramid_features_forward.10} parent=0 // pred_region
    _
  $region21: #{pyramid_features_forward.10} parent=0 // pred_fallthru
    _
  // Predicated region
  $region22: #{pyramid_features_forward.10} parent=0 // pred_check
    _
  $region23: #{pyramid_features_forward.10} parent=0 // pred_check_branch
    %260 = sbr.rel (0) target = $region25
  $region24: #{pyramid_features_forward.10} parent=0 // pred_region
    _
  $region25: #{pyramid_features_forward.10} parent=0 // pred_fallthru
    _

// kernel: pyramid_features_forward.12
$region0: #{pyramid_features_forward.12}
  #allocation0 [shape = 'u32[]', space=smem, size = 0x4, offset = 0x4, fixed_abs, tag = 'smem constant byte address 0x4 - core index']
  #allocation1 [shape = 'u32[144,128]{1,0:T(1,128)}', space=vmem, size = 0x12000, scoped, tag = 'internal scratch']
  %s0 = inlined_call_operand.vmem [shape: bf16[512,4], index: 0, kind: input, shape index: {}]
  %s1 = inlined_call_operand.vmem [shape: bf16[4,32], index: 1, kind: input, shape index: {}]
  %s2 = inlined_call_operand.vmem [shape: f32[1,32], index: 2, kind: input, shape index: {}]
  %s3 = inlined_call_operand.vmem [shape: f32[512,32], index: 3, kind: input, shape index: {}]
  %s4 = inlined_call_operand.vmem [shape: f32[512,32], index: 4, kind: output, shape index: {}]
  %s5 = sld [smem:[#allocation0]]
  $region26: #{pyramid_features_forward.12} parent=0
    _
  %s7 = ssub.s32 1, %s5
  %s8 = scalar_select 0, %s7, %s5
  // Predicated region
  $region2: #{pyramid_features_forward.12} parent=0 // pred_check
    _
  $region3: #{pyramid_features_forward.12} parent=0 // pred_check_branch
    %10 = sbr.rel (0) target = $region5
  $region4: #{pyramid_features_forward.12} parent=0 // pred_region
    _
  $region5: #{pyramid_features_forward.12} parent=0 // pred_fallthru
    _
  // Predicated region
  $region6: #{pyramid_features_forward.12} parent=0 // pred_check
    _
  $region7: #{pyramid_features_forward.12} parent=0 // pred_check_branch
    %12 = sbr.rel (0) target = $region9
  $region8: #{pyramid_features_forward.12} parent=0 // pred_region
    _
  $region9: #{pyramid_features_forward.12} parent=0 // pred_fallthru
    _
  // Predicated region
  $region10: #{pyramid_features_forward.12} parent=0 // pred_check
    _
  $region11: #{pyramid_features_forward.12} parent=0 // pred_check_branch
    %14 = sbr.rel (0) target = $region13
  $region12: #{pyramid_features_forward.12} parent=0 // pred_region
    _
  $region13: #{pyramid_features_forward.12} parent=0 // pred_fallthru
    _
  // Predicated region
  $region14: #{pyramid_features_forward.12} parent=0 // pred_check
    _
  $region15: #{pyramid_features_forward.12} parent=0 // pred_check_branch
    %16 = sbr.rel (0) target = $region17
  $region16: #{pyramid_features_forward.12} parent=0 // pred_region
    _
  $region17: #{pyramid_features_forward.12} parent=0 // pred_fallthru
    _
  %v18 = vld [vmem:[%s0] sm:$0xf]
  %v19 = vld [vmem:[%s0 + $0x4] sm:$0xf]
  %v20 = vld [vmem:[%s0 + $0x8] sm:$0xf]
  %v21 = vld [vmem:[%s0 + $0xc] sm:$0xf]
  %v22 = vld [vmem:[%s0 + $0x10] sm:$0xf]
  %v23 = vld [vmem:[%s0 + $0x14] sm:$0xf]
  %v24 = vld [vmem:[%s0 + $0x18] sm:$0xf]
  %v25 = vld [vmem:[%s0 + $0x1c] sm:$0xf]
  %v26 = vld [vmem:[%s0 + $0x20] sm:$0xf]
  %v27 = vld [vmem:[%s0 + $0x24] sm:$0xf]
  %v28 = vld [vmem:[%s0 + $0x28] sm:$0xf]
  %v29 = vld [vmem:[%s0 + $0x2c] sm:$0xf]
  %v30 = vld [vmem:[%s0 + $0x30] sm:$0xf]
  %v31 = vld [vmem:[%s0 + $0x34] sm:$0xf]
  %v32 = vld [vmem:[%s0 + $0x38] sm:$0xf]
  %v33 = vld [vmem:[%s0 + $0x3c] sm:$0xf]
  %v34 = vld [vmem:[%s0 + $0x40] sm:$0xf]
  %v35 = vld [vmem:[%s0 + $0x44] sm:$0xf]
  %v36 = vld [vmem:[%s0 + $0x48] sm:$0xf]
  %v37 = vld [vmem:[%s0 + $0x4c] sm:$0xf]
  %v38 = vld [vmem:[%s0 + $0x50] sm:$0xf]
  %v39 = vld [vmem:[%s0 + $0x54] sm:$0xf]
  %v40 = vld [vmem:[%s0 + $0x58] sm:$0xf]
  %v41 = vld [vmem:[%s0 + $0x5c] sm:$0xf]
  %v42 = vld [vmem:[%s0 + $0x60] sm:$0xf]
  %v43 = vld [vmem:[%s0 + $0x64] sm:$0xf]
  %v44 = vld [vmem:[%s0 + $0x68] sm:$0xf]
  %v45 = vld [vmem:[%s0 + $0x6c] sm:$0xf]
  %v46 = vld [vmem:[%s0 + $0x70] sm:$0xf]
  %v47 = vld [vmem:[%s0 + $0x74] sm:$0xf]
  %v48 = vld [vmem:[%s0 + $0x78] sm:$0xf]
  %v49 = vld [vmem:[%s0 + $0x7c] sm:$0xf]
  %v50 = vld [vmem:[%s0 + $0x80] sm:$0xf]
  %v51 = vld [vmem:[%s0 + $0x84] sm:$0xf]
  %v52 = vld [vmem:[%s0 + $0x88] sm:$0xf]
  %v53 = vld [vmem:[%s0 + $0x8c] sm:$0xf]
  %v54 = vld [vmem:[%s0 + $0x90] sm:$0xf]
  %v55 = vld [vmem:[%s0 + $0x94] sm:$0xf]
  %v56 = vld [vmem:[%s0 + $0x98] sm:$0xf]
  %v57 = vld [vmem:[%s0 + $0x9c] sm:$0xf]
  %v58 = vld [vmem:[%s0 + $0xa0] sm:$0xf]
  %v59 = vld [vmem:[%s0 + $0xa4] sm:$0xf]
  %v60 = vld [vmem:[%s0 + $0xa8] sm:$0xf]
  %v61 = vld [vmem:[%s0 + $0xac] sm:$0xf]
  %v62 = vld [vmem:[%s0 + $0xb0] sm:$0xf]
  %v63 = vld [vmem:[%s0 + $0xb4] sm:$0xf]
  %v64 = vld [vmem:[%s0 + $0xb8] sm:$0xf]
  %v65 = vld [vmem:[%s0 + $0xbc] sm:$0xf]
  %v66 = vld [vmem:[%s0 + $0xc0] sm:$0xf]
  %v67 = vld [vmem:[%s0 + $0xc4] sm:$0xf]
  %v68 = vld [vmem:[%s0 + $0xc8] sm:$0xf]
  %v69 = vld [vmem:[%s0 + $0xcc] sm:$0xf]
  %v70 = vld [vmem:[%s0 + $0xd0] sm:$0xf]
  %v71 = vld [vmem:[%s0 + $0xd4] sm:$0xf]
  %v72 = vld [vmem:[%s0 + $0xd8] sm:$0xf]
  %v73 = vld [vmem:[%s0 + $0xdc] sm:$0xf]
  %v74 = vld [vmem:[%s0 + $0xe0] sm:$0xf]
  %v75 = vld [vmem:[%s0 + $0xe4] sm:$0xf]
  %v76 = vld [vmem:[%s0 + $0xe8] sm:$0xf]
  %v77 = vld [vmem:[%s0 + $0xec] sm:$0xf]
  %v78 = vld [vmem:[%s0 + $0xf0] sm:$0xf]
  %v79 = vld [vmem:[%s0 + $0xf4] sm:$0xf]
  %v80 = vld [vmem:[%s0 + $0xf8] sm:$0xf]
  %v81 = vld [vmem:[%s0 + $0xfc] sm:$0xf]
  %v82 = vld [vmem:[%s1] sm:$0x3]
  %v83 = vld [vmem:[%s2] sm:$0x1]
  %v85 = vlaneseq
  %v86 = vshrl.u32 %v85, 7
  %v87 = vsub.s32 0, %v86
  %v88 = vrot.slane %v83, %v87
  %v154 = vunpack.c.l.b16 %v18
  %v155 = vunpack.c.l.b16 %v19
  %v156 = vunpack.c.l.b16 %v20
  %v157 = vunpack.c.l.b16 %v21
  %v158 = vunpack.c.l.b16 %v22
  %v159 = vunpack.c.l.b16 %v23
  %v160 = vunpack.c.l.b16 %v24
  %v161 = vunpack.c.l.b16 %v25
  %v162 = vunpack.c.l.b16 %v26
  %v163 = vunpack.c.l.b16 %v27
  %v164 = vunpack.c.l.b16 %v28
  %v165 = vunpack.c.l.b16 %v29
  %v166 = vunpack.c.l.b16 %v30
  %v167 = vunpack.c.l.b16 %v31
  %v168 = vunpack.c.l.b16 %v32
  %v169 = vunpack.c.l.b16 %v33
  %v170 = vunpack.c.l.b16 %v34
  %v171 = vunpack.c.l.b16 %v35
  %v172 = vunpack.c.l.b16 %v36
  %v173 = vunpack.c.l.b16 %v37
  %v174 = vunpack.c.l.b16 %v38
  %v175 = vunpack.c.l.b16 %v39
  %v176 = vunpack.c.l.b16 %v40
  %v177 = vunpack.c.l.b16 %v41
  %v178 = vunpack.c.l.b16 %v42
  %v179 = vunpack.c.l.b16 %v43
  %v180 = vunpack.c.l.b16 %v44
  %v181 = vunpack.c.l.b16 %v45
  %v182 = vunpack.c.l.b16 %v46
  %v183 = vunpack.c.l.b16 %v47
  %v184 = vunpack.c.l.b16 %v48
  %v185 = vunpack.c.l.b16 %v49
  %v186 = vunpack.c.l.b16 %v50
  %v187 = vunpack.c.l.b16 %v51
  %v188 = vunpack.c.l.b16 %v52
  %v189 = vunpack.c.l.b16 %v53
  %v190 = vunpack.c.l.b16 %v54
  %v191 = vunpack.c.l.b16 %v55
  %v192 = vunpack.c.l.b16 %v56
  %v193 = vunpack.c.l.b16 %v57
  %v194 = vunpack.c.l.b16 %v58
  %v195 = vunpack.c.l.b16 %v59
  %v196 = vunpack.c.l.b16 %v60
  %v197 = vunpack.c.l.b16 %v61
  %v198 = vunpack.c.l.b16 %v62
  %v199 = vunpack.c.l.b16 %v63
  %v200 = vunpack.c.l.b16 %v64
  %v201 = vunpack.c.l.b16 %v65
  %v202 = vunpack.c.l.b16 %v66
  %v203 = vunpack.c.l.b16 %v67
  %v204 = vunpack.c.l.b16 %v68
  %v205 = vunpack.c.l.b16 %v69
  %v206 = vunpack.c.l.b16 %v70
  %v207 = vunpack.c.l.b16 %v71
  %v208 = vunpack.c.l.b16 %v72
  %v209 = vunpack.c.l.b16 %v73
  %v210 = vunpack.c.l.b16 %v74
  %v211 = vunpack.c.l.b16 %v75
  %v212 = vunpack.c.l.b16 %v76
  %v213 = vunpack.c.l.b16 %v77
  %v214 = vunpack.c.l.b16 %v78
  %v215 = vunpack.c.l.b16 %v79
  %v216 = vunpack.c.l.b16 %v80
  %v217 = vunpack.c.l.b16 %v81
  %v218 = vpack.c.b16 %v155, %v154
  %v219 = vpack.c.b16 %v157, %v156
  %v220 = vpack.c.b16 %v159, %v158
  %v221 = vpack.c.b16 %v161, %v160
  %v222 = vpack.c.b16 %v163, %v162
  %v223 = vpack.c.b16 %v165, %v164
  %v224 = vpack.c.b16 %v167, %v166
  %v225 = vpack.c.b16 %v169, %v168
  %v226 = vpack.c.b16 %v171, %v170
  %v227 = vpack.c.b16 %v173, %v172
  %v228 = vpack.c.b16 %v175, %v174
  %v229 = vpack.c.b16 %v177, %v176
  %v230 = vpack.c.b16 %v179, %v178
  %v231 = vpack.c.b16 %v181, %v180
  %v232 = vpack.c.b16 %v183, %v182
  %v233 = vpack.c.b16 %v185, %v184
  %v234 = vpack.c.b16 %v187, %v186
  %v235 = vpack.c.b16 %v189, %v188
  %v236 = vpack.c.b16 %v191, %v190
  %v237 = vpack.c.b16 %v193, %v192
  %v238 = vpack.c.b16 %v195, %v194
  %v239 = vpack.c.b16 %v197, %v196
  %v240 = vpack.c.b16 %v199, %v198
  %v241 = vpack.c.b16 %v201, %v200
  %v242 = vpack.c.b16 %v203, %v202
  %v243 = vpack.c.b16 %v205, %v204
  %v244 = vpack.c.b16 %v207, %v206
  %v245 = vpack.c.b16 %v209, %v208
  %v246 = vpack.c.b16 %v211, %v210
  %v247 = vpack.c.b16 %v213, %v212
  %v248 = vpack.c.b16 %v215, %v214
  %v249 = vpack.c.b16 %v217, %v216
  %vm250 = vcmask 31744
  %v252 = vsel %vm250, %v218, 0
  %v255 = vsel %vm250, %v219, 0
  %v258 = vsel %vm250, %v220, 0
  %v261 = vsel %vm250, %v221, 0
  %v264 = vsel %vm250, %v222, 0
  %v267 = vsel %vm250, %v223, 0
  %v270 = vsel %vm250, %v224, 0
  %v273 = vsel %vm250, %v225, 0
  %v276 = vsel %vm250, %v226, 0
  %v279 = vsel %vm250, %v227, 0
  %v282 = vsel %vm250, %v228, 0
  %v285 = vsel %vm250, %v229, 0
  %v288 = vsel %vm250, %v230, 0
  %v291 = vsel %vm250, %v231, 0
  %v294 = vsel %vm250, %v232, 0
  %v297 = vsel %vm250, %v233, 0
  %v300 = vsel %vm250, %v234, 0
  %v303 = vsel %vm250, %v235, 0
  %v306 = vsel %vm250, %v236, 0
  %v309 = vsel %vm250, %v237, 0
  %v312 = vsel %vm250, %v238, 0
  %v315 = vsel %vm250, %v239, 0
  %v318 = vsel %vm250, %v240, 0
  %v321 = vsel %vm250, %v241, 0
  %v324 = vsel %vm250, %v242, 0
  %v327 = vsel %vm250, %v243, 0
  %v330 = vsel %vm250, %v244, 0
  %v333 = vsel %vm250, %v245, 0
  %v336 = vsel %vm250, %v246, 0
  %v339 = vsel %vm250, %v247, 0
  %v342 = vsel %vm250, %v248, 0
  %v345 = vsel %vm250, %v249, 0
  %vm347 = vcmask 1041408
  %v349 = vsel %vm347, %v82, 0
  %351 = vmatprep.subr.bf16.mxu0 0
  %352 = vmatpush1.bf16.msra.mxu0 0
  %353 = vmatprep.subr.bf16.mxu0 0
  %354 = vmatpush1.bf16.msra.mxu0 0
  %355 = vmatprep.subr.bf16.mxu0 0
  %356 = vmatpush1.bf16.msra.mxu0 0
  %357 = vmatprep.subr.bf16.mxu0 0
  %358 = vmatpush1.bf16.msra.mxu0 0
  %359 = vmatprep.subr.bf16.mxu0 0
  %360 = vmatpush1.bf16.msra.mxu0 0
  %361 = vmatprep.subr.bf16.mxu0 0
  %362 = vmatpush1.bf16.msra.mxu0 0
  %363 = vmatprep.subr.bf16.mxu0 0
  %364 = vmatpush1.bf16.msra.mxu0 0
  %365 = vmatprep.subr.bf16.mxu0 0
  %366 = vmatpush1.bf16.msra.mxu0 %v349
  %367 = vmatprep.subr.bf16.mxu0 0
  %368 = vmatpush2.bf16.msra.mxu0 0
  %369 = vmatprep.subr.bf16.mxu0 0
  %370 = vmatpush2.bf16.msra.mxu0 0
  %371 = vmatprep.subr.bf16.mxu0 0
  %372 = vmatpush2.bf16.msra.mxu0 0
  %373 = vmatprep.subr.bf16.mxu0 0
  %374 = vmatpush2.bf16.msra.mxu0 0
  %375 = vmatprep.subr.bf16.mxu0 0
  %376 = vmatpush2.bf16.msra.mxu0 0
  %377 = vmatprep.subr.bf16.mxu0 0
  %378 = vmatpush2.bf16.msra.mxu0 0
  %379 = vmatprep.subr.bf16.mxu0 0
  %380 = vmatpush2.bf16.msra.mxu0 0
  %381 = vmatprep.subr.bf16.mxu0 0
  %382 = vmatpush2.bf16.msra.mxu0 0
  %383 = vmatprep.mubr.bf16.mxu0 0
  %384 = vmatmul.mubr.bf16.gmra.mxu0 %v252
  %v385 = vpop.f32.mrf.mxu0
  %v386 = vadd.f32 %v88, %v385
  %v387 = vpop.f32.mrf.mxu0
  %v388 = vpop.f32.mrf.mxu0
  %v389 = vadd.f32 %v88, %v388
  %v390 = vpop.f32.mrf.mxu0
  %391 = vmatprep.mubr.bf16.mxu0 0
  %392 = vmatmul.mubr.bf16.gmra.mxu0 %v255
  %v393 = vpop.f32.mrf.mxu0
  %v394 = vadd.f32 %v88, %v393
  %v395 = vpop.f32.mrf.mxu0
  %v396 = vpop.f32.mrf.mxu0
  %v397 = vadd.f32 %v88, %v396
  %v398 = vpop.f32.mrf.mxu0
  %399 = vmatprep.mubr.bf16.mxu0 0
  %400 = vmatmul.mubr.bf16.gmra.mxu0 %v258
  %v401 = vpop.f32.mrf.mxu0
  %v402 = vadd.f32 %v88, %v401
  %v403 = vpop.f32.mrf.mxu0
  %v404 = vpop.f32.mrf.mxu0
  %v405 = vadd.f32 %v88, %v404
  %v406 = vpop.f32.mrf.mxu0
  %407 = vmatprep.mubr.bf16.mxu0 0
  %408 = vmatmul.mubr.bf16.gmra.mxu0 %v261
  %v409 = vpop.f32.mrf.mxu0
  %v410 = vadd.f32 %v88, %v409
  %v411 = vpop.f32.mrf.mxu0
  %v412 = vpop.f32.mrf.mxu0
  %v413 = vadd.f32 %v88, %v412
  %v414 = vpop.f32.mrf.mxu0
  %415 = vmatprep.mubr.bf16.mxu0 0
  %416 = vmatmul.mubr.bf16.gmra.mxu0 %v264
  %v417 = vpop.f32.mrf.mxu0
  %v418 = vadd.f32 %v88, %v417
  %v419 = vpop.f32.mrf.mxu0
  %v420 = vpop.f32.mrf.mxu0
  %v421 = vadd.f32 %v88, %v420
  %v422 = vpop.f32.mrf.mxu0
  %423 = vmatprep.mubr.bf16.mxu0 0
  %424 = vmatmul.mubr.bf16.gmra.mxu0 %v267
  %v425 = vpop.f32.mrf.mxu0
  %v426 = vadd.f32 %v88, %v425
  %v427 = vpop.f32.mrf.mxu0
  %v428 = vpop.f32.mrf.mxu0
  %v429 = vadd.f32 %v88, %v428
  %v430 = vpop.f32.mrf.mxu0
  %431 = vmatprep.mubr.bf16.mxu0 0
  %432 = vmatmul.mubr.bf16.gmra.mxu0 %v270
  %v433 = vpop.f32.mrf.mxu0
  %v434 = vadd.f32 %v88, %v433
  %v435 = vpop.f32.mrf.mxu0
  %v436 = vpop.f32.mrf.mxu0
  %v437 = vadd.f32 %v88, %v436
  %v438 = vpop.f32.mrf.mxu0
  %439 = vmatprep.mubr.bf16.mxu0 0
  %440 = vmatmul.mubr.bf16.gmra.mxu0 %v273
  %v441 = vpop.f32.mrf.mxu0
  %v442 = vadd.f32 %v88, %v441
  %v443 = vpop.f32.mrf.mxu0
  %v444 = vpop.f32.mrf.mxu0
  %v445 = vadd.f32 %v88, %v444
  %v446 = vpop.f32.mrf.mxu0
  %447 = vmatprep.mubr.bf16.mxu0 0
  %448 = vmatmul.mubr.bf16.gmra.mxu0 %v276
  %v449 = vpop.f32.mrf.mxu0
  %v450 = vadd.f32 %v88, %v449
  %v451 = vpop.f32.mrf.mxu0
  %v452 = vpop.f32.mrf.mxu0
  %v453 = vadd.f32 %v88, %v452
  %v454 = vpop.f32.mrf.mxu0
  %455 = vmatprep.mubr.bf16.mxu0 0
  %456 = vmatmul.mubr.bf16.gmra.mxu0 %v279
  %v457 = vpop.f32.mrf.mxu0
  %v458 = vadd.f32 %v88, %v457
  %v459 = vpop.f32.mrf.mxu0
  %v460 = vpop.f32.mrf.mxu0
  %v461 = vadd.f32 %v88, %v460
  %v462 = vpop.f32.mrf.mxu0
  %463 = vmatprep.mubr.bf16.mxu0 0
  %464 = vmatmul.mubr.bf16.gmra.mxu0 %v282
  %v465 = vpop.f32.mrf.mxu0
  %v466 = vadd.f32 %v88, %v465
  %v467 = vpop.f32.mrf.mxu0
  %v468 = vpop.f32.mrf.mxu0
  %v469 = vadd.f32 %v88, %v468
  %v470 = vpop.f32.mrf.mxu0
  %471 = vmatprep.mubr.bf16.mxu0 0
  %472 = vmatmul.mubr.bf16.gmra.mxu0 %v285
  %v473 = vpop.f32.mrf.mxu0
  %v474 = vadd.f32 %v88, %v473
  %v475 = vpop.f32.mrf.mxu0
  %v476 = vpop.f32.mrf.mxu0
  %v477 = vadd.f32 %v88, %v476
  %v478 = vpop.f32.mrf.mxu0
  %479 = vmatprep.mubr.bf16.mxu0 0
  %480 = vmatmul.mubr.bf16.gmra.mxu0 %v288
  %v481 = vpop.f32.mrf.mxu0
  %v482 = vadd.f32 %v88, %v481
  %v483 = vpop.f32.mrf.mxu0
  %v484 = vpop.f32.mrf.mxu0
  %v485 = vadd.f32 %v88, %v484
  %v486 = vpop.f32.mrf.mxu0
  %487 = vmatprep.mubr.bf16.mxu0 0
  %488 = vmatmul.mubr.bf16.gmra.mxu0 %v291
  %v489 = vpop.f32.mrf.mxu0
  %v490 = vadd.f32 %v88, %v489
  %v491 = vpop.f32.mrf.mxu0
  %v492 = vpop.f32.mrf.mxu0
  %v493 = vadd.f32 %v88, %v492
  %v494 = vpop.f32.mrf.mxu0
  %495 = vmatprep.mubr.bf16.mxu0 0
  %496 = vmatmul.mubr.bf16.gmra.mxu0 %v294
  %v497 = vpop.f32.mrf.mxu0
  %v498 = vadd.f32 %v88, %v497
  %v499 = vpop.f32.mrf.mxu0
  %v500 = vpop.f32.mrf.mxu0
  %v501 = vadd.f32 %v88, %v500
  %v502 = vpop.f32.mrf.mxu0
  %503 = vmatprep.mubr.bf16.mxu0 0
  %504 = vmatmul.mubr.bf16.gmra.mxu0 %v297
  %v505 = vpop.f32.mrf.mxu0
  %v506 = vadd.f32 %v88, %v505
  %v507 = vpop.f32.mrf.mxu0
  %v508 = vpop.f32.mrf.mxu0
  %v509 = vadd.f32 %v88, %v508
  %v510 = vpop.f32.mrf.mxu0
  %511 = vmatprep.mubr.bf16.mxu0 0
  %512 = vmatmul.mubr.bf16.gmra.mxu0 %v300
  %v513 = vpop.f32.mrf.mxu0
  %v514 = vadd.f32 %v88, %v513
  %v515 = vpop.f32.mrf.mxu0
  %v516 = vpop.f32.mrf.mxu0
  %v517 = vadd.f32 %v88, %v516
  %v518 = vpop.f32.mrf.mxu0
  %519 = vmatprep.mubr.bf16.mxu0 0
  %520 = vmatmul.mubr.bf16.gmra.mxu0 %v303
  %v521 = vpop.f32.mrf.mxu0
  %v522 = vadd.f32 %v88, %v521
  %v523 = vpop.f32.mrf.mxu0
  %v524 = vpop.f32.mrf.mxu0
  %v525 = vadd.f32 %v88, %v524
  %v526 = vpop.f32.mrf.mxu0
  %527 = vmatprep.mubr.bf16.mxu0 0
  %528 = vmatmul.mubr.bf16.gmra.mxu0 %v306
  %v529 = vpop.f32.mrf.mxu0
  %v530 = vadd.f32 %v88, %v529
  %v531 = vpop.f32.mrf.mxu0
  %v532 = vpop.f32.mrf.mxu0
  %v533 = vadd.f32 %v88, %v532
  %v534 = vpop.f32.mrf.mxu0
  %535 = vmatprep.mubr.bf16.mxu0 0
  %536 = vmatmul.mubr.bf16.gmra.mxu0 %v309
  %v537 = vpop.f32.mrf.mxu0
  %v538 = vadd.f32 %v88, %v537
  %v539 = vpop.f32.mrf.mxu0
  %v540 = vpop.f32.mrf.mxu0
  %v541 = vadd.f32 %v88, %v540
  %v542 = vpop.f32.mrf.mxu0
  %543 = vmatprep.mubr.bf16.mxu0 0
  %544 = vmatmul.mubr.bf16.gmra.mxu0 %v312
  %v545 = vpop.f32.mrf.mxu0
  %v546 = vadd.f32 %v88, %v545
  %v547 = vpop.f32.mrf.mxu0
  %v548 = vpop.f32.mrf.mxu0
  %v549 = vadd.f32 %v88, %v548
  %v550 = vpop.f32.mrf.mxu0
  %551 = vmatprep.mubr.bf16.mxu0 0
  %552 = vmatmul.mubr.bf16.gmra.mxu0 %v315
  %v553 = vpop.f32.mrf.mxu0
  %v554 = vadd.f32 %v88, %v553
  %v555 = vpop.f32.mrf.mxu0
  %v556 = vpop.f32.mrf.mxu0
  %v557 = vadd.f32 %v88, %v556
  %v558 = vpop.f32.mrf.mxu0
  %559 = vmatprep.mubr.bf16.mxu0 0
  %560 = vmatmul.mubr.bf16.gmra.mxu0 %v318
  %v561 = vpop.f32.mrf.mxu0
  %v562 = vadd.f32 %v88, %v561
  %v563 = vpop.f32.mrf.mxu0
  %v564 = vpop.f32.mrf.mxu0
  %v565 = vadd.f32 %v88, %v564
  %v566 = vpop.f32.mrf.mxu0
  %567 = vmatprep.mubr.bf16.mxu0 0
  %568 = vmatmul.mubr.bf16.gmra.mxu0 %v321
  %v569 = vpop.f32.mrf.mxu0
  %v570 = vadd.f32 %v88, %v569
  %v571 = vpop.f32.mrf.mxu0
  %v572 = vpop.f32.mrf.mxu0
  %v573 = vadd.f32 %v88, %v572
  %v574 = vpop.f32.mrf.mxu0
  %575 = vmatprep.mubr.bf16.mxu0 0
  %576 = vmatmul.mubr.bf16.gmra.mxu0 %v324
  %v577 = vpop.f32.mrf.mxu0
  %v578 = vadd.f32 %v88, %v577
  %v579 = vpop.f32.mrf.mxu0
  %v580 = vpop.f32.mrf.mxu0
  %v581 = vadd.f32 %v88, %v580
  %v582 = vpop.f32.mrf.mxu0
  %583 = vmatprep.mubr.bf16.mxu0 0
  %584 = vmatmul.mubr.bf16.gmra.mxu0 %v327
  %v585 = vpop.f32.mrf.mxu0
  %v586 = vadd.f32 %v88, %v585
  %v587 = vpop.f32.mrf.mxu0
  %v588 = vpop.f32.mrf.mxu0
  %v589 = vadd.f32 %v88, %v588
  %v590 = vpop.f32.mrf.mxu0
  %591 = vmatprep.mubr.bf16.mxu0 0
  %592 = vmatmul.mubr.bf16.gmra.mxu0 %v330
  %v593 = vpop.f32.mrf.mxu0
  %v594 = vadd.f32 %v88, %v593
  %v595 = vpop.f32.mrf.mxu0
  %v596 = vpop.f32.mrf.mxu0
  %v597 = vadd.f32 %v88, %v596
  %v598 = vpop.f32.mrf.mxu0
  %599 = vmatprep.mubr.bf16.mxu0 0
  %600 = vmatmul.mubr.bf16.gmra.mxu0 %v333
  %v601 = vpop.f32.mrf.mxu0
  %v602 = vadd.f32 %v88, %v601
  %v603 = vpop.f32.mrf.mxu0
  %v604 = vpop.f32.mrf.mxu0
  %v605 = vadd.f32 %v88, %v604
  %v606 = vpop.f32.mrf.mxu0
  %607 = vmatprep.mubr.bf16.mxu0 0
  %608 = vmatmul.mubr.bf16.gmra.mxu0 %v336
  %v609 = vpop.f32.mrf.mxu0
  %v610 = vadd.f32 %v88, %v609
  %v611 = vpop.f32.mrf.mxu0
  %v612 = vpop.f32.mrf.mxu0
  %v613 = vadd.f32 %v88, %v612
  %v614 = vpop.f32.mrf.mxu0
  %615 = vmatprep.mubr.bf16.mxu0 0
  %616 = vmatmul.mubr.bf16.gmra.mxu0 %v339
  %v617 = vpop.f32.mrf.mxu0
  %v618 = vadd.f32 %v88, %v617
  %v619 = vpop.f32.mrf.mxu0
  %v620 = vpop.f32.mrf.mxu0
  %v621 = vadd.f32 %v88, %v620
  %v622 = vpop.f32.mrf.mxu0
  %623 = vmatprep.mubr.bf16.mxu0 0
  %624 = vmatmul.mubr.bf16.gmra.mxu0 %v342
  %v625 = vpop.f32.mrf.mxu0
  %v626 = vadd.f32 %v88, %v625
  %v627 = vpop.f32.mrf.mxu0
  %v628 = vpop.f32.mrf.mxu0
  %v629 = vadd.f32 %v88, %v628
  %v630 = vpop.f32.mrf.mxu0
  %631 = vmatprep.mubr.bf16.mxu0 0
  %632 = vmatmul.mubr.bf16.gmra.mxu0 %v345
  %v633 = vpop.f32.mrf.mxu0
  %v634 = vadd.f32 %v88, %v633
  %v635 = vpop.f32.mrf.mxu0
  %v636 = vpop.f32.mrf.mxu0
  %v637 = vadd.f32 %v88, %v636
  %v638 = vpop.f32.mrf.mxu0
  %639 = vdwg.mxu0
  %v640 = vld [vmem:[%s3] sm:$0xff]
  %v641 = vld [vmem:[%s3 + $0x8] sm:$0xff]
  %v642 = vld [vmem:[%s3 + $0x10] sm:$0xff]
  %v643 = vld [vmem:[%s3 + $0x18] sm:$0xff]
  %v644 = vld [vmem:[%s3 + $0x20] sm:$0xff]
  %v645 = vld [vmem:[%s3 + $0x28] sm:$0xff]
  %v646 = vld [vmem:[%s3 + $0x30] sm:$0xff]
  %v647 = vld [vmem:[%s3 + $0x38] sm:$0xff]
  %v648 = vld [vmem:[%s3 + $0x40] sm:$0xff]
  %v649 = vld [vmem:[%s3 + $0x48] sm:$0xff]
  %v650 = vld [vmem:[%s3 + $0x50] sm:$0xff]
  %v651 = vld [vmem:[%s3 + $0x58] sm:$0xff]
  %v652 = vld [vmem:[%s3 + $0x60] sm:$0xff]
  %v653 = vld [vmem:[%s3 + $0x68] sm:$0xff]
  %v654 = vld [vmem:[%s3 + $0x70] sm:$0xff]
  %v655 = vld [vmem:[%s3 + $0x78] sm:$0xff]
  %v656 = vld [vmem:[%s3 + $0x80] sm:$0xff]
  %v657 = vld [vmem:[%s3 + $0x88] sm:$0xff]
  %v658 = vld [vmem:[%s3 + $0x90] sm:$0xff]
  %v659 = vld [vmem:[%s3 + $0x98] sm:$0xff]
  %v660 = vld [vmem:[%s3 + $0xa0] sm:$0xff]
  %v661 = vld [vmem:[%s3 + $0xa8] sm:$0xff]
  %v662 = vld [vmem:[%s3 + $0xb0] sm:$0xff]
  %v663 = vld [vmem:[%s3 + $0xb8] sm:$0xff]
  %v664 = vld [vmem:[%s3 + $0xc0] sm:$0xff]
  %v665 = vld [vmem:[%s3 + $0xc8] sm:$0xff]
  %v666 = vld [vmem:[%s3 + $0xd0] sm:$0xff]
  %v667 = vld [vmem:[%s3 + $0xd8] sm:$0xff]
  %v668 = vld [vmem:[%s3 + $0xe0] sm:$0xff]
  %v669 = vld [vmem:[%s3 + $0xe8] sm:$0xff]
  %v670 = vld [vmem:[%s3 + $0xf0] sm:$0xff]
  %v671 = vld [vmem:[%s3 + $0xf8] sm:$0xff]
  %v672 = vld [vmem:[%s3 + $0x100] sm:$0xff]
  %v673 = vld [vmem:[%s3 + $0x108] sm:$0xff]
  %v674 = vld [vmem:[%s3 + $0x110] sm:$0xff]
  %v675 = vld [vmem:[%s3 + $0x118] sm:$0xff]
  %v676 = vld [vmem:[%s3 + $0x120] sm:$0xff]
  %v677 = vld [vmem:[%s3 + $0x128] sm:$0xff]
  %v678 = vld [vmem:[%s3 + $0x130] sm:$0xff]
  %v679 = vld [vmem:[%s3 + $0x138] sm:$0xff]
  %v680 = vld [vmem:[%s3 + $0x140] sm:$0xff]
  %v681 = vld [vmem:[%s3 + $0x148] sm:$0xff]
  %v682 = vld [vmem:[%s3 + $0x150] sm:$0xff]
  %v683 = vld [vmem:[%s3 + $0x158] sm:$0xff]
  %v684 = vld [vmem:[%s3 + $0x160] sm:$0xff]
  %v685 = vld [vmem:[%s3 + $0x168] sm:$0xff]
  %v686 = vld [vmem:[%s3 + $0x170] sm:$0xff]
  %v687 = vld [vmem:[%s3 + $0x178] sm:$0xff]
  %v688 = vld [vmem:[%s3 + $0x180] sm:$0xff]
  %v689 = vld [vmem:[%s3 + $0x188] sm:$0xff]
  %v690 = vld [vmem:[%s3 + $0x190] sm:$0xff]
  %v691 = vld [vmem:[%s3 + $0x198] sm:$0xff]
  %v692 = vld [vmem:[%s3 + $0x1a0] sm:$0xff]
  %v693 = vld [vmem:[%s3 + $0x1a8] sm:$0xff]
  %v694 = vld [vmem:[%s3 + $0x1b0] sm:$0xff]
  %v695 = vld [vmem:[%s3 + $0x1b8] sm:$0xff]
  %v696 = vld [vmem:[%s3 + $0x1c0] sm:$0xff]
  %v697 = vld [vmem:[%s3 + $0x1c8] sm:$0xff]
  %v698 = vld [vmem:[%s3 + $0x1d0] sm:$0xff]
  %v699 = vld [vmem:[%s3 + $0x1d8] sm:$0xff]
  %v700 = vld [vmem:[%s3 + $0x1e0] sm:$0xff]
  %v701 = vld [vmem:[%s3 + $0x1e8] sm:$0xff]
  %v702 = vld [vmem:[%s3 + $0x1f0] sm:$0xff]
  %v703 = vld [vmem:[%s3 + $0x1f8] sm:$0xff]
  %v704 = vadd.f32 %v386, %v640
  %v705 = vadd.f32 %v389, %v641
  %v706 = vadd.f32 %v394, %v642
  %v707 = vadd.f32 %v397, %v643
  %v708 = vadd.f32 %v402, %v644
  %v709 = vadd.f32 %v405, %v645
  %v710 = vadd.f32 %v410, %v646
  %v711 = vadd.f32 %v413, %v647
  %v712 = vadd.f32 %v418, %v648
  %v713 = vadd.f32 %v421, %v649
  %v714 = vadd.f32 %v426, %v650
  %v715 = vadd.f32 %v429, %v651
  %v716 = vadd.f32 %v434, %v652
  %v717 = vadd.f32 %v437, %v653
  %v718 = vadd.f32 %v442, %v654
  %v719 = vadd.f32 %v445, %v655
  %v720 = vadd.f32 %v450, %v656
  %v721 = vadd.f32 %v453, %v657
  %v722 = vadd.f32 %v458, %v658
  %v723 = vadd.f32 %v461, %v659
  %v724 = vadd.f32 %v466, %v660
  %v725 = vadd.f32 %v469, %v661
  %v726 = vadd.f32 %v474, %v662
  %v727 = vadd.f32 %v477, %v663
  %v728 = vadd.f32 %v482, %v664
  %v729 = vadd.f32 %v485, %v665
  %v730 = vadd.f32 %v490, %v666
  %v731 = vadd.f32 %v493, %v667
  %v732 = vadd.f32 %v498, %v668
  %v733 = vadd.f32 %v501, %v669
  %v734 = vadd.f32 %v506, %v670
  %v735 = vadd.f32 %v509, %v671
  %v736 = vadd.f32 %v514, %v672
  %v737 = vadd.f32 %v517, %v673
  %v738 = vadd.f32 %v522, %v674
  %v739 = vadd.f32 %v525, %v675
  %v740 = vadd.f32 %v530, %v676
  %v741 = vadd.f32 %v533, %v677
  %v742 = vadd.f32 %v538, %v678
  %v743 = vadd.f32 %v541, %v679
  %v744 = vadd.f32 %v546, %v680
  %v745 = vadd.f32 %v549, %v681
  %v746 = vadd.f32 %v554, %v682
  %v747 = vadd.f32 %v557, %v683
  %v748 = vadd.f32 %v562, %v684
  %v749 = vadd.f32 %v565, %v685
  %v750 = vadd.f32 %v570, %v686
  %v751 = vadd.f32 %v573, %v687
  %v752 = vadd.f32 %v578, %v688
  %v753 = vadd.f32 %v581, %v689
  %v754 = vadd.f32 %v586, %v690
  %v755 = vadd.f32 %v589, %v691
  %v756 = vadd.f32 %v594, %v692
  %v757 = vadd.f32 %v597, %v693
  %v758 = vadd.f32 %v602, %v694
  %v759 = vadd.f32 %v605, %v695
  %v760 = vadd.f32 %v610, %v696
  %v761 = vadd.f32 %v613, %v697
  %v762 = vadd.f32 %v618, %v698
  %v763 = vadd.f32 %v621, %v699
  %v764 = vadd.f32 %v626, %v700
  %v765 = vadd.f32 %v629, %v701
  %v766 = vadd.f32 %v634, %v702
  %v767 = vadd.f32 %v637, %v703
  %vm768 = vcmask 261120
  %769 = vst.msk [vmem:[%s4] sm:$0xff] %vm768, %v704
  %770 = vst.msk [vmem:[%s4 + $0x8] sm:$0xff] %vm768, %v705
  %771 = vst.msk [vmem:[%s4 + $0x10] sm:$0xff] %vm768, %v706
  %772 = vst.msk [vmem:[%s4 + $0x18] sm:$0xff] %vm768, %v707
  %773 = vst.msk [vmem:[%s4 + $0x20] sm:$0xff] %vm768, %v708
  %774 = vst.msk [vmem:[%s4 + $0x28] sm:$0xff] %vm768, %v709
  %775 = vst.msk [vmem:[%s4 + $0x30] sm:$0xff] %vm768, %v710
  %776 = vst.msk [vmem:[%s4 + $0x38] sm:$0xff] %vm768, %v711
  %777 = vst.msk [vmem:[%s4 + $0x40] sm:$0xff] %vm768, %v712
  %778 = vst.msk [vmem:[%s4 + $0x48] sm:$0xff] %vm768, %v713
  %779 = vst.msk [vmem:[%s4 + $0x50] sm:$0xff] %vm768, %v714
  %780 = vst.msk [vmem:[%s4 + $0x58] sm:$0xff] %vm768, %v715
  %781 = vst.msk [vmem:[%s4 + $0x60] sm:$0xff] %vm768, %v716
  %782 = vst.msk [vmem:[%s4 + $0x68] sm:$0xff] %vm768, %v717
  %783 = vst.msk [vmem:[%s4 + $0x70] sm:$0xff] %vm768, %v718
  %784 = vst.msk [vmem:[%s4 + $0x78] sm:$0xff] %vm768, %v719
  %785 = vst.msk [vmem:[%s4 + $0x80] sm:$0xff] %vm768, %v720
  %786 = vst.msk [vmem:[%s4 + $0x88] sm:$0xff] %vm768, %v721
  %787 = vst.msk [vmem:[%s4 + $0x90] sm:$0xff] %vm768, %v722
  %788 = vst.msk [vmem:[%s4 + $0x98] sm:$0xff] %vm768, %v723
  %789 = vst.msk [vmem:[%s4 + $0xa0] sm:$0xff] %vm768, %v724
  %790 = vst.msk [vmem:[%s4 + $0xa8] sm:$0xff] %vm768, %v725
  %791 = vst.msk [vmem:[%s4 + $0xb0] sm:$0xff] %vm768, %v726
  %792 = vst.msk [vmem:[%s4 + $0xb8] sm:$0xff] %vm768, %v727
  %793 = vst.msk [vmem:[%s4 + $0xc0] sm:$0xff] %vm768, %v728
  %794 = vst.msk [vmem:[%s4 + $0xc8] sm:$0xff] %vm768, %v729
  %795 = vst.msk [vmem:[%s4 + $0xd0] sm:$0xff] %vm768, %v730
  %796 = vst.msk [vmem:[%s4 + $0xd8] sm:$0xff] %vm768, %v731
  %797 = vst.msk [vmem:[%s4 + $0xe0] sm:$0xff] %vm768, %v732
  %798 = vst.msk [vmem:[%s4 + $0xe8] sm:$0xff] %vm768, %v733
  %799 = vst.msk [vmem:[%s4 + $0xf0] sm:$0xff] %vm768, %v734
  %800 = vst.msk [vmem:[%s4 + $0xf8] sm:$0xff] %vm768, %v735
  %801 = vst.msk [vmem:[%s4 + $0x100] sm:$0xff] %vm768, %v736
  %802 = vst.msk [vmem:[%s4 + $0x108] sm:$0xff] %vm768, %v737
  %803 = vst.msk [vmem:[%s4 + $0x110] sm:$0xff] %vm768, %v738
  %804 = vst.msk [vmem:[%s4 + $0x118] sm:$0xff] %vm768, %v739
  %805 = vst.msk [vmem:[%s4 + $0x120] sm:$0xff] %vm768, %v740
  %806 = vst.msk [vmem:[%s4 + $0x128] sm:$0xff] %vm768, %v741
  %807 = vst.msk [vmem:[%s4 + $0x130] sm:$0xff] %vm768, %v742
  %808 = vst.msk [vmem:[%s4 + $0x138] sm:$0xff] %vm768, %v743
  %809 = vst.msk [vmem:[%s4 + $0x140] sm:$0xff] %vm768, %v744
  %810 = vst.msk [vmem:[%s4 + $0x148] sm:$0xff] %vm768, %v745
  %811 = vst.msk [vmem:[%s4 + $0x150] sm:$0xff] %vm768, %v746
  %812 = vst.msk [vmem:[%s4 + $0x158] sm:$0xff] %vm768, %v747
  %813 = vst.msk [vmem:[%s4 + $0x160] sm:$0xff] %vm768, %v748
  %814 = vst.msk [vmem:[%s4 + $0x168] sm:$0xff] %vm768, %v749
  %815 = vst.msk [vmem:[%s4 + $0x170] sm:$0xff] %vm768, %v750
  %816 = vst.msk [vmem:[%s4 + $0x178] sm:$0xff] %vm768, %v751
  %817 = vst.msk [vmem:[%s4 + $0x180] sm:$0xff] %vm768, %v752
  %818 = vst.msk [vmem:[%s4 + $0x188] sm:$0xff] %vm768, %v753
  %819 = vst.msk [vmem:[%s4 + $0x190] sm:$0xff] %vm768, %v754
  %820 = vst.msk [vmem:[%s4 + $0x198] sm:$0xff] %vm768, %v755
  %821 = vst.msk [vmem:[%s4 + $0x1a0] sm:$0xff] %vm768, %v756
  %822 = vst.msk [vmem:[%s4 + $0x1a8] sm:$0xff] %vm768, %v757
  %823 = vst.msk [vmem:[%s4 + $0x1b0] sm:$0xff] %vm768, %v758
  %824 = vst.msk [vmem:[%s4 + $0x1b8] sm:$0xff] %vm768, %v759
  %825 = vst.msk [vmem:[%s4 + $0x1c0] sm:$0xff] %vm768, %v760
  %826 = vst.msk [vmem:[%s4 + $0x1c8] sm:$0xff] %vm768, %v761
  %827 = vst.msk [vmem:[%s4 + $0x1d0] sm:$0xff] %vm768, %v762
  %828 = vst.msk [vmem:[%s4 + $0x1d8] sm:$0xff] %vm768, %v763
  %829 = vst.msk [vmem:[%s4 + $0x1e0] sm:$0xff] %vm768, %v764
  %830 = vst.msk [vmem:[%s4 + $0x1e8] sm:$0xff] %vm768, %v765
  %831 = vst.msk [vmem:[%s4 + $0x1f0] sm:$0xff] %vm768, %v766
  %832 = vst.msk [vmem:[%s4 + $0x1f8] sm:$0xff] %vm768, %v767
  // Predicated region
  $region18: #{pyramid_features_forward.12} parent=0 // pred_check
    _
  $region19: #{pyramid_features_forward.12} parent=0 // pred_check_branch
    %834 = sbr.rel (0) target = $region21
  $region20: #{pyramid_features_forward.12} parent=0 // pred_region
    _
  $region21: #{pyramid_features_forward.12} parent=0 // pred_fallthru
    _
  // Predicated region
  $region22: #{pyramid_features_forward.12} parent=0 // pred_check
    _
  $region23: #{pyramid_features_forward.12} parent=0 // pred_check_branch
    %836 = sbr.rel (0) target = $region25
  $region24: #{pyramid_features_forward.12} parent=0 // pred_region
    _
  $region25: #{pyramid_features_forward.12} parent=0 // pred_fallthru
    _

// kernel: pyramid_features_forward.13
$region0: #{pyramid_features_forward.13}
  #allocation0 [shape = 'u32[]', space=smem, size = 0x4, offset = 0x4, fixed_abs, tag = 'smem constant byte address 0x4 - core index']
  #allocation1 [shape = 'u32[144,128]{1,0:T(1,128)}', space=vmem, size = 0x12000, scoped, tag = 'internal scratch']
  %s0 = inlined_call_operand.vmem [shape: bf16[512,288], index: 0, kind: input, shape index: {}]
  %s1 = inlined_call_operand.vmem [shape: bf16[288,32], index: 1, kind: input, shape index: {}]
  %s2 = inlined_call_operand.vmem [shape: f32[1,32], index: 2, kind: input, shape index: {}]
  %s3 = inlined_call_operand.hbm [shape: f32[512,32], index: 3, kind: output, shape index: {}]
  %s4 = sld [smem:[#allocation0]]
  $region22: #{pyramid_features_forward.13} parent=0
    _
  %s6 = ssub.s32 1, %s4
  %s7 = scalar_select 0, %s6, %s4
  $region1: #{pyramid_features_forward.13} parent=0
    #allocation2 [shape = 'u8[262144]{0}', space=vmem, size = 0x40000, scoped, tag = 'output window, operand 0, single buffered']
    #allocation3 [shape = 's32[1]{0}', space=sflag, size = 0x4, scoped, tag = 'scoped memory for pyramid_features_forward.13']
    %8 = vsyncpa [#allocation3], 0
    // Predicated region
    $region2: #{pyramid_features_forward.13} parent=1 // pred_check
      _
    $region3: #{pyramid_features_forward.13} parent=1 // pred_check_branch
      %10 = sbr.rel (0) target = $region5
    $region4: #{pyramid_features_forward.13} parent=1 // pred_region
      _
    $region5: #{pyramid_features_forward.13} parent=1 // pred_fallthru
      _
    // Predicated region
    $region6: #{pyramid_features_forward.13} parent=1 // pred_check
      _
    $region7: #{pyramid_features_forward.13} parent=1 // pred_check_branch
      %12 = sbr.rel (0) target = $region9
    $region8: #{pyramid_features_forward.13} parent=1 // pred_region
      _
    $region9: #{pyramid_features_forward.13} parent=1 // pred_fallthru
      _
    // Predicated region
    $region10: #{pyramid_features_forward.13} parent=1 // pred_check
      _
    $region11: #{pyramid_features_forward.13} parent=1 // pred_check_branch
      %14 = sbr.rel (0) target = $region13
    $region12: #{pyramid_features_forward.13} parent=1 // pred_region
      _
    $region13: #{pyramid_features_forward.13} parent=1 // pred_fallthru
      _
    %v16 = vld [vmem:[%s0] sm:$0xff]
    %v17 = vld [vmem:[%s0 + $0x8] sm:$0xf]
    %v18 = vld [vmem:[%s0 + $0xc] sm:$0xff]
    %v19 = vld [vmem:[%s0 + $0x14] sm:$0xf]
    %v20 = vld [vmem:[%s0 + $0x18] sm:$0xff]
    %v21 = vld [vmem:[%s0 + $0x20] sm:$0xf]
    %v22 = vld [vmem:[%s0 + $0x24] sm:$0xff]
    %v23 = vld [vmem:[%s0 + $0x2c] sm:$0xf]
    %v24 = vld [vmem:[%s0 + $0x30] sm:$0xff]
    %v25 = vld [vmem:[%s0 + $0x38] sm:$0xf]
    %v26 = vld [vmem:[%s0 + $0x3c] sm:$0xff]
    %v27 = vld [vmem:[%s0 + $0x44] sm:$0xf]
    %v28 = vld [vmem:[%s0 + $0x48] sm:$0xff]
    %v29 = vld [vmem:[%s0 + $0x50] sm:$0xf]
    %v30 = vld [vmem:[%s0 + $0x54] sm:$0xff]
    %v31 = vld [vmem:[%s0 + $0x5c] sm:$0xf]
    %v32 = vld [vmem:[%s0 + $0x60] sm:$0xff]
    %v33 = vld [vmem:[%s0 + $0x68] sm:$0xf]
    %v34 = vld [vmem:[%s0 + $0x6c] sm:$0xff]
    %v35 = vld [vmem:[%s0 + $0x74] sm:$0xf]
    %v36 = vld [vmem:[%s0 + $0x78] sm:$0xff]
    %v37 = vld [vmem:[%s0 + $0x80] sm:$0xf]
    %v38 = vld [vmem:[%s0 + $0x84] sm:$0xff]
    %v39 = vld [vmem:[%s0 + $0x8c] sm:$0xf]
    %v40 = vld [vmem:[%s0 + $0x90] sm:$0xff]
    %v41 = vld [vmem:[%s0 + $0x98] sm:$0xf]
    %v42 = vld [vmem:[%s0 + $0x9c] sm:$0xff]
    %v43 = vld [vmem:[%s0 + $0xa4] sm:$0xf]
    %v44 = vld [vmem:[%s0 + $0xa8] sm:$0xff]
    %v45 = vld [vmem:[%s0 + $0xb0] sm:$0xf]
    %v46 = vld [vmem:[%s0 + $0xb4] sm:$0xff]
    %v47 = vld [vmem:[%s0 + $0xbc] sm:$0xf]
    %v48 = vld [vmem:[%s0 + $0xc0] sm:$0xff]
    %v49 = vld [vmem:[%s0 + $0xc8] sm:$0xf]
    %v50 = vld [vmem:[%s0 + $0xcc] sm:$0xff]
    %v51 = vld [vmem:[%s0 + $0xd4] sm:$0xf]
    %v52 = vld [vmem:[%s0 + $0xd8] sm:$0xff]
    %v53 = vld [vmem:[%s0 + $0xe0] sm:$0xf]
    %v54 = vld [vmem:[%s0 + $0xe4] sm:$0xff]
    %v55 = vld [vmem:[%s0 + $0xec] sm:$0xf]
    %v56 = vld [vmem:[%s0 + $0xf0] sm:$0xff]
    %v57 = vld [vmem:[%s0 + $0xf8] sm:$0xf]
    %v58 = vld [vmem:[%s0 + $0xfc] sm:$0xff]
    %v59 = vld [vmem:[%s0 + $0x104] sm:$0xf]
    %v60 = vld [vmem:[%s0 + $0x108] sm:$0xff]
    %v61 = vld [vmem:[%s0 + $0x110] sm:$0xf]
    %v62 = vld [vmem:[%s0 + $0x114] sm:$0xff]
    %v63 = vld [vmem:[%s0 + $0x11c] sm:$0xf]
    %v64 = vld [vmem:[%s0 + $0x120] sm:$0xff]
    %v65 = vld [vmem:[%s0 + $0x128] sm:$0xf]
    %v66 = vld [vmem:[%s0 + $0x12c] sm:$0xff]
    %v67 = vld [vmem:[%s0 + $0x134] sm:$0xf]
    %v68 = vld [vmem:[%s0 + $0x138] sm:$0xff]
    %v69 = vld [vmem:[%s0 + $0x140] sm:$0xf]
    %v70 = vld [vmem:[%s0 + $0x144] sm:$0xff]
    %v71 = vld [vmem:[%s0 + $0x14c] sm:$0xf]
    %v72 = vld [vmem:[%s0 + $0x150] sm:$0xff]
    %v73 = vld [vmem:[%s0 + $0x158] sm:$0xf]
    %v74 = vld [vmem:[%s0 + $0x15c] sm:$0xff]
    %v75 = vld [vmem:[%s0 + $0x164] sm:$0xf]
    %v76 = vld [vmem:[%s0 + $0x168] sm:$0xff]
    %v77 = vld [vmem:[%s0 + $0x170] sm:$0xf]
    %v78 = vld [vmem:[%s0 + $0x174] sm:$0xff]
    %v79 = vld [vmem:[%s0 + $0x17c] sm:$0xf]
    %v80 = vld [vmem:[%s0 + $0x180] sm:$0xff]
    %v81 = vld [vmem:[%s0 + $0x188] sm:$0xf]
    %v82 = vld [vmem:[%s0 + $0x18c] sm:$0xff]
    %v83 = vld [vmem:[%s0 + $0x194] sm:$0xf]
    %v84 = vld [vmem:[%s0 + $0x198] sm:$0xff]
    %v85 = vld [vmem:[%s0 + $0x1a0] sm:$0xf]
    %v86 = vld [vmem:[%s0 + $0x1a4] sm:$0xff]
    %v87 = vld [vmem:[%s0 + $0x1ac] sm:$0xf]
    %v88 = vld [vmem:[%s0 + $0x1b0] sm:$0xff]
    %v89 = vld [vmem:[%s0 + $0x1b8] sm:$0xf]
    %v90 = vld [vmem:[%s0 + $0x1bc] sm:$0xff]
    %v91 = vld [vmem:[%s0 + $0x1c4] sm:$0xf]
    %v92 = vld [vmem:[%s0 + $0x1c8] sm:$0xff]
    %v93 = vld [vmem:[%s0 + $0x1d0] sm:$0xf]
    %v94 = vld [vmem:[%s0 + $0x1d4] sm:$0xff]
    %v95 = vld [vmem:[%s0 + $0x1dc] sm:$0xf]
    %v96 = vld [vmem:[%s0 + $0x1e0] sm:$0xff]
    %v97 = vld [vmem:[%s0 + $0x1e8] sm:$0xf]
    %v98 = vld [vmem:[%s0 + $0x1ec] sm:$0xff]
    %v99 = vld [vmem:[%s0 + $0x1f4] sm:$0xf]
    %v100 = vld [vmem:[%s0 + $0x1f8] sm:$0xff]
    %v101 = vld [vmem:[%s0 + $0x200] sm:$0xf]
    %v102 = vld [vmem:[%s0 + $0x204] sm:$0xff]
    %v103 = vld [vmem:[%s0 + $0x20c] sm:$0xf]
    %v104 = vld [vmem:[%s0 + $0x210] sm:$0xff]
    %v105 = vld [vmem:[%s0 + $0x218] sm:$0xf]
    %v106 = vld [vmem:[%s0 + $0x21c] sm:$0xff]
    %v107 = vld [vmem:[%s0 + $0x224] sm:$0xf]
    %v108 = vld [vmem:[%s0 + $0x228] sm:$0xff]
    %v109 = vld [vmem:[%s0 + $0x230] sm:$0xf]
    %v110 = vld [vmem:[%s0 + $0x234] sm:$0xff]
    %v111 = vld [vmem:[%s0 + $0x23c] sm:$0xf]
    %v112 = vld [vmem:[%s0 + $0x240] sm:$0xff]
    %v113 = vld [vmem:[%s0 + $0x248] sm:$0xf]
    %v114 = vld [vmem:[%s0 + $0x24c] sm:$0xff]
    %v115 = vld [vmem:[%s0 + $0x254] sm:$0xf]
    %v116 = vld [vmem:[%s0 + $0x258] sm:$0xff]
    %v117 = vld [vmem:[%s0 + $0x260] sm:$0xf]
    %v118 = vld [vmem:[%s0 + $0x264] sm:$0xff]
    %v119 = vld [vmem:[%s0 + $0x26c] sm:$0xf]
    %v120 = vld [vmem:[%s0 + $0x270] sm:$0xff]
    %v121 = vld [vmem:[%s0 + $0x278] sm:$0xf]
    %v122 = vld [vmem:[%s0 + $0x27c] sm:$0xff]
    %v123 = vld [vmem:[%s0 + $0x284] sm:$0xf]
    %v124 = vld [vmem:[%s0 + $0x288] sm:$0xff]
    %v125 = vld [vmem:[%s0 + $0x290] sm:$0xf]
    %v126 = vld [vmem:[%s0 + $0x294] sm:$0xff]
    %v127 = vld [vmem:[%s0 + $0x29c] sm:$0xf]
    %v128 = vld [vmem:[%s0 + $0x2a0] sm:$0xff]
    %v129 = vld [vmem:[%s0 + $0x2a8] sm:$0xf]
    %v130 = vld [vmem:[%s0 + $0x2ac] sm:$0xff]
    %v131 = vld [vmem:[%s0 + $0x2b4] sm:$0xf]
    %v132 = vld [vmem:[%s0 + $0x2b8] sm:$0xff]
    %v133 = vld [vmem:[%s0 + $0x2c0] sm:$0xf]
    %v134 = vld [vmem:[%s0 + $0x2c4] sm:$0xff]
    %v135 = vld [vmem:[%s0 + $0x2cc] sm:$0xf]
    %v136 = vld [vmem:[%s0 + $0x2d0] sm:$0xff]
    %v137 = vld [vmem:[%s0 + $0x2d8] sm:$0xf]
    %v138 = vld [vmem:[%s0 + $0x2dc] sm:$0xff]
    %v139 = vld [vmem:[%s0 + $0x2e4] sm:$0xf]
    %v140 = vld [vmem:[%s0 + $0x2e8] sm:$0xff]
    %v141 = vld [vmem:[%s0 + $0x2f0] sm:$0xf]
    %v142 = vld [vmem:[%s0 + $0x2f4] sm:$0xff]
    %v143 = vld [vmem:[%s0 + $0x2fc] sm:$0xf]
    %v144 = vld [vmem:[%s1] sm:$0xf]
    %v145 = vld [vmem:[%s1 + $0x4] sm:$0xf]
    %v146 = vld [vmem:[%s1 + $0x8] sm:$0xf]
    %v147 = vld [vmem:[%s1 + $0xc] sm:$0xf]
    %v148 = vld [vmem:[%s1 + $0x10] sm:$0xf]
    %v149 = vld [vmem:[%s1 + $0x14] sm:$0xf]
    %v150 = vld [vmem:[%s1 + $0x18] sm:$0xf]
    %v151 = vld [vmem:[%s1 + $0x1c] sm:$0xf]
    %v152 = vld [vmem:[%s1 + $0x20] sm:$0xf]
    %v153 = vld [vmem:[%s1 + $0x24] sm:$0xf]
    %v154 = vld [vmem:[%s1 + $0x28] sm:$0xf]
    %v155 = vld [vmem:[%s1 + $0x2c] sm:$0xf]
    %v156 = vld [vmem:[%s1 + $0x30] sm:$0xf]
    %v157 = vld [vmem:[%s1 + $0x34] sm:$0xf]
    %v158 = vld [vmem:[%s1 + $0x38] sm:$0xf]
    %v159 = vld [vmem:[%s1 + $0x3c] sm:$0xf]
    %v160 = vld [vmem:[%s1 + $0x40] sm:$0xf]
    %v161 = vld [vmem:[%s1 + $0x44] sm:$0xf]
    %v162 = vld [vmem:[%s1 + $0x48] sm:$0xf]
    %v163 = vld [vmem:[%s1 + $0x4c] sm:$0xf]
    %v164 = vld [vmem:[%s1 + $0x50] sm:$0xf]
    %v165 = vld [vmem:[%s1 + $0x54] sm:$0xf]
    %v166 = vld [vmem:[%s1 + $0x58] sm:$0xf]
    %v167 = vld [vmem:[%s1 + $0x5c] sm:$0xf]
    %v168 = vld [vmem:[%s1 + $0x60] sm:$0xf]
    %v169 = vld [vmem:[%s1 + $0x64] sm:$0xf]
    %v170 = vld [vmem:[%s1 + $0x68] sm:$0xf]
    %v171 = vld [vmem:[%s1 + $0x6c] sm:$0xf]
    %v172 = vld [vmem:[%s1 + $0x70] sm:$0xf]
    %v173 = vld [vmem:[%s1 + $0x74] sm:$0xf]
    %v174 = vld [vmem:[%s1 + $0x78] sm:$0xf]
    %v175 = vld [vmem:[%s1 + $0x7c] sm:$0xf]
    %v176 = vld [vmem:[%s1 + $0x80] sm:$0xf]
    %v177 = vld [vmem:[%s1 + $0x84] sm:$0xf]
    %v178 = vld [vmem:[%s1 + $0x88] sm:$0xf]
    %v179 = vld [vmem:[%s1 + $0x8c] sm:$0xf]
    %v180 = vld [vmem:[%s2] sm:$0x1]
    %v182 = vlaneseq
    %v183 = vshrl.u32 %v182, 7
    %v184 = vsub.s32 0, %v183
    %v185 = vrot.slane %v180, %v184
    %v315 = vunpack.c.l.b16 %v16
    %v316 = vunpack.c.h.b16 %v16
    %v317 = vunpack.c.l.b16 %v17
    %v318 = vunpack.c.l.b16 %v18
    %v319 = vunpack.c.h.b16 %v18
    %v320 = vunpack.c.l.b16 %v19
    %v321 = vunpack.c.l.b16 %v20
    %v322 = vunpack.c.h.b16 %v20
    %v323 = vunpack.c.l.b16 %v21
    %v324 = vunpack.c.l.b16 %v22
    %v325 = vunpack.c.h.b16 %v22
    %v326 = vunpack.c.l.b16 %v23
    %v327 = vunpack.c.l.b16 %v24
    %v328 = vunpack.c.h.b16 %v24
    %v329 = vunpack.c.l.b16 %v25
    %v330 = vunpack.c.l.b16 %v26
    %v331 = vunpack.c.h.b16 %v26
    %v332 = vunpack.c.l.b16 %v27
    %v333 = vunpack.c.l.b16 %v28
    %v334 = vunpack.c.h.b16 %v28
    %v335 = vunpack.c.l.b16 %v29
    %v336 = vunpack.c.l.b16 %v30
    %v337 = vunpack.c.h.b16 %v30
    %v338 = vunpack.c.l.b16 %v31
    %v339 = vunpack.c.l.b16 %v32
    %v340 = vunpack.c.h.b16 %v32
    %v341 = vunpack.c.l.b16 %v33
    %v342 = vunpack.c.l.b16 %v34
    %v343 = vunpack.c.h.b16 %v34
    %v344 = vunpack.c.l.b16 %v35
    %v345 = vunpack.c.l.b16 %v36
    %v346 = vunpack.c.h.b16 %v36
    %v347 = vunpack.c.l.b16 %v37
    %v348 = vunpack.c.l.b16 %v38
    %v349 = vunpack.c.h.b16 %v38
    %v350 = vunpack.c.l.b16 %v39
    %v351 = vunpack.c.l.b16 %v40
    %v352 = vunpack.c.h.b16 %v40
    %v353 = vunpack.c.l.b16 %v41
    %v354 = vunpack.c.l.b16 %v42
    %v355 = vunpack.c.h.b16 %v42
    %v356 = vunpack.c.l.b16 %v43
    %v357 = vunpack.c.l.b16 %v44
    %v358 = vunpack.c.h.b16 %v44
    %v359 = vunpack.c.l.b16 %v45
    %v360 = vunpack.c.l.b16 %v46
    %v361 = vunpack.c.h.b16 %v46
    %v362 = vunpack.c.l.b16 %v47
    %v363 = vunpack.c.l.b16 %v48
    %v364 = vunpack.c.h.b16 %v48
    %v365 = vunpack.c.l.b16 %v49
    %v366 = vunpack.c.l.b16 %v50
    %v367 = vunpack.c.h.b16 %v50
    %v368 = vunpack.c.l.b16 %v51
    %v369 = vunpack.c.l.b16 %v52
    %v370 = vunpack.c.h.b16 %v52
    %v371 = vunpack.c.l.b16 %v53
    %v372 = vunpack.c.l.b16 %v54
    %v373 = vunpack.c.h.b16 %v54
    %v374 = vunpack.c.l.b16 %v55
    %v375 = vunpack.c.l.b16 %v56
    %v376 = vunpack.c.h.b16 %v56
    %v377 = vunpack.c.l.b16 %v57
    %v378 = vunpack.c.l.b16 %v58
    %v379 = vunpack.c.h.b16 %v58
    %v380 = vunpack.c.l.b16 %v59
    %v381 = vunpack.c.l.b16 %v60
    %v382 = vunpack.c.h.b16 %v60
    %v383 = vunpack.c.l.b16 %v61
    %v384 = vunpack.c.l.b16 %v62
    %v385 = vunpack.c.h.b16 %v62
    %v386 = vunpack.c.l.b16 %v63
    %v387 = vunpack.c.l.b16 %v64
    %v388 = vunpack.c.h.b16 %v64
    %v389 = vunpack.c.l.b16 %v65
    %v390 = vunpack.c.l.b16 %v66
    %v391 = vunpack.c.h.b16 %v66
    %v392 = vunpack.c.l.b16 %v67
    %v393 = vunpack.c.l.b16 %v68
    %v394 = vunpack.c.h.b16 %v68
    %v395 = vunpack.c.l.b16 %v69
    %v396 = vunpack.c.l.b16 %v70
    %v397 = vunpack.c.h.b16 %v70
    %v398 = vunpack.c.l.b16 %v71
    %v399 = vunpack.c.l.b16 %v72
    %v400 = vunpack.c.h.b16 %v72
    %v401 = vunpack.c.l.b16 %v73
    %v402 = vunpack.c.l.b16 %v74
    %v403 = vunpack.c.h.b16 %v74
    %v404 = vunpack.c.l.b16 %v75
    %v405 = vunpack.c.l.b16 %v76
    %v406 = vunpack.c.h.b16 %v76
    %v407 = vunpack.c.l.b16 %v77
    %v408 = vunpack.c.l.b16 %v78
    %v409 = vunpack.c.h.b16 %v78
    %v410 = vunpack.c.l.b16 %v79
    %v411 = vunpack.c.l.b16 %v80
    %v412 = vunpack.c.h.b16 %v80
    %v413 = vunpack.c.l.b16 %v81
    %v414 = vunpack.c.l.b16 %v82
    %v415 = vunpack.c.h.b16 %v82
    %v416 = vunpack.c.l.b16 %v83
    %v417 = vunpack.c.l.b16 %v84
    %v418 = vunpack.c.h.b16 %v84
    %v419 = vunpack.c.l.b16 %v85
    %v420 = vunpack.c.l.b16 %v86
    %v421 = vunpack.c.h.b16 %v86
    %v422 = vunpack.c.l.b16 %v87
    %v423 = vunpack.c.l.b16 %v88
    %v424 = vunpack.c.h.b16 %v88
    %v425 = vunpack.c.l.b16 %v89
    %v426 = vunpack.c.l.b16 %v90
    %v427 = vunpack.c.h.b16 %v90
    %v428 = vunpack.c.l.b16 %v91
    %v429 = vunpack.c.l.b16 %v92
    %v430 = vunpack.c.h.b16 %v92
    %v431 = vunpack.c.l.b16 %v93
    %v432 = vunpack.c.l.b16 %v94
    %v433 = vunpack.c.h.b16 %v94
    %v434 = vunpack.c.l.b16 %v95
    %v435 = vunpack.c.l.b16 %v96
    %v436 = vunpack.c.h.b16 %v96
    %v437 = vunpack.c.l.b16 %v97
    %v438 = vunpack.c.l.b16 %v98
    %v439 = vunpack.c.h.b16 %v98
    %v440 = vunpack.c.l.b16 %v99
    %v441 = vunpack.c.l.b16 %v100
    %v442 = vunpack.c.h.b16 %v100
    %v443 = vunpack.c.l.b16 %v101
    %v444 = vunpack.c.l.b16 %v102
    %v445 = vunpack.c.h.b16 %v102
    %v446 = vunpack.c.l.b16 %v103
    %v447 = vunpack.c.l.b16 %v104
    %v448 = vunpack.c.h.b16 %v104
    %v449 = vunpack.c.l.b16 %v105
    %v450 = vunpack.c.l.b16 %v106
    %v451 = vunpack.c.h.b16 %v106
    %v452 = vunpack.c.l.b16 %v107
    %v453 = vunpack.c.l.b16 %v108
    %v454 = vunpack.c.h.b16 %v108
    %v455 = vunpack.c.l.b16 %v109
    %v456 = vunpack.c.l.b16 %v110
    %v457 = vunpack.c.h.b16 %v110
    %v458 = vunpack.c.l.b16 %v111
    %v459 = vunpack.c.l.b16 %v112
    %v460 = vunpack.c.h.b16 %v112
    %v461 = vunpack.c.l.b16 %v113
    %v462 = vunpack.c.l.b16 %v114
    %v463 = vunpack.c.h.b16 %v114
    %v464 = vunpack.c.l.b16 %v115
    %v465 = vunpack.c.l.b16 %v116
    %v466 = vunpack.c.h.b16 %v116
    %v467 = vunpack.c.l.b16 %v117
    %v468 = vunpack.c.l.b16 %v118
    %v469 = vunpack.c.h.b16 %v118
    %v470 = vunpack.c.l.b16 %v119
    %v471 = vunpack.c.l.b16 %v120
    %v472 = vunpack.c.h.b16 %v120
    %v473 = vunpack.c.l.b16 %v121
    %v474 = vunpack.c.l.b16 %v122
    %v475 = vunpack.c.h.b16 %v122
    %v476 = vunpack.c.l.b16 %v123
    %v477 = vunpack.c.l.b16 %v124
    %v478 = vunpack.c.h.b16 %v124
    %v479 = vunpack.c.l.b16 %v125
    %v480 = vunpack.c.l.b16 %v126
    %v481 = vunpack.c.h.b16 %v126
    %v482 = vunpack.c.l.b16 %v127
    %v483 = vunpack.c.l.b16 %v128
    %v484 = vunpack.c.h.b16 %v128
    %v485 = vunpack.c.l.b16 %v129
    %v486 = vunpack.c.l.b16 %v130
    %v487 = vunpack.c.h.b16 %v130
    %v488 = vunpack.c.l.b16 %v131
    %v489 = vunpack.c.l.b16 %v132
    %v490 = vunpack.c.h.b16 %v132
    %v491 = vunpack.c.l.b16 %v133
    %v492 = vunpack.c.l.b16 %v134
    %v493 = vunpack.c.h.b16 %v134
    %v494 = vunpack.c.l.b16 %v135
    %v495 = vunpack.c.l.b16 %v136
    %v496 = vunpack.c.h.b16 %v136
    %v497 = vunpack.c.l.b16 %v137
    %v498 = vunpack.c.l.b16 %v138
    %v499 = vunpack.c.h.b16 %v138
    %v500 = vunpack.c.l.b16 %v139
    %v501 = vunpack.c.l.b16 %v140
    %v502 = vunpack.c.h.b16 %v140
    %v503 = vunpack.c.l.b16 %v141
    %v504 = vunpack.c.l.b16 %v142
    %v505 = vunpack.c.h.b16 %v142
    %v506 = vunpack.c.l.b16 %v143
    %v507 = vpack.c.b16 %v318, %v315
    %v508 = vpack.c.b16 %v319, %v316
    %v509 = vpack.c.b16 %v320, %v317
    %v510 = vpack.c.b16 %v324, %v321
    %v511 = vpack.c.b16 %v325, %v322
    %v512 = vpack.c.b16 %v326, %v323
    %v513 = vpack.c.b16 %v330, %v327
    %v514 = vpack.c.b16 %v331, %v328
    %v515 = vpack.c.b16 %v332, %v329
    %v516 = vpack.c.b16 %v336, %v333
    %v517 = vpack.c.b16 %v337, %v334
    %v518 = vpack.c.b16 %v338, %v335
    %v519 = vpack.c.b16 %v342, %v339
    %v520 = vpack.c.b16 %v343, %v340
    %v521 = vpack.c.b16 %v344, %v341
    %v522 = vpack.c.b16 %v348, %v345
    %v523 = vpack.c.b16 %v349, %v346
    %v524 = vpack.c.b16 %v350, %v347
    %v525 = vpack.c.b16 %v354, %v351
    %v526 = vpack.c.b16 %v355, %v352
    %v527 = vpack.c.b16 %v356, %v353
    %v528 = vpack.c.b16 %v360, %v357
    %v529 = vpack.c.b16 %v361, %v358
    %v530 = vpack.c.b16 %v362, %v359
    %v531 = vpack.c.b16 %v366, %v363
    %v532 = vpack.c.b16 %v367, %v364
    %v533 = vpack.c.b16 %v368, %v365
    %v534 = vpack.c.b16 %v372, %v369
    %v535 = vpack.c.b16 %v373, %v370
    %v536 = vpack.c.b16 %v374, %v371
    %v537 = vpack.c.b16 %v378, %v375
    %v538 = vpack.c.b16 %v379, %v376
    %v539 = vpack.c.b16 %v380, %v377
    %v540 = vpack.c.b16 %v384, %v381
    %v541 = vpack.c.b16 %v385, %v382
    %v542 = vpack.c.b16 %v386, %v383
    %v543 = vpack.c.b16 %v390, %v387
    %v544 = vpack.c.b16 %v391, %v388
    %v545 = vpack.c.b16 %v392, %v389
    %v546 = vpack.c.b16 %v396, %v393
    %v547 = vpack.c.b16 %v397, %v394
    %v548 = vpack.c.b16 %v398, %v395
    %v549 = vpack.c.b16 %v402, %v399
    %v550 = vpack.c.b16 %v403, %v400
    %v551 = vpack.c.b16 %v404, %v401
    %v552 = vpack.c.b16 %v408, %v405
    %v553 = vpack.c.b16 %v409, %v406
    %v554 = vpack.c.b16 %v410, %v407
    %v555 = vpack.c.b16 %v414, %v411
    %v556 = vpack.c.b16 %v415, %v412
    %v557 = vpack.c.b16 %v416, %v413
    %v558 = vpack.c.b16 %v420, %v417
    %v559 = vpack.c.b16 %v421, %v418
    %v560 = vpack.c.b16 %v422, %v419
    %v561 = vpack.c.b16 %v426, %v423
    %v562 = vpack.c.b16 %v427, %v424
    %v563 = vpack.c.b16 %v428, %v425
    %v564 = vpack.c.b16 %v432, %v429
    %v565 = vpack.c.b16 %v433, %v430
    %v566 = vpack.c.b16 %v434, %v431
    %v567 = vpack.c.b16 %v438, %v435
    %v568 = vpack.c.b16 %v439, %v436
    %v569 = vpack.c.b16 %v440, %v437
    %v570 = vpack.c.b16 %v444, %v441
    %v571 = vpack.c.b16 %v445, %v442
    %v572 = vpack.c.b16 %v446, %v443
    %v573 = vpack.c.b16 %v450, %v447
    %v574 = vpack.c.b16 %v451, %v448
    %v575 = vpack.c.b16 %v452, %v449
    %v576 = vpack.c.b16 %v456, %v453
    %v577 = vpack.c.b16 %v457, %v454
    %v578 = vpack.c.b16 %v458, %v455
    %v579 = vpack.c.b16 %v462, %v459
    %v580 = vpack.c.b16 %v463, %v460
    %v581 = vpack.c.b16 %v464, %v461
    %v582 = vpack.c.b16 %v468, %v465
    %v583 = vpack.c.b16 %v469, %v466
    %v584 = vpack.c.b16 %v470, %v467
    %v585 = vpack.c.b16 %v474, %v471
    %v586 = vpack.c.b16 %v475, %v472
    %v587 = vpack.c.b16 %v476, %v473
    %v588 = vpack.c.b16 %v480, %v477
    %v589 = vpack.c.b16 %v481, %v478
    %v590 = vpack.c.b16 %v482, %v479
    %v591 = vpack.c.b16 %v486, %v483
    %v592 = vpack.c.b16 %v487, %v484
    %v593 = vpack.c.b16 %v488, %v485
    %v594 = vpack.c.b16 %v492, %v489
    %v595 = vpack.c.b16 %v493, %v490
    %v596 = vpack.c.b16 %v494, %v491
    %v597 = vpack.c.b16 %v498, %v495
    %v598 = vpack.c.b16 %v499, %v496
    %v599 = vpack.c.b16 %v500, %v497
    %v600 = vpack.c.b16 %v504, %v501
    %v601 = vpack.c.b16 %v505, %v502
    %v602 = vpack.c.b16 %v506, %v503
    %v703 = vunpack.c.l.b16 %v144
    %v704 = vunpack.c.l.b16 %v145
    %v705 = vunpack.c.l.b16 %v146
    %v706 = vunpack.c.l.b16 %v147
    %v707 = vunpack.c.l.b16 %v148
    %v708 = vunpack.c.l.b16 %v149
    %v709 = vunpack.c.l.b16 %v150
    %v710 = vunpack.c.l.b16 %v151
    %v711 = vunpack.c.l.b16 %v152
    %v712 = vunpack.c.l.b16 %v153
    %v713 = vunpack.c.l.b16 %v154
    %v714 = vunpack.c.l.b16 %v155
    %v715 = vunpack.c.l.b16 %v156
    %v716 = vunpack.c.l.b16 %v157
    %v717 = vunpack.c.l.b16 %v158
    %v718 = vunpack.c.l.b16 %v159
    %v719 = vunpack.c.l.b16 %v160
    %v720 = vunpack.c.l.b16 %v161
    %v721 = vunpack.c.l.b16 %v162
    %v722 = vunpack.c.l.b16 %v163
    %v723 = vunpack.c.l.b16 %v164
    %v724 = vunpack.c.l.b16 %v165
    %v725 = vunpack.c.l.b16 %v166
    %v726 = vunpack.c.l.b16 %v167
    %v727 = vunpack.c.l.b16 %v168
    %v728 = vunpack.c.l.b16 %v169
    %v729 = vunpack.c.l.b16 %v170
    %v730 = vunpack.c.l.b16 %v171
    %v731 = vunpack.c.l.b16 %v172
    %v732 = vunpack.c.l.b16 %v173
    %v733 = vunpack.c.l.b16 %v174
    %v734 = vunpack.c.l.b16 %v175
    %v735 = vunpack.c.l.b16 %v176
    %v736 = vunpack.c.l.b16 %v177
    %v737 = vunpack.c.l.b16 %v178
    %v738 = vunpack.c.l.b16 %v179
    %v739 = vpack.c.b16 %v704, %v703
    %v740 = vpack.c.b16 %v706, %v705
    %v741 = vpack.c.b16 %v708, %v707
    %v742 = vpack.c.b16 %v710, %v709
    %v743 = vpack.c.b16 %v712, %v711
    %v744 = vpack.c.b16 %v714, %v713
    %v745 = vpack.c.b16 %v716, %v715
    %v746 = vpack.c.b16 %v718, %v717
    %v747 = vpack.c.b16 %v720, %v719
    %v748 = vpack.c.b16 %v722, %v721
    %v749 = vpack.c.b16 %v724, %v723
    %v750 = vpack.c.b16 %v726, %v725
    %v751 = vpack.c.b16 %v728, %v727
    %v752 = vpack.c.b16 %v730, %v729
    %v753 = vpack.c.b16 %v732, %v731
    %v754 = vpack.c.b16 %v734, %v733
    %v755 = vpack.c.b16 %v736, %v735
    %v756 = vpack.c.b16 %v738, %v737
    %vm775 = vcmask 261120
    %v777 = vsel %vm775, %v509, 0
    %v780 = vsel %vm775, %v512, 0
    %v783 = vsel %vm775, %v515, 0
    %v786 = vsel %vm775, %v518, 0
    %v789 = vsel %vm775, %v521, 0
    %v792 = vsel %vm775, %v524, 0
    %v795 = vsel %vm775, %v527, 0
    %v798 = vsel %vm775, %v530, 0
    %v801 = vsel %vm775, %v533, 0
    %v804 = vsel %vm775, %v536, 0
    %v807 = vsel %vm775, %v539, 0
    %v810 = vsel %vm775, %v542, 0
    %v813 = vsel %vm775, %v545, 0
    %v816 = vsel %vm775, %v548, 0
    %v819 = vsel %vm775, %v551, 0
    %v822 = vsel %vm775, %v554, 0
    %v825 = vsel %vm775, %v557, 0
    %v828 = vsel %vm775, %v560, 0
    %v831 = vsel %vm775, %v563, 0
    %v834 = vsel %vm775, %v566, 0
    %v837 = vsel %vm775, %v569, 0
    %v840 = vsel %vm775, %v572, 0
    %v843 = vsel %vm775, %v575, 0
    %v846 = vsel %vm775, %v578, 0
    %v849 = vsel %vm775, %v581, 0
    %v852 = vsel %vm775, %v584, 0
    %v855 = vsel %vm775, %v587, 0
    %v858 = vsel %vm775, %v590, 0
    %v861 = vsel %vm775, %v593, 0
    %v864 = vsel %vm775, %v596, 0
    %v867 = vsel %vm775, %v599, 0
    %v870 = vsel %vm775, %v602, 0
    %872 = vmatprep.subr.bf16.mxu0 0
    %873 = vmatpush1.bf16.msra.mxu0 %v746
    %874 = vmatprep.subr.bf16.mxu0 0
    %875 = vmatpush1.bf16.msra.mxu0 %v745
    %876 = vmatprep.subr.bf16.mxu0 0
    %877 = vmatpush1.bf16.msra.mxu0 %v744
    %878 = vmatprep.subr.bf16.mxu0 0
    %879 = vmatpush1.bf16.msra.mxu0 %v743
    %880 = vmatprep.subr.bf16.mxu0 0
    %881 = vmatpush1.bf16.msra.mxu0 %v742
    %882 = vmatprep.subr.bf16.mxu0 0
    %883 = vmatpush1.bf16.msra.mxu0 %v741
    %884 = vmatprep.subr.bf16.mxu0 0
    %885 = vmatpush1.bf16.msra.mxu0 %v740
    %886 = vmatprep.subr.bf16.mxu0 0
    %887 = vmatpush1.bf16.msra.mxu0 %v739
    %888 = vmatprep.subr.bf16.mxu0 0
    %889 = vmatpush2.bf16.msra.mxu0 %v754
    %890 = vmatprep.subr.bf16.mxu0 0
    %891 = vmatpush2.bf16.msra.mxu0 %v753
    %892 = vmatprep.subr.bf16.mxu0 0
    %893 = vmatpush2.bf16.msra.mxu0 %v752
    %894 = vmatprep.subr.bf16.mxu0 0
    %895 = vmatpush2.bf16.msra.mxu0 %v751
    %896 = vmatprep.subr.bf16.mxu0 0
    %897 = vmatpush2.bf16.msra.mxu0 %v750
    %898 = vmatprep.subr.bf16.mxu0 0
    %899 = vmatpush2.bf16.msra.mxu0 %v749
    %900 = vmatprep.subr.bf16.mxu0 0
    %901 = vmatpush2.bf16.msra.mxu0 %v748
    %902 = vmatprep.subr.bf16.mxu0 0
    %903 = vmatpush2.bf16.msra.mxu0 %v747
    %904 = vmatprep.mubr.bf16.mxu0 %v508
    %905 = vmatmul.mubr.bf16.gmra.mxu0 %v507
    %v906 = vpop.f32.mrf.mxu0
    %v907 = vadd.f32 %v185, %v906
    %v908 = vpop.f32.mrf.mxu0
    %v909 = vpop.f32.mrf.mxu0
    %v910 = vadd.f32 %v185, %v909
    %v911 = vpop.f32.mrf.mxu0
    %912 = vmatprep.mubr.bf16.mxu0 %v511
    %913 = vmatmul.mubr.bf16.gmra.mxu0 %v510
    %v914 = vpop.f32.mrf.mxu0
    %v915 = vadd.f32 %v185, %v914
    %v916 = vpop.f32.mrf.mxu0
    %v917 = vpop.f32.mrf.mxu0
    %v918 = vadd.f32 %v185, %v917
    %v919 = vpop.f32.mrf.mxu0
    %920 = vmatprep.mubr.bf16.mxu0 %v514
    %921 = vmatmul.mubr.bf16.gmra.mxu0 %v513
    %v922 = vpop.f32.mrf.mxu0
    %v923 = vadd.f32 %v185, %v922
    %v924 = vpop.f32.mrf.mxu0
    %v925 = vpop.f32.mrf.mxu0
    %v926 = vadd.f32 %v185, %v925
    %v927 = vpop.f32.mrf.mxu0
    %928 = vmatprep.mubr.bf16.mxu0 %v517
    %929 = vmatmul.mubr.bf16.gmra.mxu0 %v516
    %v930 = vpop.f32.mrf.mxu0
    %v931 = vadd.f32 %v185, %v930
    %v932 = vpop.f32.mrf.mxu0
    %v933 = vpop.f32.mrf.mxu0
    %v934 = vadd.f32 %v185, %v933
    %v935 = vpop.f32.mrf.mxu0
    %936 = vmatprep.mubr.bf16.mxu0 %v520
    %937 = vmatmul.mubr.bf16.gmra.mxu0 %v519
    %v938 = vpop.f32.mrf.mxu0
    %v939 = vadd.f32 %v185, %v938
    %v940 = vpop.f32.mrf.mxu0
    %v941 = vpop.f32.mrf.mxu0
    %v942 = vadd.f32 %v185, %v941
    %v943 = vpop.f32.mrf.mxu0
    %944 = vmatprep.mubr.bf16.mxu0 %v523
    %945 = vmatmul.mubr.bf16.gmra.mxu0 %v522
    %v946 = vpop.f32.mrf.mxu0
    %v947 = vadd.f32 %v185, %v946
    %v948 = vpop.f32.mrf.mxu0
    %v949 = vpop.f32.mrf.mxu0
    %v950 = vadd.f32 %v185, %v949
    %v951 = vpop.f32.mrf.mxu0
    %952 = vmatprep.mubr.bf16.mxu0 %v526
    %953 = vmatmul.mubr.bf16.gmra.mxu0 %v525
    %v954 = vpop.f32.mrf.mxu0
    %v955 = vadd.f32 %v185, %v954
    %v956 = vpop.f32.mrf.mxu0
    %v957 = vpop.f32.mrf.mxu0
    %v958 = vadd.f32 %v185, %v957
    %v959 = vpop.f32.mrf.mxu0
    %960 = vmatprep.mubr.bf16.mxu0 %v529
    %961 = vmatmul.mubr.bf16.gmra.mxu0 %v528
    %v962 = vpop.f32.mrf.mxu0
    %v963 = vadd.f32 %v185, %v962
    %v964 = vpop.f32.mrf.mxu0
    %v965 = vpop.f32.mrf.mxu0
    %v966 = vadd.f32 %v185, %v965
    %v967 = vpop.f32.mrf.mxu0
    %968 = vmatprep.mubr.bf16.mxu0 %v532
    %969 = vmatmul.mubr.bf16.gmra.mxu0 %v531
    %v970 = vpop.f32.mrf.mxu0
    %v971 = vadd.f32 %v185, %v970
    %v972 = vpop.f32.mrf.mxu0
    %v973 = vpop.f32.mrf.mxu0
    %v974 = vadd.f32 %v185, %v973
    %v975 = vpop.f32.mrf.mxu0
    %976 = vmatprep.mubr.bf16.mxu0 %v535
    %977 = vmatmul.mubr.bf16.gmra.mxu0 %v534
    %v978 = vpop.f32.mrf.mxu0
    %v979 = vadd.f32 %v185, %v978
    %v980 = vpop.f32.mrf.mxu0
    %v981 = vpop.f32.mrf.mxu0
    %v982 = vadd.f32 %v185, %v981
    %v983 = vpop.f32.mrf.mxu0
    %984 = vmatprep.mubr.bf16.mxu0 %v538
    %985 = vmatmul.mubr.bf16.gmra.mxu0 %v537
    %v986 = vpop.f32.mrf.mxu0
    %v987 = vadd.f32 %v185, %v986
    %v988 = vpop.f32.mrf.mxu0
    %v989 = vpop.f32.mrf.mxu0
    %v990 = vadd.f32 %v185, %v989
    %v991 = vpop.f32.mrf.mxu0
    %992 = vmatprep.mubr.bf16.mxu0 %v541
    %993 = vmatmul.mubr.bf16.gmra.mxu0 %v540
    %v994 = vpop.f32.mrf.mxu0
    %v995 = vadd.f32 %v185, %v994
    %v996 = vpop.f32.mrf.mxu0
    %v997 = vpop.f32.mrf.mxu0
    %v998 = vadd.f32 %v185, %v997
    %v999 = vpop.f32.mrf.mxu0
    %1000 = vmatprep.mubr.bf16.mxu0 %v544
    %1001 = vmatmul.mubr.bf16.gmra.mxu0 %v543
    %v1002 = vpop.f32.mrf.mxu0
    %v1003 = vadd.f32 %v185, %v1002
    %v1004 = vpop.f32.mrf.mxu0
    %v1005 = vpop.f32.mrf.mxu0
    %v1006 = vadd.f32 %v185, %v1005
    %v1007 = vpop.f32.mrf.mxu0
    %1008 = vmatprep.mubr.bf16.mxu0 %v547
    %1009 = vmatmul.mubr.bf16.gmra.mxu0 %v546
    %v1010 = vpop.f32.mrf.mxu0
    %v1011 = vadd.f32 %v185, %v1010
    %v1012 = vpop.f32.mrf.mxu0
    %v1013 = vpop.f32.mrf.mxu0
    %v1014 = vadd.f32 %v185, %v1013
    %v1015 = vpop.f32.mrf.mxu0
    %1016 = vmatprep.mubr.bf16.mxu0 %v550
    %1017 = vmatmul.mubr.bf16.gmra.mxu0 %v549
    %v1018 = vpop.f32.mrf.mxu0
    %v1019 = vadd.f32 %v185, %v1018
    %v1020 = vpop.f32.mrf.mxu0
    %v1021 = vpop.f32.mrf.mxu0
    %v1022 = vadd.f32 %v185, %v1021
    %v1023 = vpop.f32.mrf.mxu0
    %1024 = vmatprep.mubr.bf16.mxu0 %v553
    %1025 = vmatmul.mubr.bf16.gmra.mxu0 %v552
    %v1026 = vpop.f32.mrf.mxu0
    %v1027 = vadd.f32 %v185, %v1026
    %v1028 = vpop.f32.mrf.mxu0
    %v1029 = vpop.f32.mrf.mxu0
    %v1030 = vadd.f32 %v185, %v1029
    %v1031 = vpop.f32.mrf.mxu0
    %1032 = vmatprep.mubr.bf16.mxu0 %v556
    %1033 = vmatmul.mubr.bf16.gmra.mxu0 %v555
    %v1034 = vpop.f32.mrf.mxu0
    %v1035 = vadd.f32 %v185, %v1034
    %v1036 = vpop.f32.mrf.mxu0
    %v1037 = vpop.f32.mrf.mxu0
    %v1038 = vadd.f32 %v185, %v1037
    %v1039 = vpop.f32.mrf.mxu0
    %1040 = vmatprep.mubr.bf16.mxu0 %v559
    %1041 = vmatmul.mubr.bf16.gmra.mxu0 %v558
    %v1042 = vpop.f32.mrf.mxu0
    %v1043 = vadd.f32 %v185, %v1042
    %v1044 = vpop.f32.mrf.mxu0
    %v1045 = vpop.f32.mrf.mxu0
    %v1046 = vadd.f32 %v185, %v1045
    %v1047 = vpop.f32.mrf.mxu0
    %1048 = vmatprep.mubr.bf16.mxu0 %v562
    %1049 = vmatmul.mubr.bf16.gmra.mxu0 %v561
    %v1050 = vpop.f32.mrf.mxu0
    %v1051 = vadd.f32 %v185, %v1050
    %v1052 = vpop.f32.mrf.mxu0
    %v1053 = vpop.f32.mrf.mxu0
    %v1054 = vadd.f32 %v185, %v1053
    %v1055 = vpop.f32.mrf.mxu0
    %1056 = vmatprep.mubr.bf16.mxu0 %v565
    %1057 = vmatmul.mubr.bf16.gmra.mxu0 %v564
    %v1058 = vpop.f32.mrf.mxu0
    %v1059 = vadd.f32 %v185, %v1058
    %v1060 = vpop.f32.mrf.mxu0
    %v1061 = vpop.f32.mrf.mxu0
    %v1062 = vadd.f32 %v185, %v1061
    %v1063 = vpop.f32.mrf.mxu0
    %1064 = vmatprep.mubr.bf16.mxu0 %v568
    %1065 = vmatmul.mubr.bf16.gmra.mxu0 %v567
    %v1066 = vpop.f32.mrf.mxu0
    %v1067 = vadd.f32 %v185, %v1066
    %v1068 = vpop.f32.mrf.mxu0
    %v1069 = vpop.f32.mrf.mxu0
    %v1070 = vadd.f32 %v185, %v1069
    %v1071 = vpop.f32.mrf.mxu0
    %1072 = vmatprep.mubr.bf16.mxu0 %v571
    %1073 = vmatmul.mubr.bf16.gmra.mxu0 %v570
    %v1074 = vpop.f32.mrf.mxu0
    %v1075 = vadd.f32 %v185, %v1074
    %v1076 = vpop.f32.mrf.mxu0
    %v1077 = vpop.f32.mrf.mxu0
    %v1078 = vadd.f32 %v185, %v1077
    %v1079 = vpop.f32.mrf.mxu0
    %1080 = vmatprep.mubr.bf16.mxu0 %v574
    %1081 = vmatmul.mubr.bf16.gmra.mxu0 %v573
    %v1082 = vpop.f32.mrf.mxu0
    %v1083 = vadd.f32 %v185, %v1082
    %v1084 = vpop.f32.mrf.mxu0
    %v1085 = vpop.f32.mrf.mxu0
    %v1086 = vadd.f32 %v185, %v1085
    %v1087 = vpop.f32.mrf.mxu0
    %1088 = vmatprep.mubr.bf16.mxu0 %v577
    %1089 = vmatmul.mubr.bf16.gmra.mxu0 %v576
    %v1090 = vpop.f32.mrf.mxu0
    %v1091 = vadd.f32 %v185, %v1090
    %v1092 = vpop.f32.mrf.mxu0
    %v1093 = vpop.f32.mrf.mxu0
    %v1094 = vadd.f32 %v185, %v1093
    %v1095 = vpop.f32.mrf.mxu0
    %1096 = vmatprep.mubr.bf16.mxu0 %v580
    %1097 = vmatmul.mubr.bf16.gmra.mxu0 %v579
    %v1098 = vpop.f32.mrf.mxu0
    %v1099 = vadd.f32 %v185, %v1098
    %v1100 = vpop.f32.mrf.mxu0
    %v1101 = vpop.f32.mrf.mxu0
    %v1102 = vadd.f32 %v185, %v1101
    %v1103 = vpop.f32.mrf.mxu0
    %1104 = vmatprep.mubr.bf16.mxu0 %v583
    %1105 = vmatmul.mubr.bf16.gmra.mxu0 %v582
    %v1106 = vpop.f32.mrf.mxu0
    %v1107 = vadd.f32 %v185, %v1106
    %v1108 = vpop.f32.mrf.mxu0
    %v1109 = vpop.f32.mrf.mxu0
    %v1110 = vadd.f32 %v185, %v1109
    %v1111 = vpop.f32.mrf.mxu0
    %1112 = vmatprep.mubr.bf16.mxu0 %v586
    %1113 = vmatmul.mubr.bf16.gmra.mxu0 %v585
    %v1114 = vpop.f32.mrf.mxu0
    %v1115 = vadd.f32 %v185, %v1114
    %v1116 = vpop.f32.mrf.mxu0
    %v1117 = vpop.f32.mrf.mxu0
    %v1118 = vadd.f32 %v185, %v1117
    %v1119 = vpop.f32.mrf.mxu0
    %1120 = vmatprep.mubr.bf16.mxu0 %v589
    %1121 = vmatmul.mubr.bf16.gmra.mxu0 %v588
    %v1122 = vpop.f32.mrf.mxu0
    %v1123 = vadd.f32 %v185, %v1122
    %v1124 = vpop.f32.mrf.mxu0
    %v1125 = vpop.f32.mrf.mxu0
    %v1126 = vadd.f32 %v185, %v1125
    %v1127 = vpop.f32.mrf.mxu0
    %1128 = vmatprep.mubr.bf16.mxu0 %v592
    %1129 = vmatmul.mubr.bf16.gmra.mxu0 %v591
    %v1130 = vpop.f32.mrf.mxu0
    %v1131 = vadd.f32 %v185, %v1130
    %v1132 = vpop.f32.mrf.mxu0
    %v1133 = vpop.f32.mrf.mxu0
    %v1134 = vadd.f32 %v185, %v1133
    %v1135 = vpop.f32.mrf.mxu0
    %1136 = vmatprep.mubr.bf16.mxu0 %v595
    %1137 = vmatmul.mubr.bf16.gmra.mxu0 %v594
    %v1138 = vpop.f32.mrf.mxu0
    %v1139 = vadd.f32 %v185, %v1138
    %v1140 = vpop.f32.mrf.mxu0
    %v1141 = vpop.f32.mrf.mxu0
    %v1142 = vadd.f32 %v185, %v1141
    %v1143 = vpop.f32.mrf.mxu0
    %1144 = vmatprep.mubr.bf16.mxu0 %v598
    %1145 = vmatmul.mubr.bf16.gmra.mxu0 %v597
    %v1146 = vpop.f32.mrf.mxu0
    %v1147 = vadd.f32 %v185, %v1146
    %v1148 = vpop.f32.mrf.mxu0
    %v1149 = vpop.f32.mrf.mxu0
    %v1150 = vadd.f32 %v185, %v1149
    %v1151 = vpop.f32.mrf.mxu0
    %1152 = vmatprep.mubr.bf16.mxu0 %v601
    %1153 = vmatmul.mubr.bf16.gmra.mxu0 %v600
    %v1154 = vpop.f32.mrf.mxu0
    %v1155 = vadd.f32 %v185, %v1154
    %v1156 = vpop.f32.mrf.mxu0
    %v1157 = vpop.f32.mrf.mxu0
    %v1158 = vadd.f32 %v185, %v1157
    %v1159 = vpop.f32.mrf.mxu0
    %1160 = vdwg.mxu0
    %1161 = vmatprep.subr.bf16.mxu0 0
    %1162 = vmatpush1.bf16.msra.mxu0 0
    %1163 = vmatprep.subr.bf16.mxu0 0
    %1164 = vmatpush1.bf16.msra.mxu0 0
    %1165 = vmatprep.subr.bf16.mxu0 0
    %1166 = vmatpush1.bf16.msra.mxu0 0
    %1167 = vmatprep.subr.bf16.mxu0 0
    %1168 = vmatpush1.bf16.msra.mxu0 0
    %1169 = vmatprep.subr.bf16.mxu0 0
    %1170 = vmatpush1.bf16.msra.mxu0 0
    %1171 = vmatprep.subr.bf16.mxu0 0
    %1172 = vmatpush1.bf16.msra.mxu0 0
    %1173 = vmatprep.subr.bf16.mxu0 0
    %1174 = vmatpush1.bf16.msra.mxu0 %v756
    %1175 = vmatprep.subr.bf16.mxu0 0
    %1176 = vmatpush1.bf16.msra.mxu0 %v755
    %1177 = vmatprep.subr.bf16.mxu0 0
    %1178 = vmatpush2.bf16.msra.mxu0 0
    %1179 = vmatprep.subr.bf16.mxu0 0
    %1180 = vmatpush2.bf16.msra.mxu0 0
    %1181 = vmatprep.subr.bf16.mxu0 0
    %1182 = vmatpush2.bf16.msra.mxu0 0
    %1183 = vmatprep.subr.bf16.mxu0 0
    %1184 = vmatpush2.bf16.msra.mxu0 0
    %1185 = vmatprep.subr.bf16.mxu0 0
    %1186 = vmatpush2.bf16.msra.mxu0 0
    %1187 = vmatprep.subr.bf16.mxu0 0
    %1188 = vmatpush2.bf16.msra.mxu0 0
    %1189 = vmatprep.subr.bf16.mxu0 0
    %1190 = vmatpush2.bf16.msra.mxu0 0
    %1191 = vmatprep.subr.bf16.mxu0 0
    %1192 = vmatpush2.bf16.msra.mxu0 0
    %1193 = vmatprep.mubr.bf16.mxu0 0
    %1194 = vmatmul.mubr.bf16.gmra.mxu0 %v777
    %v1195 = vpop.f32.mrf.mxu0
    %v1196 = vadd.f32 %v907, %v1195
    %v1197 = vpop.f32.mrf.mxu0
    %v1198 = vpop.f32.mrf.mxu0
    %v1199 = vadd.f32 %v910, %v1198
    %v1200 = vpop.f32.mrf.mxu0
    %1201 = vmatprep.mubr.bf16.mxu0 0
    %1202 = vmatmul.mubr.bf16.gmra.mxu0 %v780
    %v1203 = vpop.f32.mrf.mxu0
    %v1204 = vadd.f32 %v915, %v1203
    %v1205 = vpop.f32.mrf.mxu0
    %v1206 = vpop.f32.mrf.mxu0
    %v1207 = vadd.f32 %v918, %v1206
    %v1208 = vpop.f32.mrf.mxu0
    %1209 = vmatprep.mubr.bf16.mxu0 0
    %1210 = vmatmul.mubr.bf16.gmra.mxu0 %v783
    %v1211 = vpop.f32.mrf.mxu0
    %v1212 = vadd.f32 %v923, %v1211
    %v1213 = vpop.f32.mrf.mxu0
    %v1214 = vpop.f32.mrf.mxu0
    %v1215 = vadd.f32 %v926, %v1214
    %v1216 = vpop.f32.mrf.mxu0
    %1217 = vmatprep.mubr.bf16.mxu0 0
    %1218 = vmatmul.mubr.bf16.gmra.mxu0 %v786
    %v1219 = vpop.f32.mrf.mxu0
    %v1220 = vadd.f32 %v931, %v1219
    %v1221 = vpop.f32.mrf.mxu0
    %v1222 = vpop.f32.mrf.mxu0
    %v1223 = vadd.f32 %v934, %v1222
    %v1224 = vpop.f32.mrf.mxu0
    %1225 = vmatprep.mubr.bf16.mxu0 0
    %1226 = vmatmul.mubr.bf16.gmra.mxu0 %v789
    %v1227 = vpop.f32.mrf.mxu0
    %v1228 = vadd.f32 %v939, %v1227
    %v1229 = vpop.f32.mrf.mxu0
    %v1230 = vpop.f32.mrf.mxu0
    %v1231 = vadd.f32 %v942, %v1230
    %v1232 = vpop.f32.mrf.mxu0
    %1233 = vmatprep.mubr.bf16.mxu0 0
    %1234 = vmatmul.mubr.bf16.gmra.mxu0 %v792
    %v1235 = vpop.f32.mrf.mxu0
    %v1236 = vadd.f32 %v947, %v1235
    %v1237 = vpop.f32.mrf.mxu0
    %v1238 = vpop.f32.mrf.mxu0
    %v1239 = vadd.f32 %v950, %v1238
    %v1240 = vpop.f32.mrf.mxu0
    %1241 = vmatprep.mubr.bf16.mxu0 0
    %1242 = vmatmul.mubr.bf16.gmra.mxu0 %v795
    %v1243 = vpop.f32.mrf.mxu0
    %v1244 = vadd.f32 %v955, %v1243
    %v1245 = vpop.f32.mrf.mxu0
    %v1246 = vpop.f32.mrf.mxu0
    %v1247 = vadd.f32 %v958, %v1246
    %v1248 = vpop.f32.mrf.mxu0
    %1249 = vmatprep.mubr.bf16.mxu0 0
    %1250 = vmatmul.mubr.bf16.gmra.mxu0 %v798
    %v1251 = vpop.f32.mrf.mxu0
    %v1252 = vadd.f32 %v963, %v1251
    %v1253 = vpop.f32.mrf.mxu0
    %v1254 = vpop.f32.mrf.mxu0
    %v1255 = vadd.f32 %v966, %v1254
    %v1256 = vpop.f32.mrf.mxu0
    %1257 = vmatprep.mubr.bf16.mxu0 0
    %1258 = vmatmul.mubr.bf16.gmra.mxu0 %v801
    %v1259 = vpop.f32.mrf.mxu0
    %v1260 = vadd.f32 %v971, %v1259
    %v1261 = vpop.f32.mrf.mxu0
    %v1262 = vpop.f32.mrf.mxu0
    %v1263 = vadd.f32 %v974, %v1262
    %v1264 = vpop.f32.mrf.mxu0
    %1265 = vmatprep.mubr.bf16.mxu0 0
    %1266 = vmatmul.mubr.bf16.gmra.mxu0 %v804
    %v1267 = vpop.f32.mrf.mxu0
    %v1268 = vadd.f32 %v979, %v1267
    %v1269 = vpop.f32.mrf.mxu0
    %v1270 = vpop.f32.mrf.mxu0
    %v1271 = vadd.f32 %v982, %v1270
    %v1272 = vpop.f32.mrf.mxu0
    %1273 = vmatprep.mubr.bf16.mxu0 0
    %1274 = vmatmul.mubr.bf16.gmra.mxu0 %v807
    %v1275 = vpop.f32.mrf.mxu0
    %v1276 = vadd.f32 %v987, %v1275
    %v1277 = vpop.f32.mrf.mxu0
    %v1278 = vpop.f32.mrf.mxu0
    %v1279 = vadd.f32 %v990, %v1278
    %v1280 = vpop.f32.mrf.mxu0
    %1281 = vmatprep.mubr.bf16.mxu0 0
    %1282 = vmatmul.mubr.bf16.gmra.mxu0 %v810
    %v1283 = vpop.f32.mrf.mxu0
    %v1284 = vadd.f32 %v995, %v1283
    %v1285 = vpop.f32.mrf.mxu0
    %v1286 = vpop.f32.mrf.mxu0
    %v1287 = vadd.f32 %v998, %v1286
    %v1288 = vpop.f32.mrf.mxu0
    %1289 = vmatprep.mubr.bf16.mxu0 0
    %1290 = vmatmul.mubr.bf16.gmra.mxu0 %v813
    %v1291 = vpop.f32.mrf.mxu0
    %v1292 = vadd.f32 %v1003, %v1291
    %v1293 = vpop.f32.mrf.mxu0
    %v1294 = vpop.f32.mrf.mxu0
    %v1295 = vadd.f32 %v1006, %v1294
    %v1296 = vpop.f32.mrf.mxu0
    %1297 = vmatprep.mubr.bf16.mxu0 0
    %1298 = vmatmul.mubr.bf16.gmra.mxu0 %v816
    %v1299 = vpop.f32.mrf.mxu0
    %v1300 = vadd.f32 %v1011, %v1299
    %v1301 = vpop.f32.mrf.mxu0
    %v1302 = vpop.f32.mrf.mxu0
    %v1303 = vadd.f32 %v1014, %v1302
    %v1304 = vpop.f32.mrf.mxu0
    %1305 = vmatprep.mubr.bf16.mxu0 0
    %1306 = vmatmul.mubr.bf16.gmra.mxu0 %v819
    %v1307 = vpop.f32.mrf.mxu0
    %v1308 = vadd.f32 %v1019, %v1307
    %v1309 = vpop.f32.mrf.mxu0
    %v1310 = vpop.f32.mrf.mxu0
    %v1311 = vadd.f32 %v1022, %v1310
    %v1312 = vpop.f32.mrf.mxu0
    %1313 = vmatprep.mubr.bf16.mxu0 0
    %1314 = vmatmul.mubr.bf16.gmra.mxu0 %v822
    %v1315 = vpop.f32.mrf.mxu0
    %v1316 = vadd.f32 %v1027, %v1315
    %v1317 = vpop.f32.mrf.mxu0
    %v1318 = vpop.f32.mrf.mxu0
    %v1319 = vadd.f32 %v1030, %v1318
    %v1320 = vpop.f32.mrf.mxu0
    %1321 = vmatprep.mubr.bf16.mxu0 0
    %1322 = vmatmul.mubr.bf16.gmra.mxu0 %v825
    %v1323 = vpop.f32.mrf.mxu0
    %v1324 = vadd.f32 %v1035, %v1323
    %v1325 = vpop.f32.mrf.mxu0
    %v1326 = vpop.f32.mrf.mxu0
    %v1327 = vadd.f32 %v1038, %v1326
    %v1328 = vpop.f32.mrf.mxu0
    %1329 = vmatprep.mubr.bf16.mxu0 0
    %1330 = vmatmul.mubr.bf16.gmra.mxu0 %v828
    %v1331 = vpop.f32.mrf.mxu0
    %v1332 = vadd.f32 %v1043, %v1331
    %v1333 = vpop.f32.mrf.mxu0
    %v1334 = vpop.f32.mrf.mxu0
    %v1335 = vadd.f32 %v1046, %v1334
    %v1336 = vpop.f32.mrf.mxu0
    %1337 = vmatprep.mubr.bf16.mxu0 0
    %1338 = vmatmul.mubr.bf16.gmra.mxu0 %v831
    %v1339 = vpop.f32.mrf.mxu0
    %v1340 = vadd.f32 %v1051, %v1339
    %v1341 = vpop.f32.mrf.mxu0
    %v1342 = vpop.f32.mrf.mxu0
    %v1343 = vadd.f32 %v1054, %v1342
    %v1344 = vpop.f32.mrf.mxu0
    %1345 = vmatprep.mubr.bf16.mxu0 0
    %1346 = vmatmul.mubr.bf16.gmra.mxu0 %v834
    %v1347 = vpop.f32.mrf.mxu0
    %v1348 = vadd.f32 %v1059, %v1347
    %v1349 = vpop.f32.mrf.mxu0
    %v1350 = vpop.f32.mrf.mxu0
    %v1351 = vadd.f32 %v1062, %v1350
    %v1352 = vpop.f32.mrf.mxu0
    %1353 = vmatprep.mubr.bf16.mxu0 0
    %1354 = vmatmul.mubr.bf16.gmra.mxu0 %v837
    %v1355 = vpop.f32.mrf.mxu0
    %v1356 = vadd.f32 %v1067, %v1355
    %v1357 = vpop.f32.mrf.mxu0
    %v1358 = vpop.f32.mrf.mxu0
    %v1359 = vadd.f32 %v1070, %v1358
    %v1360 = vpop.f32.mrf.mxu0
    %1361 = vmatprep.mubr.bf16.mxu0 0
    %1362 = vmatmul.mubr.bf16.gmra.mxu0 %v840
    %v1363 = vpop.f32.mrf.mxu0
    %v1364 = vadd.f32 %v1075, %v1363
    %v1365 = vpop.f32.mrf.mxu0
    %v1366 = vpop.f32.mrf.mxu0
    %v1367 = vadd.f32 %v1078, %v1366
    %v1368 = vpop.f32.mrf.mxu0
    %1369 = vmatprep.mubr.bf16.mxu0 0
    %1370 = vmatmul.mubr.bf16.gmra.mxu0 %v843
    %v1371 = vpop.f32.mrf.mxu0
    %v1372 = vadd.f32 %v1083, %v1371
    %v1373 = vpop.f32.mrf.mxu0
    %v1374 = vpop.f32.mrf.mxu0
    %v1375 = vadd.f32 %v1086, %v1374
    %v1376 = vpop.f32.mrf.mxu0
    %1377 = vmatprep.mubr.bf16.mxu0 0
    %1378 = vmatmul.mubr.bf16.gmra.mxu0 %v846
    %v1379 = vpop.f32.mrf.mxu0
    %v1380 = vadd.f32 %v1091, %v1379
    %v1381 = vpop.f32.mrf.mxu0
    %v1382 = vpop.f32.mrf.mxu0
    %v1383 = vadd.f32 %v1094, %v1382
    %v1384 = vpop.f32.mrf.mxu0
    %1385 = vmatprep.mubr.bf16.mxu0 0
    %1386 = vmatmul.mubr.bf16.gmra.mxu0 %v849
    %v1387 = vpop.f32.mrf.mxu0
    %v1388 = vadd.f32 %v1099, %v1387
    %v1389 = vpop.f32.mrf.mxu0
    %v1390 = vpop.f32.mrf.mxu0
    %v1391 = vadd.f32 %v1102, %v1390
    %v1392 = vpop.f32.mrf.mxu0
    %1393 = vmatprep.mubr.bf16.mxu0 0
    %1394 = vmatmul.mubr.bf16.gmra.mxu0 %v852
    %v1395 = vpop.f32.mrf.mxu0
    %v1396 = vadd.f32 %v1107, %v1395
    %v1397 = vpop.f32.mrf.mxu0
    %v1398 = vpop.f32.mrf.mxu0
    %v1399 = vadd.f32 %v1110, %v1398
    %v1400 = vpop.f32.mrf.mxu0
    %1401 = vmatprep.mubr.bf16.mxu0 0
    %1402 = vmatmul.mubr.bf16.gmra.mxu0 %v855
    %v1403 = vpop.f32.mrf.mxu0
    %v1404 = vadd.f32 %v1115, %v1403
    %v1405 = vpop.f32.mrf.mxu0
    %v1406 = vpop.f32.mrf.mxu0
    %v1407 = vadd.f32 %v1118, %v1406
    %v1408 = vpop.f32.mrf.mxu0
    %1409 = vmatprep.mubr.bf16.mxu0 0
    %1410 = vmatmul.mubr.bf16.gmra.mxu0 %v858
    %v1411 = vpop.f32.mrf.mxu0
    %v1412 = vadd.f32 %v1123, %v1411
    %v1413 = vpop.f32.mrf.mxu0
    %v1414 = vpop.f32.mrf.mxu0
    %v1415 = vadd.f32 %v1126, %v1414
    %v1416 = vpop.f32.mrf.mxu0
    %1417 = vmatprep.mubr.bf16.mxu0 0
    %1418 = vmatmul.mubr.bf16.gmra.mxu0 %v861
    %v1419 = vpop.f32.mrf.mxu0
    %v1420 = vadd.f32 %v1131, %v1419
    %v1421 = vpop.f32.mrf.mxu0
    %v1422 = vpop.f32.mrf.mxu0
    %v1423 = vadd.f32 %v1134, %v1422
    %v1424 = vpop.f32.mrf.mxu0
    %1425 = vmatprep.mubr.bf16.mxu0 0
    %1426 = vmatmul.mubr.bf16.gmra.mxu0 %v864
    %v1427 = vpop.f32.mrf.mxu0
    %v1428 = vadd.f32 %v1139, %v1427
    %v1429 = vpop.f32.mrf.mxu0
    %v1430 = vpop.f32.mrf.mxu0
    %v1431 = vadd.f32 %v1142, %v1430
    %v1432 = vpop.f32.mrf.mxu0
    %1433 = vmatprep.mubr.bf16.mxu0 0
    %1434 = vmatmul.mubr.bf16.gmra.mxu0 %v867
    %v1435 = vpop.f32.mrf.mxu0
    %v1436 = vadd.f32 %v1147, %v1435
    %v1437 = vpop.f32.mrf.mxu0
    %v1438 = vpop.f32.mrf.mxu0
    %v1439 = vadd.f32 %v1150, %v1438
    %v1440 = vpop.f32.mrf.mxu0
    %1441 = vmatprep.mubr.bf16.mxu0 0
    %1442 = vmatmul.mubr.bf16.gmra.mxu0 %v870
    %v1443 = vpop.f32.mrf.mxu0
    %v1444 = vadd.f32 %v1155, %v1443
    %v1445 = vpop.f32.mrf.mxu0
    %v1446 = vpop.f32.mrf.mxu0
    %v1447 = vadd.f32 %v1158, %v1446
    %v1448 = vpop.f32.mrf.mxu0
    %1449 = vdwg.mxu0
    %1450 = vst.msk [vmem:[#allocation2] sm:$0xff] %vm775, %v1196
    %1451 = vst.msk [vmem:[#allocation2 + $0x8] sm:$0xff] %vm775, %v1199
    %1452 = vst.msk [vmem:[#allocation2 + $0x10] sm:$0xff] %vm775, %v1204
    %1453 = vst.msk [vmem:[#allocation2 + $0x18] sm:$0xff] %vm775, %v1207
    %1454 = vst.msk [vmem:[#allocation2 + $0x20] sm:$0xff] %vm775, %v1212
    %1455 = vst.msk [vmem:[#allocation2 + $0x28] sm:$0xff] %vm775, %v1215
    %1456 = vst.msk [vmem:[#allocation2 + $0x30] sm:$0xff] %vm775, %v1220
    %1457 = vst.msk [vmem:[#allocation2 + $0x38] sm:$0xff] %vm775, %v1223
    %1458 = vst.msk [vmem:[#allocation2 + $0x40] sm:$0xff] %vm775, %v1228
    %1459 = vst.msk [vmem:[#allocation2 + $0x48] sm:$0xff] %vm775, %v1231
    %1460 = vst.msk [vmem:[#allocation2 + $0x50] sm:$0xff] %vm775, %v1236
    %1461 = vst.msk [vmem:[#allocation2 + $0x58] sm:$0xff] %vm775, %v1239
    %1462 = vst.msk [vmem:[#allocation2 + $0x60] sm:$0xff] %vm775, %v1244
    %1463 = vst.msk [vmem:[#allocation2 + $0x68] sm:$0xff] %vm775, %v1247
    %1464 = vst.msk [vmem:[#allocation2 + $0x70] sm:$0xff] %vm775, %v1252
    %1465 = vst.msk [vmem:[#allocation2 + $0x78] sm:$0xff] %vm775, %v1255
    %1466 = vst.msk [vmem:[#allocation2 + $0x80] sm:$0xff] %vm775, %v1260
    %1467 = vst.msk [vmem:[#allocation2 + $0x88] sm:$0xff] %vm775, %v1263
    %1468 = vst.msk [vmem:[#allocation2 + $0x90] sm:$0xff] %vm775, %v1268
    %1469 = vst.msk [vmem:[#allocation2 + $0x98] sm:$0xff] %vm775, %v1271
    %1470 = vst.msk [vmem:[#allocation2 + $0xa0] sm:$0xff] %vm775, %v1276
    %1471 = vst.msk [vmem:[#allocation2 + $0xa8] sm:$0xff] %vm775, %v1279
    %1472 = vst.msk [vmem:[#allocation2 + $0xb0] sm:$0xff] %vm775, %v1284
    %1473 = vst.msk [vmem:[#allocation2 + $0xb8] sm:$0xff] %vm775, %v1287
    %1474 = vst.msk [vmem:[#allocation2 + $0xc0] sm:$0xff] %vm775, %v1292
    %1475 = vst.msk [vmem:[#allocation2 + $0xc8] sm:$0xff] %vm775, %v1295
    %1476 = vst.msk [vmem:[#allocation2 + $0xd0] sm:$0xff] %vm775, %v1300
    %1477 = vst.msk [vmem:[#allocation2 + $0xd8] sm:$0xff] %vm775, %v1303
    %1478 = vst.msk [vmem:[#allocation2 + $0xe0] sm:$0xff] %vm775, %v1308
    %1479 = vst.msk [vmem:[#allocation2 + $0xe8] sm:$0xff] %vm775, %v1311
    %1480 = vst.msk [vmem:[#allocation2 + $0xf0] sm:$0xff] %vm775, %v1316
    %1481 = vst.msk [vmem:[#allocation2 + $0xf8] sm:$0xff] %vm775, %v1319
    %1482 = vst.msk [vmem:[#allocation2 + $0x100] sm:$0xff] %vm775, %v1324
    %1483 = vst.msk [vmem:[#allocation2 + $0x108] sm:$0xff] %vm775, %v1327
    %1484 = vst.msk [vmem:[#allocation2 + $0x110] sm:$0xff] %vm775, %v1332
    %1485 = vst.msk [vmem:[#allocation2 + $0x118] sm:$0xff] %vm775, %v1335
    %1486 = vst.msk [vmem:[#allocation2 + $0x120] sm:$0xff] %vm775, %v1340
    %1487 = vst.msk [vmem:[#allocation2 + $0x128] sm:$0xff] %vm775, %v1343
    %1488 = vst.msk [vmem:[#allocation2 + $0x130] sm:$0xff] %vm775, %v1348
    %1489 = vst.msk [vmem:[#allocation2 + $0x138] sm:$0xff] %vm775, %v1351
    %1490 = vst.msk [vmem:[#allocation2 + $0x140] sm:$0xff] %vm775, %v1356
    %1491 = vst.msk [vmem:[#allocation2 + $0x148] sm:$0xff] %vm775, %v1359
    %1492 = vst.msk [vmem:[#allocation2 + $0x150] sm:$0xff] %vm775, %v1364
    %1493 = vst.msk [vmem:[#allocation2 + $0x158] sm:$0xff] %vm775, %v1367
    %1494 = vst.msk [vmem:[#allocation2 + $0x160] sm:$0xff] %vm775, %v1372
    %1495 = vst.msk [vmem:[#allocation2 + $0x168] sm:$0xff] %vm775, %v1375
    %1496 = vst.msk [vmem:[#allocation2 + $0x170] sm:$0xff] %vm775, %v1380
    %1497 = vst.msk [vmem:[#allocation2 + $0x178] sm:$0xff] %vm775, %v1383
    %1498 = vst.msk [vmem:[#allocation2 + $0x180] sm:$0xff] %vm775, %v1388
    %1499 = vst.msk [vmem:[#allocation2 + $0x188] sm:$0xff] %vm775, %v1391
    %1500 = vst.msk [vmem:[#allocation2 + $0x190] sm:$0xff] %vm775, %v1396
    %1501 = vst.msk [vmem:[#allocation2 + $0x198] sm:$0xff] %vm775, %v1399
    %1502 = vst.msk [vmem:[#allocation2 + $0x1a0] sm:$0xff] %vm775, %v1404
    %1503 = vst.msk [vmem:[#allocation2 + $0x1a8] sm:$0xff] %vm775, %v1407
    %1504 = vst.msk [vmem:[#allocation2 + $0x1b0] sm:$0xff] %vm775, %v1412
    %1505 = vst.msk [vmem:[#allocation2 + $0x1b8] sm:$0xff] %vm775, %v1415
    %1506 = vst.msk [vmem:[#allocation2 + $0x1c0] sm:$0xff] %vm775, %v1420
    %1507 = vst.msk [vmem:[#allocation2 + $0x1c8] sm:$0xff] %vm775, %v1423
    %1508 = vst.msk [vmem:[#allocation2 + $0x1d0] sm:$0xff] %vm775, %v1428
    %1509 = vst.msk [vmem:[#allocation2 + $0x1d8] sm:$0xff] %vm775, %v1431
    %1510 = vst.msk [vmem:[#allocation2 + $0x1e0] sm:$0xff] %vm775, %v1436
    %1511 = vst.msk [vmem:[#allocation2 + $0x1e8] sm:$0xff] %vm775, %v1439
    %1512 = vst.msk [vmem:[#allocation2 + $0x1f0] sm:$0xff] %vm775, %v1444
    %1513 = vst.msk [vmem:[#allocation2 + $0x1f8] sm:$0xff] %vm775, %v1447
    // Predicated region
    $region14: #{pyramid_features_forward.13} parent=1 // pred_check
      _
    $region15: #{pyramid_features_forward.13} parent=1 // pred_check_branch
      %1515 = sbr.rel (0) target = $region17
    $region16: #{pyramid_features_forward.13} parent=1 // pred_region
      %s1517 = ssub.s32 8192, 8192
      %1518 = vsyncadd [#allocation3], %s1517
      %s1519 = sshll.u32 [#allocation2], 4
      %s1520 = int_to_ptr.vmem [resolvable:$true] %s1519
      %1525 = dma.vmem_to_hbm [thread:$0]  %s1520, 8192, %s3, [#allocation3], 128, 128, 8
    $region17: #{pyramid_features_forward.13} parent=1 // pred_fallthru
      _
    // Predicated region
    $region18: #{pyramid_features_forward.13} parent=1 // pred_check
      _
    $region19: #{pyramid_features_forward.13} parent=1 // pred_check_branch
      %1527 = sbr.rel (0) target = $region21
    $region20: #{pyramid_features_forward.13} parent=1 // pred_region
      %1528 = dma.done [#allocation3], 8192
    $region21: #{pyramid_features_forward.13} parent=1 // pred_fallthru
      _
    %1529 = vsyncpa [#allocation3], 1

// kernel: pyramid_features_forward.11
$region0: #{pyramid_features_forward.11}
  #allocation0 [shape = 'u32[]', space=smem, size = 0x4, offset = 0x4, fixed_abs, tag = 'smem constant byte address 0x4 - core index']
  #allocation1 [shape = 'u32[144,128]{1,0:T(1,128)}', space=vmem, size = 0x12000, scoped, tag = 'internal scratch']
  %s0 = inlined_call_operand.vmem [shape: bf16[128,288], index: 0, kind: input, shape index: {}]
  %s1 = inlined_call_operand.vmem [shape: bf16[288,32], index: 1, kind: input, shape index: {}]
  %s2 = inlined_call_operand.vmem [shape: f32[1,32], index: 2, kind: input, shape index: {}]
  %s3 = inlined_call_operand.hbm [shape: f32[128,32], index: 3, kind: output, shape index: {}]
  %s4 = sld [smem:[#allocation0]]
  $region22: #{pyramid_features_forward.11} parent=0
    _
  %s6 = ssub.s32 1, %s4
  %s7 = scalar_select 0, %s6, %s4
  $region1: #{pyramid_features_forward.11} parent=0
    #allocation2 [shape = 'u8[65536]{0}', space=vmem, size = 0x10000, scoped, tag = 'output window, operand 0, single buffered']
    #allocation3 [shape = 's32[1]{0}', space=sflag, size = 0x4, scoped, tag = 'scoped memory for pyramid_features_forward.11']
    %8 = vsyncpa [#allocation3], 0
    // Predicated region
    $region2: #{pyramid_features_forward.11} parent=1 // pred_check
      _
    $region3: #{pyramid_features_forward.11} parent=1 // pred_check_branch
      %10 = sbr.rel (0) target = $region5
    $region4: #{pyramid_features_forward.11} parent=1 // pred_region
      _
    $region5: #{pyramid_features_forward.11} parent=1 // pred_fallthru
      _
    // Predicated region
    $region6: #{pyramid_features_forward.11} parent=1 // pred_check
      _
    $region7: #{pyramid_features_forward.11} parent=1 // pred_check_branch
      %12 = sbr.rel (0) target = $region9
    $region8: #{pyramid_features_forward.11} parent=1 // pred_region
      _
    $region9: #{pyramid_features_forward.11} parent=1 // pred_fallthru
      _
    // Predicated region
    $region10: #{pyramid_features_forward.11} parent=1 // pred_check
      _
    $region11: #{pyramid_features_forward.11} parent=1 // pred_check_branch
      %14 = sbr.rel (0) target = $region13
    $region12: #{pyramid_features_forward.11} parent=1 // pred_region
      _
    $region13: #{pyramid_features_forward.11} parent=1 // pred_fallthru
      _
    %v16 = vld [vmem:[%s0] sm:$0xff]
    %v17 = vld [vmem:[%s0 + $0x8] sm:$0xf]
    %v18 = vld [vmem:[%s0 + $0xc] sm:$0xff]
    %v19 = vld [vmem:[%s0 + $0x14] sm:$0xf]
    %v20 = vld [vmem:[%s0 + $0x18] sm:$0xff]
    %v21 = vld [vmem:[%s0 + $0x20] sm:$0xf]
    %v22 = vld [vmem:[%s0 + $0x24] sm:$0xff]
    %v23 = vld [vmem:[%s0 + $0x2c] sm:$0xf]
    %v24 = vld [vmem:[%s0 + $0x30] sm:$0xff]
    %v25 = vld [vmem:[%s0 + $0x38] sm:$0xf]
    %v26 = vld [vmem:[%s0 + $0x3c] sm:$0xff]
    %v27 = vld [vmem:[%s0 + $0x44] sm:$0xf]
    %v28 = vld [vmem:[%s0 + $0x48] sm:$0xff]
    %v29 = vld [vmem:[%s0 + $0x50] sm:$0xf]
    %v30 = vld [vmem:[%s0 + $0x54] sm:$0xff]
    %v31 = vld [vmem:[%s0 + $0x5c] sm:$0xf]
    %v32 = vld [vmem:[%s0 + $0x60] sm:$0xff]
    %v33 = vld [vmem:[%s0 + $0x68] sm:$0xf]
    %v34 = vld [vmem:[%s0 + $0x6c] sm:$0xff]
    %v35 = vld [vmem:[%s0 + $0x74] sm:$0xf]
    %v36 = vld [vmem:[%s0 + $0x78] sm:$0xff]
    %v37 = vld [vmem:[%s0 + $0x80] sm:$0xf]
    %v38 = vld [vmem:[%s0 + $0x84] sm:$0xff]
    %v39 = vld [vmem:[%s0 + $0x8c] sm:$0xf]
    %v40 = vld [vmem:[%s0 + $0x90] sm:$0xff]
    %v41 = vld [vmem:[%s0 + $0x98] sm:$0xf]
    %v42 = vld [vmem:[%s0 + $0x9c] sm:$0xff]
    %v43 = vld [vmem:[%s0 + $0xa4] sm:$0xf]
    %v44 = vld [vmem:[%s0 + $0xa8] sm:$0xff]
    %v45 = vld [vmem:[%s0 + $0xb0] sm:$0xf]
    %v46 = vld [vmem:[%s0 + $0xb4] sm:$0xff]
    %v47 = vld [vmem:[%s0 + $0xbc] sm:$0xf]
    %v48 = vld [vmem:[%s1] sm:$0xf]
    %v49 = vld [vmem:[%s1 + $0x4] sm:$0xf]
    %v50 = vld [vmem:[%s1 + $0x8] sm:$0xf]
    %v51 = vld [vmem:[%s1 + $0xc] sm:$0xf]
    %v52 = vld [vmem:[%s1 + $0x10] sm:$0xf]
    %v53 = vld [vmem:[%s1 + $0x14] sm:$0xf]
    %v54 = vld [vmem:[%s1 + $0x18] sm:$0xf]
    %v55 = vld [vmem:[%s1 + $0x1c] sm:$0xf]
    %v56 = vld [vmem:[%s1 + $0x20] sm:$0xf]
    %v57 = vld [vmem:[%s1 + $0x24] sm:$0xf]
    %v58 = vld [vmem:[%s1 + $0x28] sm:$0xf]
    %v59 = vld [vmem:[%s1 + $0x2c] sm:$0xf]
    %v60 = vld [vmem:[%s1 + $0x30] sm:$0xf]
    %v61 = vld [vmem:[%s1 + $0x34] sm:$0xf]
    %v62 = vld [vmem:[%s1 + $0x38] sm:$0xf]
    %v63 = vld [vmem:[%s1 + $0x3c] sm:$0xf]
    %v64 = vld [vmem:[%s1 + $0x40] sm:$0xf]
    %v65 = vld [vmem:[%s1 + $0x44] sm:$0xf]
    %v66 = vld [vmem:[%s1 + $0x48] sm:$0xf]
    %v67 = vld [vmem:[%s1 + $0x4c] sm:$0xf]
    %v68 = vld [vmem:[%s1 + $0x50] sm:$0xf]
    %v69 = vld [vmem:[%s1 + $0x54] sm:$0xf]
    %v70 = vld [vmem:[%s1 + $0x58] sm:$0xf]
    %v71 = vld [vmem:[%s1 + $0x5c] sm:$0xf]
    %v72 = vld [vmem:[%s1 + $0x60] sm:$0xf]
    %v73 = vld [vmem:[%s1 + $0x64] sm:$0xf]
    %v74 = vld [vmem:[%s1 + $0x68] sm:$0xf]
    %v75 = vld [vmem:[%s1 + $0x6c] sm:$0xf]
    %v76 = vld [vmem:[%s1 + $0x70] sm:$0xf]
    %v77 = vld [vmem:[%s1 + $0x74] sm:$0xf]
    %v78 = vld [vmem:[%s1 + $0x78] sm:$0xf]
    %v79 = vld [vmem:[%s1 + $0x7c] sm:$0xf]
    %v80 = vld [vmem:[%s1 + $0x80] sm:$0xf]
    %v81 = vld [vmem:[%s1 + $0x84] sm:$0xf]
    %v82 = vld [vmem:[%s1 + $0x88] sm:$0xf]
    %v83 = vld [vmem:[%s1 + $0x8c] sm:$0xf]
    %v84 = vld [vmem:[%s2] sm:$0x1]
    %v86 = vlaneseq
    %v87 = vshrl.u32 %v86, 7
    %v88 = vsub.s32 0, %v87
    %v89 = vrot.slane %v84, %v88
    %v123 = vunpack.c.l.b16 %v16
    %v124 = vunpack.c.h.b16 %v16
    %v125 = vunpack.c.l.b16 %v17
    %v126 = vunpack.c.l.b16 %v18
    %v127 = vunpack.c.h.b16 %v18
    %v128 = vunpack.c.l.b16 %v19
    %v129 = vunpack.c.l.b16 %v20
    %v130 = vunpack.c.h.b16 %v20
    %v131 = vunpack.c.l.b16 %v21
    %v132 = vunpack.c.l.b16 %v22
    %v133 = vunpack.c.h.b16 %v22
    %v134 = vunpack.c.l.b16 %v23
    %v135 = vunpack.c.l.b16 %v24
    %v136 = vunpack.c.h.b16 %v24
    %v137 = vunpack.c.l.b16 %v25
    %v138 = vunpack.c.l.b16 %v26
    %v139 = vunpack.c.h.b16 %v26
    %v140 = vunpack.c.l.b16 %v27
    %v141 = vunpack.c.l.b16 %v28
    %v142 = vunpack.c.h.b16 %v28
    %v143 = vunpack.c.l.b16 %v29
    %v144 = vunpack.c.l.b16 %v30
    %v145 = vunpack.c.h.b16 %v30
    %v146 = vunpack.c.l.b16 %v31
    %v147 = vunpack.c.l.b16 %v32
    %v148 = vunpack.c.h.b16 %v32
    %v149 = vunpack.c.l.b16 %v33
    %v150 = vunpack.c.l.b16 %v34
    %v151 = vunpack.c.h.b16 %v34
    %v152 = vunpack.c.l.b16 %v35
    %v153 = vunpack.c.l.b16 %v36
    %v154 = vunpack.c.h.b16 %v36
    %v155 = vunpack.c.l.b16 %v37
    %v156 = vunpack.c.l.b16 %v38
    %v157 = vunpack.c.h.b16 %v38
    %v158 = vunpack.c.l.b16 %v39
    %v159 = vunpack.c.l.b16 %v40
    %v160 = vunpack.c.h.b16 %v40
    %v161 = vunpack.c.l.b16 %v41
    %v162 = vunpack.c.l.b16 %v42
    %v163 = vunpack.c.h.b16 %v42
    %v164 = vunpack.c.l.b16 %v43
    %v165 = vunpack.c.l.b16 %v44
    %v166 = vunpack.c.h.b16 %v44
    %v167 = vunpack.c.l.b16 %v45
    %v168 = vunpack.c.l.b16 %v46
    %v169 = vunpack.c.h.b16 %v46
    %v170 = vunpack.c.l.b16 %v47
    %v171 = vpack.c.b16 %v126, %v123
    %v172 = vpack.c.b16 %v127, %v124
    %v173 = vpack.c.b16 %v128, %v125
    %v174 = vpack.c.b16 %v132, %v129
    %v175 = vpack.c.b16 %v133, %v130
    %v176 = vpack.c.b16 %v134, %v131
    %v177 = vpack.c.b16 %v138, %v135
    %v178 = vpack.c.b16 %v139, %v136
    %v179 = vpack.c.b16 %v140, %v137
    %v180 = vpack.c.b16 %v144, %v141
    %v181 = vpack.c.b16 %v145, %v142
    %v182 = vpack.c.b16 %v146, %v143
    %v183 = vpack.c.b16 %v150, %v147
    %v184 = vpack.c.b16 %v151, %v148
    %v185 = vpack.c.b16 %v152, %v149
    %v186 = vpack.c.b16 %v156, %v153
    %v187 = vpack.c.b16 %v157, %v154
    %v188 = vpack.c.b16 %v158, %v155
    %v189 = vpack.c.b16 %v162, %v159
    %v190 = vpack.c.b16 %v163, %v160
    %v191 = vpack.c.b16 %v164, %v161
    %v192 = vpack.c.b16 %v168, %v165
    %v193 = vpack.c.b16 %v169, %v166
    %v194 = vpack.c.b16 %v170, %v167
    %v247 = vunpack.c.l.b16 %v48
    %v248 = vunpack.c.l.b16 %v49
    %v249 = vunpack.c.l.b16 %v50
    %v250 = vunpack.c.l.b16 %v51
    %v251 = vunpack.c.l.b16 %v52
    %v252 = vunpack.c.l.b16 %v53
    %v253 = vunpack.c.l.b16 %v54
    %v254 = vunpack.c.l.b16 %v55
    %v255 = vunpack.c.l.b16 %v56
    %v256 = vunpack.c.l.b16 %v57
    %v257 = vunpack.c.l.b16 %v58
    %v258 = vunpack.c.l.b16 %v59
    %v259 = vunpack.c.l.b16 %v60
    %v260 = vunpack.c.l.b16 %v61
    %v261 = vunpack.c.l.b16 %v62
    %v262 = vunpack.c.l.b16 %v63
    %v263 = vunpack.c.l.b16 %v64
    %v264 = vunpack.c.l.b16 %v65
    %v265 = vunpack.c.l.b16 %v66
    %v266 = vunpack.c.l.b16 %v67
    %v267 = vunpack.c.l.b16 %v68
    %v268 = vunpack.c.l.b16 %v69
    %v269 = vunpack.c.l.b16 %v70
    %v270 = vunpack.c.l.b16 %v71
    %v271 = vunpack.c.l.b16 %v72
    %v272 = vunpack.c.l.b16 %v73
    %v273 = vunpack.c.l.b16 %v74
    %v274 = vunpack.c.l.b16 %v75
    %v275 = vunpack.c.l.b16 %v76
    %v276 = vunpack.c.l.b16 %v77
    %v277 = vunpack.c.l.b16 %v78
    %v278 = vunpack.c.l.b16 %v79
    %v279 = vunpack.c.l.b16 %v80
    %v280 = vunpack.c.l.b16 %v81
    %v281 = vunpack.c.l.b16 %v82
    %v282 = vunpack.c.l.b16 %v83
    %v283 = vpack.c.b16 %v248, %v247
    %v284 = vpack.c.b16 %v250, %v249
    %v285 = vpack.c.b16 %v252, %v251
    %v286 = vpack.c.b16 %v254, %v253
    %v287 = vpack.c.b16 %v256, %v255
    %v288 = vpack.c.b16 %v258, %v257
    %v289 = vpack.c.b16 %v260, %v259
    %v290 = vpack.c.b16 %v262, %v261
    %v291 = vpack.c.b16 %v264, %v263
    %v292 = vpack.c.b16 %v266, %v265
    %v293 = vpack.c.b16 %v268, %v267
    %v294 = vpack.c.b16 %v270, %v269
    %v295 = vpack.c.b16 %v272, %v271
    %v296 = vpack.c.b16 %v274, %v273
    %v297 = vpack.c.b16 %v276, %v275
    %v298 = vpack.c.b16 %v278, %v277
    %v299 = vpack.c.b16 %v280, %v279
    %v300 = vpack.c.b16 %v282, %v281
    %vm319 = vcmask 261120
    %v321 = vsel %vm319, %v173, 0
    %v324 = vsel %vm319, %v176, 0
    %v327 = vsel %vm319, %v179, 0
    %v330 = vsel %vm319, %v182, 0
    %v333 = vsel %vm319, %v185, 0
    %v336 = vsel %vm319, %v188, 0
    %v339 = vsel %vm319, %v191, 0
    %v342 = vsel %vm319, %v194, 0
    %344 = vmatprep.subr.bf16.mxu0 0
    %345 = vmatpush1.bf16.msra.mxu0 %v290
    %346 = vmatprep.subr.bf16.mxu0 0
    %347 = vmatpush1.bf16.msra.mxu0 %v289
    %348 = vmatprep.subr.bf16.mxu0 0
    %349 = vmatpush1.bf16.msra.mxu0 %v288
    %350 = vmatprep.subr.bf16.mxu0 0
    %351 = vmatpush1.bf16.msra.mxu0 %v287
    %352 = vmatprep.subr.bf16.mxu0 0
    %353 = vmatpush1.bf16.msra.mxu0 %v286
    %354 = vmatprep.subr.bf16.mxu0 0
    %355 = vmatpush1.bf16.msra.mxu0 %v285
    %356 = vmatprep.subr.bf16.mxu0 0
    %357 = vmatpush1.bf16.msra.mxu0 %v284
    %358 = vmatprep.subr.bf16.mxu0 0
    %359 = vmatpush1.bf16.msra.mxu0 %v283
    %360 = vmatprep.subr.bf16.mxu0 0
    %361 = vmatpush2.bf16.msra.mxu0 %v298
    %362 = vmatprep.subr.bf16.mxu0 0
    %363 = vmatpush2.bf16.msra.mxu0 %v297
    %364 = vmatprep.subr.bf16.mxu0 0
    %365 = vmatpush2.bf16.msra.mxu0 %v296
    %366 = vmatprep.subr.bf16.mxu0 0
    %367 = vmatpush2.bf16.msra.mxu0 %v295
    %368 = vmatprep.subr.bf16.mxu0 0
    %369 = vmatpush2.bf16.msra.mxu0 %v294
    %370 = vmatprep.subr.bf16.mxu0 0
    %371 = vmatpush2.bf16.msra.mxu0 %v293
    %372 = vmatprep.subr.bf16.mxu0 0
    %373 = vmatpush2.bf16.msra.mxu0 %v292
    %374 = vmatprep.subr.bf16.mxu0 0
    %375 = vmatpush2.bf16.msra.mxu0 %v291
    %376 = vmatprep.mubr.bf16.mxu0 %v172
    %377 = vmatmul.mubr.bf16.gmra.mxu0 %v171
    %v378 = vpop.f32.mrf.mxu0
    %v379 = vadd.f32 %v89, %v378
    %v380 = vpop.f32.mrf.mxu0
    %v381 = vpop.f32.mrf.mxu0
    %v382 = vadd.f32 %v89, %v381
    %v383 = vpop.f32.mrf.mxu0
    %384 = vmatprep.mubr.bf16.mxu0 %v175
    %385 = vmatmul.mubr.bf16.gmra.mxu0 %v174
    %v386 = vpop.f32.mrf.mxu0
    %v387 = vadd.f32 %v89, %v386
    %v388 = vpop.f32.mrf.mxu0
    %v389 = vpop.f32.mrf.mxu0
    %v390 = vadd.f32 %v89, %v389
    %v391 = vpop.f32.mrf.mxu0
    %392 = vmatprep.mubr.bf16.mxu0 %v178
    %393 = vmatmul.mubr.bf16.gmra.mxu0 %v177
    %v394 = vpop.f32.mrf.mxu0
    %v395 = vadd.f32 %v89, %v394
    %v396 = vpop.f32.mrf.mxu0
    %v397 = vpop.f32.mrf.mxu0
    %v398 = vadd.f32 %v89, %v397
    %v399 = vpop.f32.mrf.mxu0
    %400 = vmatprep.mubr.bf16.mxu0 %v181
    %401 = vmatmul.mubr.bf16.gmra.mxu0 %v180
    %v402 = vpop.f32.mrf.mxu0
    %v403 = vadd.f32 %v89, %v402
    %v404 = vpop.f32.mrf.mxu0
    %v405 = vpop.f32.mrf.mxu0
    %v406 = vadd.f32 %v89, %v405
    %v407 = vpop.f32.mrf.mxu0
    %408 = vmatprep.mubr.bf16.mxu0 %v184
    %409 = vmatmul.mubr.bf16.gmra.mxu0 %v183
    %v410 = vpop.f32.mrf.mxu0
    %v411 = vadd.f32 %v89, %v410
    %v412 = vpop.f32.mrf.mxu0
    %v413 = vpop.f32.mrf.mxu0
    %v414 = vadd.f32 %v89, %v413
    %v415 = vpop.f32.mrf.mxu0
    %416 = vmatprep.mubr.bf16.mxu0 %v187
    %417 = vmatmul.mubr.bf16.gmra.mxu0 %v186
    %v418 = vpop.f32.mrf.mxu0
    %v419 = vadd.f32 %v89, %v418
    %v420 = vpop.f32.mrf.mxu0
    %v421 = vpop.f32.mrf.mxu0
    %v422 = vadd.f32 %v89, %v421
    %v423 = vpop.f32.mrf.mxu0
    %424 = vmatprep.mubr.bf16.mxu0 %v190
    %425 = vmatmul.mubr.bf16.gmra.mxu0 %v189
    %v426 = vpop.f32.mrf.mxu0
    %v427 = vadd.f32 %v89, %v426
    %v428 = vpop.f32.mrf.mxu0
    %v429 = vpop.f32.mrf.mxu0
    %v430 = vadd.f32 %v89, %v429
    %v431 = vpop.f32.mrf.mxu0
    %432 = vmatprep.mubr.bf16.mxu0 %v193
    %433 = vmatmul.mubr.bf16.gmra.mxu0 %v192
    %v434 = vpop.f32.mrf.mxu0
    %v435 = vadd.f32 %v89, %v434
    %v436 = vpop.f32.mrf.mxu0
    %v437 = vpop.f32.mrf.mxu0
    %v438 = vadd.f32 %v89, %v437
    %v439 = vpop.f32.mrf.mxu0
    %440 = vdwg.mxu0
    %441 = vmatprep.subr.bf16.mxu0 0
    %442 = vmatpush1.bf16.msra.mxu0 0
    %443 = vmatprep.subr.bf16.mxu0 0
    %444 = vmatpush1.bf16.msra.mxu0 0
    %445 = vmatprep.subr.bf16.mxu0 0
    %446 = vmatpush1.bf16.msra.mxu0 0
    %447 = vmatprep.subr.bf16.mxu0 0
    %448 = vmatpush1.bf16.msra.mxu0 0
    %449 = vmatprep.subr.bf16.mxu0 0
    %450 = vmatpush1.bf16.msra.mxu0 0
    %451 = vmatprep.subr.bf16.mxu0 0
    %452 = vmatpush1.bf16.msra.mxu0 0
    %453 = vmatprep.subr.bf16.mxu0 0
    %454 = vmatpush1.bf16.msra.mxu0 %v300
    %455 = vmatprep.subr.bf16.mxu0 0
    %456 = vmatpush1.bf16.msra.mxu0 %v299
    %457 = vmatprep.subr.bf16.mxu0 0
    %458 = vmatpush2.bf16.msra.mxu0 0
    %459 = vmatprep.subr.bf16.mxu0 0
    %460 = vmatpush2.bf16.msra.mxu0 0
    %461 = vmatprep.subr.bf16.mxu0 0
    %462 = vmatpush2.bf16.msra.mxu0 0
    %463 = vmatprep.subr.bf16.mxu0 0
    %464 = vmatpush2.bf16.msra.mxu0 0
    %465 = vmatprep.subr.bf16.mxu0 0
    %466 = vmatpush2.bf16.msra.mxu0 0
    %467 = vmatprep.subr.bf16.mxu0 0
    %468 = vmatpush2.bf16.msra.mxu0 0
    %469 = vmatprep.subr.bf16.mxu0 0
    %470 = vmatpush2.bf16.msra.mxu0 0
    %471 = vmatprep.subr.bf16.mxu0 0
    %472 = vmatpush2.bf16.msra.mxu0 0
    %473 = vmatprep.mubr.bf16.mxu0 0
    %474 = vmatmul.mubr.bf16.gmra.mxu0 %v321
    %v475 = vpop.f32.mrf.mxu0
    %v476 = vadd.f32 %v379, %v475
    %v477 = vpop.f32.mrf.mxu0
    %v478 = vpop.f32.mrf.mxu0
    %v479 = vadd.f32 %v382, %v478
    %v480 = vpop.f32.mrf.mxu0
    %481 = vmatprep.mubr.bf16.mxu0 0
    %482 = vmatmul.mubr.bf16.gmra.mxu0 %v324
    %v483 = vpop.f32.mrf.mxu0
    %v484 = vadd.f32 %v387, %v483
    %v485 = vpop.f32.mrf.mxu0
    %v486 = vpop.f32.mrf.mxu0
    %v487 = vadd.f32 %v390, %v486
    %v488 = vpop.f32.mrf.mxu0
    %489 = vmatprep.mubr.bf16.mxu0 0
    %490 = vmatmul.mubr.bf16.gmra.mxu0 %v327
    %v491 = vpop.f32.mrf.mxu0
    %v492 = vadd.f32 %v395, %v491
    %v493 = vpop.f32.mrf.mxu0
    %v494 = vpop.f32.mrf.mxu0
    %v495 = vadd.f32 %v398, %v494
    %v496 = vpop.f32.mrf.mxu0
    %497 = vmatprep.mubr.bf16.mxu0 0
    %498 = vmatmul.mubr.bf16.gmra.mxu0 %v330
    %v499 = vpop.f32.mrf.mxu0
    %v500 = vadd.f32 %v403, %v499
    %v501 = vpop.f32.mrf.mxu0
    %v502 = vpop.f32.mrf.mxu0
    %v503 = vadd.f32 %v406, %v502
    %v504 = vpop.f32.mrf.mxu0
    %505 = vmatprep.mubr.bf16.mxu0 0
    %506 = vmatmul.mubr.bf16.gmra.mxu0 %v333
    %v507 = vpop.f32.mrf.mxu0
    %v508 = vadd.f32 %v411, %v507
    %v509 = vpop.f32.mrf.mxu0
    %v510 = vpop.f32.mrf.mxu0
    %v511 = vadd.f32 %v414, %v510
    %v512 = vpop.f32.mrf.mxu0
    %513 = vmatprep.mubr.bf16.mxu0 0
    %514 = vmatmul.mubr.bf16.gmra.mxu0 %v336
    %v515 = vpop.f32.mrf.mxu0
    %v516 = vadd.f32 %v419, %v515
    %v517 = vpop.f32.mrf.mxu0
    %v518 = vpop.f32.mrf.mxu0
    %v519 = vadd.f32 %v422, %v518
    %v520 = vpop.f32.mrf.mxu0
    %521 = vmatprep.mubr.bf16.mxu0 0
    %522 = vmatmul.mubr.bf16.gmra.mxu0 %v339
    %v523 = vpop.f32.mrf.mxu0
    %v524 = vadd.f32 %v427, %v523
    %v525 = vpop.f32.mrf.mxu0
    %v526 = vpop.f32.mrf.mxu0
    %v527 = vadd.f32 %v430, %v526
    %v528 = vpop.f32.mrf.mxu0
    %529 = vmatprep.mubr.bf16.mxu0 0
    %530 = vmatmul.mubr.bf16.gmra.mxu0 %v342
    %v531 = vpop.f32.mrf.mxu0
    %v532 = vadd.f32 %v435, %v531
    %v533 = vpop.f32.mrf.mxu0
    %v534 = vpop.f32.mrf.mxu0
    %v535 = vadd.f32 %v438, %v534
    %v536 = vpop.f32.mrf.mxu0
    %537 = vdwg.mxu0
    %538 = vst.msk [vmem:[#allocation2] sm:$0xff] %vm319, %v476
    %539 = vst.msk [vmem:[#allocation2 + $0x8] sm:$0xff] %vm319, %v479
    %540 = vst.msk [vmem:[#allocation2 + $0x10] sm:$0xff] %vm319, %v484
    %541 = vst.msk [vmem:[#allocation2 + $0x18] sm:$0xff] %vm319, %v487
    %542 = vst.msk [vmem:[#allocation2 + $0x20] sm:$0xff] %vm319, %v492
    %543 = vst.msk [vmem:[#allocation2 + $0x28] sm:$0xff] %vm319, %v495
    %544 = vst.msk [vmem:[#allocation2 + $0x30] sm:$0xff] %vm319, %v500
    %545 = vst.msk [vmem:[#allocation2 + $0x38] sm:$0xff] %vm319, %v503
    %546 = vst.msk [vmem:[#allocation2 + $0x40] sm:$0xff] %vm319, %v508
    %547 = vst.msk [vmem:[#allocation2 + $0x48] sm:$0xff] %vm319, %v511
    %548 = vst.msk [vmem:[#allocation2 + $0x50] sm:$0xff] %vm319, %v516
    %549 = vst.msk [vmem:[#allocation2 + $0x58] sm:$0xff] %vm319, %v519
    %550 = vst.msk [vmem:[#allocation2 + $0x60] sm:$0xff] %vm319, %v524
    %551 = vst.msk [vmem:[#allocation2 + $0x68] sm:$0xff] %vm319, %v527
    %552 = vst.msk [vmem:[#allocation2 + $0x70] sm:$0xff] %vm319, %v532
    %553 = vst.msk [vmem:[#allocation2 + $0x78] sm:$0xff] %vm319, %v535
    // Predicated region
    $region14: #{pyramid_features_forward.11} parent=1 // pred_check
      _
    $region15: #{pyramid_features_forward.11} parent=1 // pred_check_branch
      %555 = sbr.rel (0) target = $region17
    $region16: #{pyramid_features_forward.11} parent=1 // pred_region
      %s557 = ssub.s32 2048, 2048
      %558 = vsyncadd [#allocation3], %s557
      %s559 = sshll.u32 [#allocation2], 4
      %s560 = int_to_ptr.vmem [resolvable:$true] %s559
      %565 = dma.vmem_to_hbm [thread:$0]  %s560, 2048, %s3, [#allocation3], 128, 128, 8
    $region17: #{pyramid_features_forward.11} parent=1 // pred_fallthru
      _
    // Predicated region
    $region18: #{pyramid_features_forward.11} parent=1 // pred_check
      _
    $region19: #{pyramid_features_forward.11} parent=1 // pred_check_branch
      %567 = sbr.rel (0) target = $region21
    $region20: #{pyramid_features_forward.11} parent=1 // pred_region
      %568 = dma.done [#allocation3], 2048
    $region21: #{pyramid_features_forward.11} parent=1 // pred_fallthru
      _
    %569 = vsyncpa [#allocation3], 1

// kernel: pyramid_features_forward.9
$region0: #{pyramid_features_forward.9}
  #allocation0 [shape = 'u32[]', space=smem, size = 0x4, offset = 0x4, fixed_abs, tag = 'smem constant byte address 0x4 - core index']
  #allocation1 [shape = 'u32[144,128]{1,0:T(1,128)}', space=vmem, size = 0x12000, scoped, tag = 'internal scratch']
  %s0 = inlined_call_operand.vmem [shape: bf16[32,288], index: 0, kind: input, shape index: {}]
  %s1 = inlined_call_operand.vmem [shape: bf16[288,32], index: 1, kind: input, shape index: {}]
  %s2 = inlined_call_operand.vmem [shape: f32[1,32], index: 2, kind: input, shape index: {}]
  %s3 = inlined_call_operand.hbm [shape: f32[32,32], index: 3, kind: output, shape index: {}]
  %s4 = sld [smem:[#allocation0]]
  $region22: #{pyramid_features_forward.9} parent=0
    _
  %s6 = ssub.s32 1, %s4
  %s7 = scalar_select 0, %s6, %s4
  $region1: #{pyramid_features_forward.9} parent=0
    #allocation2 [shape = 'u8[16384]{0}', space=vmem, size = 0x4000, scoped, tag = 'output window, operand 0, single buffered']
    #allocation3 [shape = 's32[1]{0}', space=sflag, size = 0x4, scoped, tag = 'scoped memory for pyramid_features_forward.9']
    %8 = vsyncpa [#allocation3], 0
    // Predicated region
    $region2: #{pyramid_features_forward.9} parent=1 // pred_check
      _
    $region3: #{pyramid_features_forward.9} parent=1 // pred_check_branch
      %10 = sbr.rel (0) target = $region5
    $region4: #{pyramid_features_forward.9} parent=1 // pred_region
      _
    $region5: #{pyramid_features_forward.9} parent=1 // pred_fallthru
      _
    // Predicated region
    $region6: #{pyramid_features_forward.9} parent=1 // pred_check
      _
    $region7: #{pyramid_features_forward.9} parent=1 // pred_check_branch
      %12 = sbr.rel (0) target = $region9
    $region8: #{pyramid_features_forward.9} parent=1 // pred_region
      _
    $region9: #{pyramid_features_forward.9} parent=1 // pred_fallthru
      _
    // Predicated region
    $region10: #{pyramid_features_forward.9} parent=1 // pred_check
      _
    $region11: #{pyramid_features_forward.9} parent=1 // pred_check_branch
      %14 = sbr.rel (0) target = $region13
    $region12: #{pyramid_features_forward.9} parent=1 // pred_region
      _
    $region13: #{pyramid_features_forward.9} parent=1 // pred_fallthru
      _
    %v16 = vld [vmem:[%s0] sm:$0xff]
    %v17 = vld [vmem:[%s0 + $0x8] sm:$0xf]
    %v18 = vld [vmem:[%s0 + $0xc] sm:$0xff]
    %v19 = vld [vmem:[%s0 + $0x14] sm:$0xf]
    %v20 = vld [vmem:[%s0 + $0x18] sm:$0xff]
    %v21 = vld [vmem:[%s0 + $0x20] sm:$0xf]
    %v22 = vld [vmem:[%s0 + $0x24] sm:$0xff]
    %v23 = vld [vmem:[%s0 + $0x2c] sm:$0xf]
    %v24 = vld [vmem:[%s1] sm:$0xf]
    %v25 = vld [vmem:[%s1 + $0x4] sm:$0xf]
    %v26 = vld [vmem:[%s1 + $0x8] sm:$0xf]
    %v27 = vld [vmem:[%s1 + $0xc] sm:$0xf]
    %v28 = vld [vmem:[%s1 + $0x10] sm:$0xf]
    %v29 = vld [vmem:[%s1 + $0x14] sm:$0xf]
    %v30 = vld [vmem:[%s1 + $0x18] sm:$0xf]
    %v31 = vld [vmem:[%s1 + $0x1c] sm:$0xf]
    %v32 = vld [vmem:[%s1 + $0x20] sm:$0xf]
    %v33 = vld [vmem:[%s1 + $0x24] sm:$0xf]
    %v34 = vld [vmem:[%s1 + $0x28] sm:$0xf]
    %v35 = vld [vmem:[%s1 + $0x2c] sm:$0xf]
    %v36 = vld [vmem:[%s1 + $0x30] sm:$0xf]
    %v37 = vld [vmem:[%s1 + $0x34] sm:$0xf]
    %v38 = vld [vmem:[%s1 + $0x38] sm:$0xf]
    %v39 = vld [vmem:[%s1 + $0x3c] sm:$0xf]
    %v40 = vld [vmem:[%s1 + $0x40] sm:$0xf]
    %v41 = vld [vmem:[%s1 + $0x44] sm:$0xf]
    %v42 = vld [vmem:[%s1 + $0x48] sm:$0xf]
    %v43 = vld [vmem:[%s1 + $0x4c] sm:$0xf]
    %v44 = vld [vmem:[%s1 + $0x50] sm:$0xf]
    %v45 = vld [vmem:[%s1 + $0x54] sm:$0xf]
    %v46 = vld [vmem:[%s1 + $0x58] sm:$0xf]
    %v47 = vld [vmem:[%s1 + $0x5c] sm:$0xf]
    %v48 = vld [vmem:[%s1 + $0x60] sm:$0xf]
    %v49 = vld [vmem:[%s1 + $0x64] sm:$0xf]
    %v50 = vld [vmem:[%s1 + $0x68] sm:$0xf]
    %v51 = vld [vmem:[%s1 + $0x6c] sm:$0xf]
    %v52 = vld [vmem:[%s1 + $0x70] sm:$0xf]
    %v53 = vld [vmem:[%s1 + $0x74] sm:$0xf]
    %v54 = vld [vmem:[%s1 + $0x78] sm:$0xf]
    %v55 = vld [vmem:[%s1 + $0x7c] sm:$0xf]
    %v56 = vld [vmem:[%s1 + $0x80] sm:$0xf]
    %v57 = vld [vmem:[%s1 + $0x84] sm:$0xf]
    %v58 = vld [vmem:[%s1 + $0x88] sm:$0xf]
    %v59 = vld [vmem:[%s1 + $0x8c] sm:$0xf]
    %v60 = vld [vmem:[%s2] sm:$0x1]
    %v62 = vlaneseq
    %v63 = vshrl.u32 %v62, 7
    %v64 = vsub.s32 0, %v63
    %v65 = vrot.slane %v60, %v64
    %v75 = vunpack.c.l.b16 %v16
    %v76 = vunpack.c.h.b16 %v16
    %v77 = vunpack.c.l.b16 %v17
    %v78 = vunpack.c.l.b16 %v18
    %v79 = vunpack.c.h.b16 %v18
    %v80 = vunpack.c.l.b16 %v19
    %v81 = vunpack.c.l.b16 %v20
    %v82 = vunpack.c.h.b16 %v20
    %v83 = vunpack.c.l.b16 %v21
    %v84 = vunpack.c.l.b16 %v22
    %v85 = vunpack.c.h.b16 %v22
    %v86 = vunpack.c.l.b16 %v23
    %v87 = vpack.c.b16 %v78, %v75
    %v88 = vpack.c.b16 %v79, %v76
    %v89 = vpack.c.b16 %v80, %v77
    %v90 = vpack.c.b16 %v84, %v81
    %v91 = vpack.c.b16 %v85, %v82
    %v92 = vpack.c.b16 %v86, %v83
    %v133 = vunpack.c.l.b16 %v24
    %v134 = vunpack.c.l.b16 %v25
    %v135 = vunpack.c.l.b16 %v26
    %v136 = vunpack.c.l.b16 %v27
    %v137 = vunpack.c.l.b16 %v28
    %v138 = vunpack.c.l.b16 %v29
    %v139 = vunpack.c.l.b16 %v30
    %v140 = vunpack.c.l.b16 %v31
    %v141 = vunpack.c.l.b16 %v32
    %v142 = vunpack.c.l.b16 %v33
    %v143 = vunpack.c.l.b16 %v34
    %v144 = vunpack.c.l.b16 %v35
    %v145 = vunpack.c.l.b16 %v36
    %v146 = vunpack.c.l.b16 %v37
    %v147 = vunpack.c.l.b16 %v38
    %v148 = vunpack.c.l.b16 %v39
    %v149 = vunpack.c.l.b16 %v40
    %v150 = vunpack.c.l.b16 %v41
    %v151 = vunpack.c.l.b16 %v42
    %v152 = vunpack.c.l.b16 %v43
    %v153 = vunpack.c.l.b16 %v44
    %v154 = vunpack.c.l.b16 %v45
    %v155 = vunpack.c.l.b16 %v46
    %v156 = vunpack.c.l.b16 %v47
    %v157 = vunpack.c.l.b16 %v48
    %v158 = vunpack.c.l.b16 %v49
    %v159 = vunpack.c.l.b16 %v50
    %v160 = vunpack.c.l.b16 %v51
    %v161 = vunpack.c.l.b16 %v52
    %v162 = vunpack.c.l.b16 %v53
    %v163 = vunpack.c.l.b16 %v54
    %v164 = vunpack.c.l.b16 %v55
    %v165 = vunpack.c.l.b16 %v56
    %v166 = vunpack.c.l.b16 %v57
    %v167 = vunpack.c.l.b16 %v58
    %v168 = vunpack.c.l.b16 %v59
    %v169 = vpack.c.b16 %v134, %v133
    %v170 = vpack.c.b16 %v136, %v135
    %v171 = vpack.c.b16 %v138, %v137
    %v172 = vpack.c.b16 %v140, %v139
    %v173 = vpack.c.b16 %v142, %v141
    %v174 = vpack.c.b16 %v144, %v143
    %v175 = vpack.c.b16 %v146, %v145
    %v176 = vpack.c.b16 %v148, %v147
    %v177 = vpack.c.b16 %v150, %v149
    %v178 = vpack.c.b16 %v152, %v151
    %v179 = vpack.c.b16 %v154, %v153
    %v180 = vpack.c.b16 %v156, %v155
    %v181 = vpack.c.b16 %v158, %v157
    %v182 = vpack.c.b16 %v160, %v159
    %v183 = vpack.c.b16 %v162, %v161
    %v184 = vpack.c.b16 %v164, %v163
    %v185 = vpack.c.b16 %v166, %v165
    %v186 = vpack.c.b16 %v168, %v167
    %vm205 = vcmask 261120
    %v207 = vsel %vm205, %v89, 0
    %v210 = vsel %vm205, %v92, 0
    %212 = vmatprep.subr.bf16.mxu0 0
    %213 = vmatpush1.bf16.msra.mxu0 %v176
    %214 = vmatprep.subr.bf16.mxu0 0
    %215 = vmatpush1.bf16.msra.mxu0 %v175
    %216 = vmatprep.subr.bf16.mxu0 0
    %217 = vmatpush1.bf16.msra.mxu0 %v174
    %218 = vmatprep.subr.bf16.mxu0 0
    %219 = vmatpush1.bf16.msra.mxu0 %v173
    %220 = vmatprep.subr.bf16.mxu0 0
    %221 = vmatpush1.bf16.msra.mxu0 %v172
    %222 = vmatprep.subr.bf16.mxu0 0
    %223 = vmatpush1.bf16.msra.mxu0 %v171
    %224 = vmatprep.subr.bf16.mxu0 0
    %225 = vmatpush1.bf16.msra.mxu0 %v170
    %226 = vmatprep.subr.bf16.mxu0 0
    %227 = vmatpush1.bf16.msra.mxu0 %v169
    %228 = vmatprep.subr.bf16.mxu0 0
    %229 = vmatpush2.bf16.msra.mxu0 %v184
    %230 = vmatprep.subr.bf16.mxu0 0
    %231 = vmatpush2.bf16.msra.mxu0 %v183
    %232 = vmatprep.subr.bf16.mxu0 0
    %233 = vmatpush2.bf16.msra.mxu0 %v182
    %234 = vmatprep.subr.bf16.mxu0 0
    %235 = vmatpush2.bf16.msra.mxu0 %v181
    %236 = vmatprep.subr.bf16.mxu0 0
    %237 = vmatpush2.bf16.msra.mxu0 %v180
    %238 = vmatprep.subr.bf16.mxu0 0
    %239 = vmatpush2.bf16.msra.mxu0 %v179
    %240 = vmatprep.subr.bf16.mxu0 0
    %241 = vmatpush2.bf16.msra.mxu0 %v178
    %242 = vmatprep.subr.bf16.mxu0 0
    %243 = vmatpush2.bf16.msra.mxu0 %v177
    %244 = vmatprep.mubr.bf16.mxu0 %v88
    %245 = vmatmul.mubr.bf16.gmra.mxu0 %v87
    %v246 = vpop.f32.mrf.mxu0
    %v247 = vadd.f32 %v65, %v246
    %v248 = vpop.f32.mrf.mxu0
    %v249 = vpop.f32.mrf.mxu0
    %v250 = vadd.f32 %v65, %v249
    %v251 = vpop.f32.mrf.mxu0
    %252 = vmatprep.mubr.bf16.mxu0 %v91
    %253 = vmatmul.mubr.bf16.gmra.mxu0 %v90
    %v254 = vpop.f32.mrf.mxu0
    %v255 = vadd.f32 %v65, %v254
    %v256 = vpop.f32.mrf.mxu0
    %v257 = vpop.f32.mrf.mxu0
    %v258 = vadd.f32 %v65, %v257
    %v259 = vpop.f32.mrf.mxu0
    %260 = vdwg.mxu0
    %261 = vmatprep.subr.bf16.mxu0 0
    %262 = vmatpush1.bf16.msra.mxu0 0
    %263 = vmatprep.subr.bf16.mxu0 0
    %264 = vmatpush1.bf16.msra.mxu0 0
    %265 = vmatprep.subr.bf16.mxu0 0
    %266 = vmatpush1.bf16.msra.mxu0 0
    %267 = vmatprep.subr.bf16.mxu0 0
    %268 = vmatpush1.bf16.msra.mxu0 0
    %269 = vmatprep.subr.bf16.mxu0 0
    %270 = vmatpush1.bf16.msra.mxu0 0
    %271 = vmatprep.subr.bf16.mxu0 0
    %272 = vmatpush1.bf16.msra.mxu0 0
    %273 = vmatprep.subr.bf16.mxu0 0
    %274 = vmatpush1.bf16.msra.mxu0 %v186
    %275 = vmatprep.subr.bf16.mxu0 0
    %276 = vmatpush1.bf16.msra.mxu0 %v185
    %277 = vmatprep.subr.bf16.mxu0 0
    %278 = vmatpush2.bf16.msra.mxu0 0
    %279 = vmatprep.subr.bf16.mxu0 0
    %280 = vmatpush2.bf16.msra.mxu0 0
    %281 = vmatprep.subr.bf16.mxu0 0
    %282 = vmatpush2.bf16.msra.mxu0 0
    %283 = vmatprep.subr.bf16.mxu0 0
    %284 = vmatpush2.bf16.msra.mxu0 0
    %285 = vmatprep.subr.bf16.mxu0 0
    %286 = vmatpush2.bf16.msra.mxu0 0
    %287 = vmatprep.subr.bf16.mxu0 0
    %288 = vmatpush2.bf16.msra.mxu0 0
    %289 = vmatprep.subr.bf16.mxu0 0
    %290 = vmatpush2.bf16.msra.mxu0 0
    %291 = vmatprep.subr.bf16.mxu0 0
    %292 = vmatpush2.bf16.msra.mxu0 0
    %293 = vmatprep.mubr.bf16.mxu0 0
    %294 = vmatmul.mubr.bf16.gmra.mxu0 %v207
    %v295 = vpop.f32.mrf.mxu0
    %v296 = vadd.f32 %v247, %v295
    %v297 = vpop.f32.mrf.mxu0
    %v298 = vpop.f32.mrf.mxu0
    %v299 = vadd.f32 %v250, %v298
    %v300 = vpop.f32.mrf.mxu0
    %301 = vmatprep.mubr.bf16.mxu0 0
    %302 = vmatmul.mubr.bf16.gmra.mxu0 %v210
    %v303 = vpop.f32.mrf.mxu0
    %v304 = vadd.f32 %v255, %v303
    %v305 = vpop.f32.mrf.mxu0
    %v306 = vpop.f32.mrf.mxu0
    %v307 = vadd.f32 %v258, %v306
    %v308 = vpop.f32.mrf.mxu0
    %309 = vdwg.mxu0
    %310 = vst.msk [vmem:[#allocation2] sm:$0xff] %vm205, %v296
    %311 = vst.msk [vmem:[#allocation2 + $0x8] sm:$0xff] %vm205, %v299
    %312 = vst.msk [vmem:[#allocation2 + $0x10] sm:$0xff] %vm205, %v304
    %313 = vst.msk [vmem:[#allocation2 + $0x18] sm:$0xff] %vm205, %v307
    // Predicated region
    $region14: #{pyramid_features_forward.9} parent=1 // pred_check
      _
    $region15: #{pyramid_features_forward.9} parent=1 // pred_check_branch
      %315 = sbr.rel (0) target = $region17
    $region16: #{pyramid_features_forward.9} parent=1 // pred_region
      %s317 = ssub.s32 512, 512
      %318 = vsyncadd [#allocation3], %s317
      %s319 = sshll.u32 [#allocation2], 4
      %s320 = int_to_ptr.vmem [resolvable:$true] %s319
      %325 = dma.vmem_to_hbm [thread:$0]  %s320, 512, %s3, [#allocation3], 128, 128, 8
    $region17: #{pyramid_features_forward.9} parent=1 // pred_fallthru
      _
    // Predicated region
    $region18: #{pyramid_features_forward.9} parent=1 // pred_check
      _
    $region19: #{pyramid_features_forward.9} parent=1 // pred_check_branch
      %327 = sbr.rel (0) target = $region21
    $region20: #{pyramid_features_forward.9} parent=1 // pred_region
      %328 = dma.done [#allocation3], 512
    $region21: #{pyramid_features_forward.9} parent=1 // pred_fallthru
      _
    %329 = vsyncpa [#allocation3], 1

// kernel: pyramid_features_forward.14
$region0: #{pyramid_features_forward.14}
  #allocation0 [shape = 'u32[]', space=smem, size = 0x4, offset = 0x4, fixed_abs, tag = 'smem constant byte address 0x4 - core index']
  #allocation1 [shape = 'u32[144,128]{1,0:T(1,128)}', space=vmem, size = 0x12000, scoped, tag = 'internal scratch']
  %s0 = inlined_call_operand.vmem [shape: bf16[8,144], index: 0, kind: input, shape index: {}]
  %s1 = inlined_call_operand.vmem [shape: bf16[144,32], index: 1, kind: input, shape index: {}]
  %s2 = inlined_call_operand.vmem [shape: f32[1,32], index: 2, kind: input, shape index: {}]
  %s3 = inlined_call_operand.vmem [shape: f32[8,32], index: 3, kind: output, shape index: {}]
  %s4 = sld [smem:[#allocation0]]
  $region22: #{pyramid_features_forward.14} parent=0
    _
  %s6 = ssub.s32 1, %s4
  %s7 = scalar_select 0, %s6, %s4
  // Predicated region
  $region2: #{pyramid_features_forward.14} parent=0 // pred_check
    _
  $region3: #{pyramid_features_forward.14} parent=0 // pred_check_branch
    %9 = sbr.rel (0) target = $region5
  $region4: #{pyramid_features_forward.14} parent=0 // pred_region
    _
  $region5: #{pyramid_features_forward.14} parent=0 // pred_fallthru
    _
  // Predicated region
  $region6: #{pyramid_features_forward.14} parent=0 // pred_check
    _
  $region7: #{pyramid_features_forward.14} parent=0 // pred_check_branch
    %11 = sbr.rel (0) target = $region9
  $region8: #{pyramid_features_forward.14} parent=0 // pred_region
    _
  $region9: #{pyramid_features_forward.14} parent=0 // pred_fallthru
    _
  // Predicated region
  $region10: #{pyramid_features_forward.14} parent=0 // pred_check
    _
  $region11: #{pyramid_features_forward.14} parent=0 // pred_check_branch
    %13 = sbr.rel (0) target = $region13
  $region12: #{pyramid_features_forward.14} parent=0 // pred_region
    _
  $region13: #{pyramid_features_forward.14} parent=0 // pred_fallthru
    _
  %v15 = vld [vmem:[%s0] sm:$0xff]
  %v16 = vld [vmem:[%s1] sm:$0xf]
  %v17 = vld [vmem:[%s1 + $0x4] sm:$0xf]
  %v18 = vld [vmem:[%s1 + $0x8] sm:$0xf]
  %v19 = vld [vmem:[%s1 + $0xc] sm:$0xf]
  %v20 = vld [vmem:[%s1 + $0x10] sm:$0xf]
  %v21 = vld [vmem:[%s1 + $0x14] sm:$0xf]
  %v22 = vld [vmem:[%s1 + $0x18] sm:$0xf]
  %v23 = vld [vmem:[%s1 + $0x1c] sm:$0xf]
  %v24 = vld [vmem:[%s1 + $0x20] sm:$0xf]
  %v25 = vld [vmem:[%s1 + $0x24] sm:$0xf]
  %v26 = vld [vmem:[%s1 + $0x28] sm:$0xf]
  %v27 = vld [vmem:[%s1 + $0x2c] sm:$0xf]
  %v28 = vld [vmem:[%s1 + $0x30] sm:$0xf]
  %v29 = vld [vmem:[%s1 + $0x34] sm:$0xf]
  %v30 = vld [vmem:[%s1 + $0x38] sm:$0xf]
  %v31 = vld [vmem:[%s1 + $0x3c] sm:$0xf]
  %v32 = vld [vmem:[%s1 + $0x40] sm:$0xf]
  %v33 = vld [vmem:[%s1 + $0x44] sm:$0xf]
  %v34 = vld [vmem:[%s2] sm:$0x1]
  %v36 = vlaneseq
  %v37 = vshrl.u32 %v36, 7
  %v38 = vsub.s32 0, %v37
  %v39 = vrot.slane %v34, %v38
  %v42 = vunpack.c.l.b16 %v15
  %v43 = vunpack.c.h.b16 %v15
  %v44 = vpack.c.b16 %v42, %v42
  %v45 = vpack.c.b16 %v43, %v43
  %v65 = vunpack.c.l.b16 %v16
  %v66 = vunpack.c.l.b16 %v17
  %v67 = vunpack.c.l.b16 %v18
  %v68 = vunpack.c.l.b16 %v19
  %v69 = vunpack.c.l.b16 %v20
  %v70 = vunpack.c.l.b16 %v21
  %v71 = vunpack.c.l.b16 %v22
  %v72 = vunpack.c.l.b16 %v23
  %v73 = vunpack.c.l.b16 %v24
  %v74 = vunpack.c.l.b16 %v25
  %v75 = vunpack.c.l.b16 %v26
  %v76 = vunpack.c.l.b16 %v27
  %v77 = vunpack.c.l.b16 %v28
  %v78 = vunpack.c.l.b16 %v29
  %v79 = vunpack.c.l.b16 %v30
  %v80 = vunpack.c.l.b16 %v31
  %v81 = vunpack.c.l.b16 %v32
  %v82 = vunpack.c.l.b16 %v33
  %v83 = vpack.c.b16 %v66, %v65
  %v84 = vpack.c.b16 %v68, %v67
  %v85 = vpack.c.b16 %v70, %v69
  %v86 = vpack.c.b16 %v72, %v71
  %v87 = vpack.c.b16 %v74, %v73
  %v88 = vpack.c.b16 %v76, %v75
  %v89 = vpack.c.b16 %v78, %v77
  %v90 = vpack.c.b16 %v80, %v79
  %v91 = vpack.c.b16 %v82, %v81
  %vm101 = vcmask 130048
  %v103 = vsel %vm101, %v45, 0
  %105 = vmatprep.subr.bf16.mxu0 0
  %106 = vmatpush1.bf16.msra.mxu0 %v90
  %107 = vmatprep.subr.bf16.mxu0 0
  %108 = vmatpush1.bf16.msra.mxu0 %v89
  %109 = vmatprep.subr.bf16.mxu0 0
  %110 = vmatpush1.bf16.msra.mxu0 %v88
  %111 = vmatprep.subr.bf16.mxu0 0
  %112 = vmatpush1.bf16.msra.mxu0 %v87
  %113 = vmatprep.subr.bf16.mxu0 0
  %114 = vmatpush1.bf16.msra.mxu0 %v86
  %115 = vmatprep.subr.bf16.mxu0 0
  %116 = vmatpush1.bf16.msra.mxu0 %v85
  %117 = vmatprep.subr.bf16.mxu0 0
  %118 = vmatpush1.bf16.msra.mxu0 %v84
  %119 = vmatprep.subr.bf16.mxu0 0
  %120 = vmatpush1.bf16.msra.mxu0 %v83
  %121 = vmatprep.subr.bf16.mxu0 0
  %122 = vmatpush2.bf16.msra.mxu0 0
  %123 = vmatprep.subr.bf16.mxu0 0
  %124 = vmatpush2.bf16.msra.mxu0 0
  %125 = vmatprep.subr.bf16.mxu0 0
  %126 = vmatpush2.bf16.msra.mxu0 0
  %127 = vmatprep.subr.bf16.mxu0 0
  %128 = vmatpush2.bf16.msra.mxu0 0
  %129 = vmatprep.subr.bf16.mxu0 0
  %130 = vmatpush2.bf16.msra.mxu0 0
  %131 = vmatprep.subr.bf16.mxu0 0
  %132 = vmatpush2.bf16.msra.mxu0 0
  %133 = vmatprep.subr.bf16.mxu0 0
  %134 = vmatpush2.bf16.msra.mxu0 0
  %135 = vmatprep.subr.bf16.mxu0 0
  %136 = vmatpush2.bf16.msra.mxu0 %v91
  %137 = vmatprep.mubr.bf16.mxu0 %v103
  %138 = vmatmul.mubr.bf16.gmra.mxu0 %v44
  %v139 = vpop.f32.mrf.mxu0
  %v140 = vadd.f32 %v39, %v139
  %v141 = vpop.f32.mrf.mxu0
  %v142 = vpop.f32.mrf.mxu0
  %v143 = vpop.f32.mrf.mxu0
  %144 = vdwg.mxu0
  %vm145 = vcmask 261120
  %146 = vst.msk [vmem:[%s3] sm:$0xff] %vm145, %v140
  // Predicated region
  $region14: #{pyramid_features_forward.14} parent=0 // pred_check
    _
  $region15: #{pyramid_features_forward.14} parent=0 // pred_check_branch
    %148 = sbr.rel (0) target = $region17
  $region16: #{pyramid_features_forward.14} parent=0 // pred_region
    _
  $region17: #{pyramid_features_forward.14} parent=0 // pred_fallthru
    _
  // Predicated region
  $region18: #{pyramid_features_forward.14} parent=0 // pred_check
    _
  $region19: #{pyramid_features_forward.14} parent=0 // pred_check_branch
    %150 = sbr.rel (0) target = $region21
  $region20: #{pyramid_features_forward.14} parent=0 // pred_region
    _
  $region21: #{pyramid_features_forward.14} parent=0 // pred_fallthru
    _

// kernel: pyramid_features_forward.15
$region0: #{pyramid_features_forward.15}
  #allocation0 [shape = 'u32[]', space=smem, size = 0x4, offset = 0x4, fixed_abs, tag = 'smem constant byte address 0x4 - core index']
  #allocation1 [shape = 'u32[144,128]{1,0:T(1,128)}', space=vmem, size = 0x12000, scoped, tag = 'internal scratch']
  %s0 = inlined_call_operand.vmem [shape: bf16[8,288], index: 0, kind: input, shape index: {}]
  %s1 = inlined_call_operand.vmem [shape: bf16[288,32], index: 1, kind: input, shape index: {}]
  %s2 = inlined_call_operand.vmem [shape: f32[1,32], index: 2, kind: input, shape index: {}]
  %s3 = inlined_call_operand.vmem [shape: f32[8,32], index: 3, kind: output, shape index: {}]
  %s4 = sld [smem:[#allocation0]]
  $region22: #{pyramid_features_forward.15} parent=0
    _
  %s6 = ssub.s32 1, %s4
  %s7 = scalar_select 0, %s6, %s4
  // Predicated region
  $region2: #{pyramid_features_forward.15} parent=0 // pred_check
    _
  $region3: #{pyramid_features_forward.15} parent=0 // pred_check_branch
    %9 = sbr.rel (0) target = $region5
  $region4: #{pyramid_features_forward.15} parent=0 // pred_region
    _
  $region5: #{pyramid_features_forward.15} parent=0 // pred_fallthru
    _
  // Predicated region
  $region6: #{pyramid_features_forward.15} parent=0 // pred_check
    _
  $region7: #{pyramid_features_forward.15} parent=0 // pred_check_branch
    %11 = sbr.rel (0) target = $region9
  $region8: #{pyramid_features_forward.15} parent=0 // pred_region
    _
  $region9: #{pyramid_features_forward.15} parent=0 // pred_fallthru
    _
  // Predicated region
  $region10: #{pyramid_features_forward.15} parent=0 // pred_check
    _
  $region11: #{pyramid_features_forward.15} parent=0 // pred_check_branch
    %13 = sbr.rel (0) target = $region13
  $region12: #{pyramid_features_forward.15} parent=0 // pred_region
    _
  $region13: #{pyramid_features_forward.15} parent=0 // pred_fallthru
    _
  %v15 = vld [vmem:[%s0] sm:$0xff]
  %v16 = vld [vmem:[%s0 + $0x8] sm:$0xf]
  %v17 = vmax.bf16 %v15, 0
  %v18 = vmax.bf16 %v16, 0
  %v19 = vld [vmem:[%s1] sm:$0xf]
  %v20 = vld [vmem:[%s1 + $0x4] sm:$0xf]
  %v21 = vld [vmem:[%s1 + $0x8] sm:$0xf]
  %v22 = vld [vmem:[%s1 + $0xc] sm:$0xf]
  %v23 = vld [vmem:[%s1 + $0x10] sm:$0xf]
  %v24 = vld [vmem:[%s1 + $0x14] sm:$0xf]
  %v25 = vld [vmem:[%s1 + $0x18] sm:$0xf]
  %v26 = vld [vmem:[%s1 + $0x1c] sm:$0xf]
  %v27 = vld [vmem:[%s1 + $0x20] sm:$0xf]
  %v28 = vld [vmem:[%s1 + $0x24] sm:$0xf]
  %v29 = vld [vmem:[%s1 + $0x28] sm:$0xf]
  %v30 = vld [vmem:[%s1 + $0x2c] sm:$0xf]
  %v31 = vld [vmem:[%s1 + $0x30] sm:$0xf]
  %v32 = vld [vmem:[%s1 + $0x34] sm:$0xf]
  %v33 = vld [vmem:[%s1 + $0x38] sm:$0xf]
  %v34 = vld [vmem:[%s1 + $0x3c] sm:$0xf]
  %v35 = vld [vmem:[%s1 + $0x40] sm:$0xf]
  %v36 = vld [vmem:[%s1 + $0x44] sm:$0xf]
  %v37 = vld [vmem:[%s1 + $0x48] sm:$0xf]
  %v38 = vld [vmem:[%s1 + $0x4c] sm:$0xf]
  %v39 = vld [vmem:[%s1 + $0x50] sm:$0xf]
  %v40 = vld [vmem:[%s1 + $0x54] sm:$0xf]
  %v41 = vld [vmem:[%s1 + $0x58] sm:$0xf]
  %v42 = vld [vmem:[%s1 + $0x5c] sm:$0xf]
  %v43 = vld [vmem:[%s1 + $0x60] sm:$0xf]
  %v44 = vld [vmem:[%s1 + $0x64] sm:$0xf]
  %v45 = vld [vmem:[%s1 + $0x68] sm:$0xf]
  %v46 = vld [vmem:[%s1 + $0x6c] sm:$0xf]
  %v47 = vld [vmem:[%s1 + $0x70] sm:$0xf]
  %v48 = vld [vmem:[%s1 + $0x74] sm:$0xf]
  %v49 = vld [vmem:[%s1 + $0x78] sm:$0xf]
  %v50 = vld [vmem:[%s1 + $0x7c] sm:$0xf]
  %v51 = vld [vmem:[%s1 + $0x80] sm:$0xf]
  %v52 = vld [vmem:[%s1 + $0x84] sm:$0xf]
  %v53 = vld [vmem:[%s1 + $0x88] sm:$0xf]
  %v54 = vld [vmem:[%s1 + $0x8c] sm:$0xf]
  %v55 = vld [vmem:[%s2] sm:$0x1]
  %v57 = vlaneseq
  %v58 = vshrl.u32 %v57, 7
  %v59 = vsub.s32 0, %v58
  %v60 = vrot.slane %v55, %v59
  %v64 = vunpack.c.l.b16 %v17
  %v65 = vunpack.c.h.b16 %v17
  %v66 = vunpack.c.l.b16 %v18
  %v67 = vpack.c.b16 %v64, %v64
  %v68 = vpack.c.b16 %v65, %v65
  %v69 = vpack.c.b16 %v66, %v66
  %v108 = vunpack.c.l.b16 %v19
  %v109 = vunpack.c.l.b16 %v20
  %v110 = vunpack.c.l.b16 %v21
  %v111 = vunpack.c.l.b16 %v22
  %v112 = vunpack.c.l.b16 %v23
  %v113 = vunpack.c.l.b16 %v24
  %v114 = vunpack.c.l.b16 %v25
  %v115 = vunpack.c.l.b16 %v26
  %v116 = vunpack.c.l.b16 %v27
  %v117 = vunpack.c.l.b16 %v28
  %v118 = vunpack.c.l.b16 %v29
  %v119 = vunpack.c.l.b16 %v30
  %v120 = vunpack.c.l.b16 %v31
  %v121 = vunpack.c.l.b16 %v32
  %v122 = vunpack.c.l.b16 %v33
  %v123 = vunpack.c.l.b16 %v34
  %v124 = vunpack.c.l.b16 %v35
  %v125 = vunpack.c.l.b16 %v36
  %v126 = vunpack.c.l.b16 %v37
  %v127 = vunpack.c.l.b16 %v38
  %v128 = vunpack.c.l.b16 %v39
  %v129 = vunpack.c.l.b16 %v40
  %v130 = vunpack.c.l.b16 %v41
  %v131 = vunpack.c.l.b16 %v42
  %v132 = vunpack.c.l.b16 %v43
  %v133 = vunpack.c.l.b16 %v44
  %v134 = vunpack.c.l.b16 %v45
  %v135 = vunpack.c.l.b16 %v46
  %v136 = vunpack.c.l.b16 %v47
  %v137 = vunpack.c.l.b16 %v48
  %v138 = vunpack.c.l.b16 %v49
  %v139 = vunpack.c.l.b16 %v50
  %v140 = vunpack.c.l.b16 %v51
  %v141 = vunpack.c.l.b16 %v52
  %v142 = vunpack.c.l.b16 %v53
  %v143 = vunpack.c.l.b16 %v54
  %v144 = vpack.c.b16 %v109, %v108
  %v145 = vpack.c.b16 %v111, %v110
  %v146 = vpack.c.b16 %v113, %v112
  %v147 = vpack.c.b16 %v115, %v114
  %v148 = vpack.c.b16 %v117, %v116
  %v149 = vpack.c.b16 %v119, %v118
  %v150 = vpack.c.b16 %v121, %v120
  %v151 = vpack.c.b16 %v123, %v122
  %v152 = vpack.c.b16 %v125, %v124
  %v153 = vpack.c.b16 %v127, %v126
  %v154 = vpack.c.b16 %v129, %v128
  %v155 = vpack.c.b16 %v131, %v130
  %v156 = vpack.c.b16 %v133, %v132
  %v157 = vpack.c.b16 %v135, %v134
  %v158 = vpack.c.b16 %v137, %v136
  %v159 = vpack.c.b16 %v139, %v138
  %v160 = vpack.c.b16 %v141, %v140
  %v161 = vpack.c.b16 %v143, %v142
  %vm180 = vcmask 261120
  %v182 = vsel %vm180, %v69, 0
  %184 = vmatprep.subr.bf16.mxu0 0
  %185 = vmatpush1.bf16.msra.mxu0 %v151
  %186 = vmatprep.subr.bf16.mxu0 0
  %187 = vmatpush1.bf16.msra.mxu0 %v150
  %188 = vmatprep.subr.bf16.mxu0 0
  %189 = vmatpush1.bf16.msra.mxu0 %v149
  %190 = vmatprep.subr.bf16.mxu0 0
  %191 = vmatpush1.bf16.msra.mxu0 %v148
  %192 = vmatprep.subr.bf16.mxu0 0
  %193 = vmatpush1.bf16.msra.mxu0 %v147
  %194 = vmatprep.subr.bf16.mxu0 0
  %195 = vmatpush1.bf16.msra.mxu0 %v146
  %196 = vmatprep.subr.bf16.mxu0 0
  %197 = vmatpush1.bf16.msra.mxu0 %v145
  %198 = vmatprep.subr.bf16.mxu0 0
  %199 = vmatpush1.bf16.msra.mxu0 %v144
  %200 = vmatprep.subr.bf16.mxu0 0
  %201 = vmatpush2.bf16.msra.mxu0 %v159
  %202 = vmatprep.subr.bf16.mxu0 0
  %203 = vmatpush2.bf16.msra.mxu0 %v158
  %204 = vmatprep.subr.bf16.mxu0 0
  %205 = vmatpush2.bf16.msra.mxu0 %v157
  %206 = vmatprep.subr.bf16.mxu0 0
  %207 = vmatpush2.bf16.msra.mxu0 %v156
  %208 = vmatprep.subr.bf16.mxu0 0
  %209 = vmatpush2.bf16.msra.mxu0 %v155
  %210 = vmatprep.subr.bf16.mxu0 0
  %211 = vmatpush2.bf16.msra.mxu0 %v154
  %212 = vmatprep.subr.bf16.mxu0 0
  %213 = vmatpush2.bf16.msra.mxu0 %v153
  %214 = vmatprep.subr.bf16.mxu0 0
  %215 = vmatpush2.bf16.msra.mxu0 %v152
  %216 = vmatprep.mubr.bf16.mxu0 %v68
  %217 = vmatmul.mubr.bf16.gmra.mxu0 %v67
  %v218 = vpop.f32.mrf.mxu0
  %v219 = vadd.f32 %v60, %v218
  %v220 = vpop.f32.mrf.mxu0
  %v221 = vpop.f32.mrf.mxu0
  %v222 = vpop.f32.mrf.mxu0
  %223 = vdwg.mxu0
  %224 = vmatprep.subr.bf16.mxu0 0
  %225 = vmatpush1.bf16.msra.mxu0 0
  %226 = vmatprep.subr.bf16.mxu0 0
  %227 = vmatpush1.bf16.msra.mxu0 0
  %228 = vmatprep.subr.bf16.mxu0 0
  %229 = vmatpush1.bf16.msra.mxu0 0
  %230 = vmatprep.subr.bf16.mxu0 0
  %231 = vmatpush1.bf16.msra.mxu0 0
  %232 = vmatprep.subr.bf16.mxu0 0
  %233 = vmatpush1.bf16.msra.mxu0 0
  %234 = vmatprep.subr.bf16.mxu0 0
  %235 = vmatpush1.bf16.msra.mxu0 0
  %236 = vmatprep.subr.bf16.mxu0 0
  %237 = vmatpush1.bf16.msra.mxu0 %v161
  %238 = vmatprep.subr.bf16.mxu0 0
  %239 = vmatpush1.bf16.msra.mxu0 %v160
  %240 = vmatprep.subr.bf16.mxu0 0
  %241 = vmatpush2.bf16.msra.mxu0 0
  %242 = vmatprep.subr.bf16.mxu0 0
  %243 = vmatpush2.bf16.msra.mxu0 0
  %244 = vmatprep.subr.bf16.mxu0 0
  %245 = vmatpush2.bf16.msra.mxu0 0
  %246 = vmatprep.subr.bf16.mxu0 0
  %247 = vmatpush2.bf16.msra.mxu0 0
  %248 = vmatprep.subr.bf16.mxu0 0
  %249 = vmatpush2.bf16.msra.mxu0 0
  %250 = vmatprep.subr.bf16.mxu0 0
  %251 = vmatpush2.bf16.msra.mxu0 0
  %252 = vmatprep.subr.bf16.mxu0 0
  %253 = vmatpush2.bf16.msra.mxu0 0
  %254 = vmatprep.subr.bf16.mxu0 0
  %255 = vmatpush2.bf16.msra.mxu0 0
  %256 = vmatprep.mubr.bf16.mxu0 0
  %257 = vmatmul.mubr.bf16.gmra.mxu0 %v182
  %v258 = vpop.f32.mrf.mxu0
  %v259 = vadd.f32 %v219, %v258
  %v260 = vpop.f32.mrf.mxu0
  %v261 = vpop.f32.mrf.mxu0
  %v262 = vpop.f32.mrf.mxu0
  %263 = vdwg.mxu0
  %264 = vst.msk [vmem:[%s3] sm:$0xff] %vm180, %v259
  // Predicated region
  $region14: #{pyramid_features_forward.15} parent=0 // pred_check
    _
  $region15: #{pyramid_features_forward.15} parent=0 // pred_check_branch
    %266 = sbr.rel (0) target = $region17
  $region16: #{pyramid_features_forward.15} parent=0 // pred_region
    _
  $region17: #{pyramid_features_forward.15} parent=0 // pred_fallthru
    _
  // Predicated region
  $region18: #{pyramid_features_forward.15} parent=0 // pred_check
    _
  $region19: #{pyramid_features_forward.15} parent=0 // pred_check_branch
    %268 = sbr.rel (0) target = $region21
  $region20: #{pyramid_features_forward.15} parent=0 // pred_region
    _
  $region21: #{pyramid_features_forward.15} parent=0 // pred_fallthru
    _

</llo_original>
